<compile_context>
chip_gen: v7x
topology: tpu7x:2x2x1
jax: 0.10.0
libtpu: 0.0.40
codegen_flags: <defaults>
</compile_context>

<pallas_src>
import functools

import jax
import jax.numpy as jnp
from jax import lax
from jax.experimental import pallas as pl
from jax.experimental.pallas import tpu as pltpu


def _splitprior_nn_kernel(z_ref, w1_ref, b1_ref, w2_ref, b2_ref, o_ref,
                          xpad_ref, hpad_ref, *, H, W, S, K, HID, COUT_PAD):
    """Fused one-hot -> conv3x3+ReLU -> conv3x3 for one batch element.

    z_ref  : (1, H, W, S)        int32 categorical input (NHWC)
    w1_ref : (9*S*K, HID)        bf16, row index = (dh*3+dw)*Cin + cin
    b1_ref : (1, HID)            f32
    w2_ref : (9*HID, COUT_PAD)   bf16 (Cout zero-padded to a 128 multiple)
    b2_ref : (1, COUT_PAD)       f32
    o_ref  : (1, H, W, COUT_PAD) f32
    xpad   : (H+2, W+2, S*K)     f32 VMEM scratch (zero halo = 'same' padding)
    hpad   : (H+2, W+2, HID)     f32 VMEM scratch (zero halo = 'same' padding)
    """
    # Zero the padded scratches every step (tiny, and safe even when the batch
    # grid axis is sharded across TensorCores — no program_id==0 dependence).
    xpad_ref[...] = jnp.zeros(xpad_ref.shape, xpad_ref.dtype)
    hpad_ref[...] = jnp.zeros(hpad_ref.shape, hpad_ref.dtype)

    # ---- one-hot built in-kernel (VPU compares; free under idle MXU) ----
    z = z_ref[0]                                              # (H, W, S) int32
    k_iota = lax.broadcasted_iota(jnp.int32, (H, W, K), 2)
    oh = jnp.concatenate(
        [(z[:, :, s:s + 1] == k_iota).astype(jnp.float32) for s in range(S)],
        axis=-1)                                              # (H, W, S*K)
    xpad_ref[1:H + 1, 1:W + 1, :] = oh

    def im2col(src_ref):
        c = src_ref.shape[-1]
        taps = []
        for dh in range(3):
            for dw in range(3):
                taps.append(src_ref[dh:dh + H, dw:dw + W, :].reshape(H * W, c))
        return jnp.concatenate(taps, axis=-1)                 # (H*W, 9*c)

    # ---- conv1: single im2col matmul + bias + ReLU (f32 epilogue) ----
    p1 = im2col(xpad_ref).astype(jnp.bfloat16)                # (H*W, 9*S*K)
    h = jnp.dot(p1, w1_ref[...], preferred_element_type=jnp.float32)
    h = jnp.maximum(h + b1_ref[...], 0.0)                     # (H*W, HID) f32
    hpad_ref[1:H + 1, 1:W + 1, :] = h.reshape(H, W, HID)

    # ---- conv2: single im2col matmul + bias, lane-dense 128-wide store ----
    p2 = im2col(hpad_ref).astype(jnp.bfloat16)                # (H*W, 9*HID)
    o = jnp.dot(p2, w2_ref[...], preferred_element_type=jnp.float32)
    o = o + b2_ref[...]                                       # (H*W, COUT_PAD)
    o_ref[...] = o.reshape(1, H, W, COUT_PAD)


class CategoricalSplitPriorPallas:
    """Factorized categorical splitprior (forward pass, reverse=False)."""

    def __init__(self, n_channels, num_classes, hidden=32,
                 key=jax.random.PRNGKey(42)):
        self.num_classes = num_classes
        self.split_idx = n_channels - n_channels // 2
        self.c_y = n_channels - self.split_idx
        self.hidden = hidden
        c_in = self.split_idx * num_classes
        c_out = self.c_y * num_classes
        self.c_out = c_out
        self.cout_pad = ((c_out + 127) // 128) * 128          # lane-dense N

        k1, k2, k3, k4 = jax.random.split(key, 4)
        s1 = 1.0 / jnp.sqrt(9.0 * c_in)
        s2 = 1.0 / jnp.sqrt(9.0 * hidden)
        # Deterministic synthetic parameters (no checkpoint load).
        w1 = (jax.random.normal(k1, (3, 3, c_in, hidden)) * s1).astype(jnp.float32)
        b1 = (jax.random.normal(k2, (hidden,)) * 0.01).astype(jnp.float32)
        w2 = (jax.random.normal(k3, (3, 3, hidden, c_out)) * s2).astype(jnp.float32)
        b2 = (jax.random.normal(k4, (c_out,)) * 0.01).astype(jnp.float32)

        # Kernel-side layouts: im2col weight matrices, bf16 MXU operands,
        # conv2 output channels zero-padded to a lane-dense multiple of 128.
        # Output channel packing is (c * K + k); synthetic weights, so this is
        # the canonical choice. TODO(synk): if real PyTorch NN weights are ever
        # loaded, permute them to match this packing.
        self.w1r = w1.reshape(9 * c_in, hidden).astype(jnp.bfloat16)
        self.b1r = b1.reshape(1, hidden)
        w2p = jnp.zeros((3, 3, hidden, self.cout_pad), jnp.float32)
        w2p = w2p.at[..., :c_out].set(w2)
        self.w2r = w2p.reshape(9 * hidden, self.cout_pad).astype(jnp.bfloat16)
        self.b2r = jnp.zeros((1, self.cout_pad), jnp.float32).at[0, :c_out].set(b2)

    # ------------------------------------------------------------------ fused NN
    def _nn(self, z1):
        """z1: (B, S, H, W) int -> py: (B, C_y, H, W, K) f32, via one pallas_call."""
        B, S, H, W = z1.shape
        K = self.num_classes
        HID = self.hidden
        CP = self.cout_pad
        z1_nhwc = jnp.transpose(z1, (0, 2, 3, 1)).astype(jnp.int32)  # (B,H,W,S)

        flops = 2 * B * H * W * (9 * S * K * HID + 9 * HID * CP)
        bytes_accessed = (z1_nhwc.size * 4
                          + self.w1r.size * 2 + self.b1r.size * 4
                          + self.w2r.size * 2 + self.b2r.size * 4
                          + B * H * W * CP * 4)

        kern = functools.partial(_splitprior_nn_kernel, H=H, W=W, S=S, K=K,
                                 HID=HID, COUT_PAD=CP)
        out = pl.pallas_call(
            kern,
            out_shape=jax.ShapeDtypeStruct((B, H, W, CP), jnp.float32),
            grid=(B,),
            in_specs=[
                pl.BlockSpec((1, H, W, S), lambda b: (b, 0, 0, 0)),
                pl.BlockSpec((9 * S * K, HID), lambda b: (0, 0)),
                pl.BlockSpec((1, HID), lambda b: (0, 0)),
                pl.BlockSpec((9 * HID, CP), lambda b: (0, 0)),
                pl.BlockSpec((1, CP), lambda b: (0, 0)),
            ],
            out_specs=pl.BlockSpec((1, H, W, CP), lambda b: (b, 0, 0, 0)),
            scratch_shapes=[
                pltpu.VMEM((H + 2, W + 2, S * K), jnp.float32),
                pltpu.VMEM((H + 2, W + 2, HID), jnp.float32),
            ],
            compiler_params=pltpu.CompilerParams(
                dimension_semantics=("parallel",)),
            cost_estimate=pl.CostEstimate(flops=flops, transcendentals=0,
                                          bytes_accessed=bytes_accessed),
        )(z1_nhwc, self.w1r, self.b1r, self.w2r, self.b2r)

        # Kernel emits channels in (c*K + k) order -> one wrapper transpose only.
        py = out[..., :self.c_y * K].reshape(B, H, W, self.c_y, K)
        return jnp.transpose(py, (0, 3, 1, 2, 4))             # (B, C_y, H, W, K)

    # ------------------------------------------------------------- pure-JAX ref
    def _nn_ref(self, z1):
        """Pure-JAX reference of the same synthetic NN (for correctness check)."""
        B, S, H, W = z1.shape
        K = self.num_classes
        oh = jax.nn.one_hot(jnp.transpose(z1, (0, 2, 3, 1)), K,
                            dtype=jnp.float32).reshape(B, H, W, S * K)
        w1 = self.w1r.astype(jnp.float32).reshape(3, 3, S * K, self.hidden)
        h = lax.conv_general_dilated(
            oh, w1, (1, 1), "SAME",
            dimension_numbers=("NHWC", "HWIO", "NHWC"),
            precision=lax.Precision.HIGHEST) + self.b1r[0]
        h = jnp.maximum(h, 0.0)
        # match the kernel's bf16 rounding of the conv2 activation operand
        h = h.astype(jnp.bfloat16).astype(jnp.float32)
        w2 = self.w2r.astype(jnp.float32).reshape(
            3, 3, self.hidden, self.cout_pad)[..., :self.c_out]
        o = lax.conv_general_dilated(
            h, w2, (1, 1), "SAME",
            dimension_numbers=("NHWC", "HWIO", "NHWC"),
            precision=lax.Precision.HIGHEST) + self.b2r[0, :self.c_out]
        py = o.reshape(B, H, W, self.c_y, K)
        return jnp.transpose(py, (0, 3, 1, 2, 4))

    # ------------------------------------------------------------------ forward
    def forward(self, z, reverse=False):
        if not reverse:
            z1 = z[:, :self.split_idx]
            y = z[:, self.split_idx:]
            py = self._nn(z1)                                 # (B, C_y, H, W, K)
            return py, y, z1
        # TODO(synk): reverse path (Categorical sampling over py + concat) not
        # exercised by this benchmark; would be jax.random.categorical in glue.
        raise NotImplementedError("reverse=True path not implemented")


if __name__ == "__main__":
    B, n_channels, H, W = 2, 4, 16, 16
    num_classes = 8

    key = jax.random.PRNGKey(0)
    z = jax.random.randint(key, (B, n_channels, H, W), 0, num_classes,
                           dtype=jnp.int32)

    prior = CategoricalSplitPriorPallas(n_channels, num_classes, hidden=32)
    py, y, z1 = prior.forward(z, reverse=False)
    py = jax.block_until_ready(py)

    split_idx = n_channels - n_channels // 2
    c_y = n_channels - split_idx
    assert py.shape == (B, c_y, H, W, num_classes), py.shape
    assert y.shape == (B, c_y, H, W), y.shape
    assert z1.shape == (B, split_idx, H, W), z1.shape
    assert py.dtype == jnp.float32

    py_ref = prior._nn_ref(z1)
    max_err = float(jnp.max(jnp.abs(py - py_ref)))
    assert jnp.allclose(py, py_ref, atol=1e-2, rtol=1e-2), max_err

    print("KERNEL_OK")
</pallas_src>

<mosaic_0001>
module attributes {stable_mosaic.version = 11 : i64} {
  func.func @_splitprior_nn_kernel(%arg0: i32, %arg1: memref<1x16x16x2xi32, #tpu.memory_space<vmem>>, %arg2: memref<144x32xbf16, #tpu.memory_space<vmem>>, %arg3: memref<1x32xf32, #tpu.memory_space<vmem>>, %arg4: memref<288x128xbf16, #tpu.memory_space<vmem>>, %arg5: memref<1x128xf32, #tpu.memory_space<vmem>>, %arg6: memref<1x16x16x128xf32, #tpu.memory_space<vmem>>, %arg7: memref<18x18x16xf32, #tpu.memory_space<vmem>>, %arg8: memref<18x18x32xf32, #tpu.memory_space<vmem>>) attributes {dimension_semantics = [#tpu.dimension_semantics<parallel>], iteration_bounds = array<i64: 2>, scalar_prefetch = 0 : i64, scratch_operands = 2 : i64, tpu.core_type = #tpu.core_type<tc>, window_params = [{transform_indices = @transform_0, window_bounds = array<i64: 1, 16, 16, 2>}, {pipeline_mode = #tpu.pipeline_mode<synchronous>, transform_indices = @transform_1, window_bounds = array<i64: 144, 32>}, {pipeline_mode = #tpu.pipeline_mode<synchronous>, transform_indices = @transform_2, window_bounds = array<i64: 1, 32>}, {pipeline_mode = #tpu.pipeline_mode<synchronous>, transform_indices = @transform_3, window_bounds = array<i64: 288, 128>}, {pipeline_mode = #tpu.pipeline_mode<synchronous>, transform_indices = @transform_4, window_bounds = array<i64: 1, 128>}, {transform_indices = @transform_5, window_bounds = array<i64: 1, 16, 16, 128>}]} {
    %cst = arith.constant 0.000000e+00 : f32
    %0 = vector.broadcast %cst : f32 to vector<18x18x16xf32>
    %c0 = arith.constant 0 : index
    %c0_0 = arith.constant 0 : index
    %c0_1 = arith.constant 0 : index
    %1 = vector.load %arg7[%c0, %c0_0, %c0_1] : memref<18x18x16xf32, #tpu.memory_space<vmem>>, vector<18x18x16xf32>
    tpu.vector_store %arg7[%c0, %c0_0, %c0_1], %0 {strides = array<i32>} : memref<18x18x16xf32, #tpu.memory_space<vmem>>, vector<18x18x16xf32>,
    %cst_2 = arith.constant 0.000000e+00 : f32
    %2 = vector.broadcast %cst_2 : f32 to vector<18x18x32xf32>
    %c0_3 = arith.constant 0 : index
    %c0_4 = arith.constant 0 : index
    %c0_5 = arith.constant 0 : index
    %3 = vector.load %arg8[%c0_3, %c0_4, %c0_5] : memref<18x18x32xf32, #tpu.memory_space<vmem>>, vector<18x18x32xf32>
    tpu.vector_store %arg8[%c0_3, %c0_4, %c0_5], %2 {strides = array<i32>} : memref<18x18x32xf32, #tpu.memory_space<vmem>>, vector<18x18x32xf32>,
    %c0_6 = arith.constant 0 : index
    %c0_7 = arith.constant 0 : index
    %c0_8 = arith.constant 0 : index
    %c0_9 = arith.constant 0 : index
    %4 = vector.load %arg1[%c0_6, %c0_7, %c0_8, %c0_9] : memref<1x16x16x2xi32, #tpu.memory_space<vmem>>, vector<1x16x16x2xi32>
    %5 = vector.shape_cast %4 : vector<1x16x16x2xi32> to vector<16x16x2xi32>
    %6 = tpu.iota {dimensions = array<i32: 2>} : vector<16x16x8xi32>
    %7 = vector.extract_strided_slice %5 {offsets = [0, 0, 0], sizes = [16, 16, 1], strides = [1, 1, 1]} : vector<16x16x2xi32> to vector<16x16x1xi32>
    %8 = vector.broadcast %7 : vector<16x16x1xi32> to vector<16x16x8xi32>
    %9 = arith.cmpi eq, %8, %6 : vector<16x16x8xi32>
    %10 = arith.extui %9 : vector<16x16x8xi1> to vector<16x16x8xi32>
    %11 = arith.sitofp %10 : vector<16x16x8xi32> to vector<16x16x8xf32>
    %12 = vector.extract_strided_slice %5 {offsets = [0, 0, 1], sizes = [16, 16, 1], strides = [1, 1, 1]} : vector<16x16x2xi32> to vector<16x16x1xi32>
    %13 = vector.broadcast %12 : vector<16x16x1xi32> to vector<16x16x8xi32>
    %14 = arith.cmpi eq, %13, %6 : vector<16x16x8xi32>
    %15 = arith.extui %14 : vector<16x16x8xi1> to vector<16x16x8xi32>
    %16 = arith.sitofp %15 : vector<16x16x8xi32> to vector<16x16x8xf32>
    %17 = tpu.concatenate %11, %16 in 2 : vector<16x16x8xf32>, vector<16x16x8xf32> -> vector<16x16x16xf32>
    %c1 = arith.constant 1 : index
    %c1_10 = arith.constant 1 : index
    %c0_11 = arith.constant 0 : index
    %18 = vector.load %arg7[%c1, %c1_10, %c0_11] : memref<18x18x16xf32, #tpu.memory_space<vmem>>, vector<16x16x16xf32>
    tpu.vector_store %arg7[%c1, %c1_10, %c0_11], %17 {strides = array<i32>} : memref<18x18x16xf32, #tpu.memory_space<vmem>>, vector<16x16x16xf32>,
    %c0_12 = arith.constant 0 : index
    %c0_13 = arith.constant 0 : index
    %c0_14 = arith.constant 0 : index
    %19 = vector.load %arg7[%c0_12, %c0_13, %c0_14] : memref<18x18x16xf32, #tpu.memory_space<vmem>>, vector<16x16x16xf32>
    %20 = vector.shape_cast %19 : vector<16x16x16xf32> to vector<256x16xf32>
    %c0_15 = arith.constant 0 : index
    %c1_16 = arith.constant 1 : index
    %c0_17 = arith.constant 0 : index
    %21 = vector.load %arg7[%c0_15, %c1_16, %c0_17] : memref<18x18x16xf32, #tpu.memory_space<vmem>>, vector<16x16x16xf32>
    %22 = vector.shape_cast %21 : vector<16x16x16xf32> to vector<256x16xf32>
    %c0_18 = arith.constant 0 : index
    %c2 = arith.constant 2 : index
    %c0_19 = arith.constant 0 : index
    %23 = vector.load %arg7[%c0_18, %c2, %c0_19] : memref<18x18x16xf32, #tpu.memory_space<vmem>>, vector<16x16x16xf32>
    %24 = vector.shape_cast %23 : vector<16x16x16xf32> to vector<256x16xf32>
    %c1_20 = arith.constant 1 : index
    %c0_21 = arith.constant 0 : index
    %c0_22 = arith.constant 0 : index
    %25 = vector.load %arg7[%c1_20, %c0_21, %c0_22] : memref<18x18x16xf32, #tpu.memory_space<vmem>>, vector<16x16x16xf32>
    %26 = vector.shape_cast %25 : vector<16x16x16xf32> to vector<256x16xf32>
    %c1_23 = arith.constant 1 : index
    %c1_24 = arith.constant 1 : index
    %c0_25 = arith.constant 0 : index
    %27 = vector.load %arg7[%c1_23, %c1_24, %c0_25] : memref<18x18x16xf32, #tpu.memory_space<vmem>>, vector<16x16x16xf32>
    %28 = vector.shape_cast %27 : vector<16x16x16xf32> to vector<256x16xf32>
    %c1_26 = arith.constant 1 : index
    %c2_27 = arith.constant 2 : index
    %c0_28 = arith.constant 0 : index
    %29 = vector.load %arg7[%c1_26, %c2_27, %c0_28] : memref<18x18x16xf32, #tpu.memory_space<vmem>>, vector<16x16x16xf32>
    %30 = vector.shape_cast %29 : vector<16x16x16xf32> to vector<256x16xf32>
    %c2_29 = arith.constant 2 : index
    %c0_30 = arith.constant 0 : index
    %c0_31 = arith.constant 0 : index
    %31 = vector.load %arg7[%c2_29, %c0_30, %c0_31] : memref<18x18x16xf32, #tpu.memory_space<vmem>>, vector<16x16x16xf32>
    %32 = vector.shape_cast %31 : vector<16x16x16xf32> to vector<256x16xf32>
    %c2_32 = arith.constant 2 : index
    %c1_33 = arith.constant 1 : index
    %c0_34 = arith.constant 0 : index
    %33 = vector.load %arg7[%c2_32, %c1_33, %c0_34] : memref<18x18x16xf32, #tpu.memory_space<vmem>>, vector<16x16x16xf32>
    %34 = vector.shape_cast %33 : vector<16x16x16xf32> to vector<256x16xf32>
    %c2_35 = arith.constant 2 : index
    %c2_36 = arith.constant 2 : index
    %c0_37 = arith.constant 0 : index
    %35 = vector.load %arg7[%c2_35, %c2_36, %c0_37] : memref<18x18x16xf32, #tpu.memory_space<vmem>>, vector<16x16x16xf32>
    %36 = vector.shape_cast %35 : vector<16x16x16xf32> to vector<256x16xf32>
    %37 = tpu.concatenate %20, %22, %24, %26, %28, %30, %32, %34, %36 in 1 : vector<256x16xf32>, vector<256x16xf32>, vector<256x16xf32>, vector<256x16xf32>, vector<256x16xf32>, vector<256x16xf32>, vector<256x16xf32>, vector<256x16xf32>, vector<256x16xf32> -> vector<256x144xf32>
    %38 = arith.truncf %37 : vector<256x144xf32> to vector<256x144xbf16>
    %c0_38 = arith.constant 0 : index
    %c0_39 = arith.constant 0 : index
    %39 = vector.load %arg2[%c0_38, %c0_39] : memref<144x32xbf16, #tpu.memory_space<vmem>>, vector<144x32xbf16>
    %cst_40 = arith.constant dense<0.000000e+00> : vector<256x32xf32>
    %40 = tpu.matmul %38, %39, %cst_40 {dimension_numbers = #tpu.dot_dimension_numbers<[1], [0], [0], [1], [0, 0, 1, 1], [], []>} : vector<256x144xbf16>, vector<144x32xbf16>, vector<256x32xf32> -> vector<256x32xf32>
    %c0_41 = arith.constant 0 : index
    %c0_42 = arith.constant 0 : index
    %41 = vector.load %arg3[%c0_41, %c0_42] : memref<1x32xf32, #tpu.memory_space<vmem>>, vector<1x32xf32>
    %42 = vector.broadcast %41 : vector<1x32xf32> to vector<256x32xf32>
    %43 = arith.addf %40, %42 : vector<256x32xf32>
    %cst_43 = arith.constant 0.000000e+00 : f32
    %44 = vector.broadcast %cst_43 : f32 to vector<256x32xf32>
    %45 = arith.maximumf %43, %44 : vector<256x32xf32>
    %46 = vector.shape_cast %45 : vector<256x32xf32> to vector<16x16x32xf32>
    %c1_44 = arith.constant 1 : index
    %c1_45 = arith.constant 1 : index
    %c0_46 = arith.constant 0 : index
    %47 = vector.load %arg8[%c1_44, %c1_45, %c0_46] : memref<18x18x32xf32, #tpu.memory_space<vmem>>, vector<16x16x32xf32>
    tpu.vector_store %arg8[%c1_44, %c1_45, %c0_46], %46 {strides = array<i32>} : memref<18x18x32xf32, #tpu.memory_space<vmem>>, vector<16x16x32xf32>,
    %c0_47 = arith.constant 0 : index
    %c0_48 = arith.constant 0 : index
    %c0_49 = arith.constant 0 : index
    %48 = vector.load %arg8[%c0_47, %c0_48, %c0_49] : memref<18x18x32xf32, #tpu.memory_space<vmem>>, vector<16x16x32xf32>
    %49 = vector.shape_cast %48 : vector<16x16x32xf32> to vector<256x32xf32>
    %c0_50 = arith.constant 0 : index
    %c1_51 = arith.constant 1 : index
    %c0_52 = arith.constant 0 : index
    %50 = vector.load %arg8[%c0_50, %c1_51, %c0_52] : memref<18x18x32xf32, #tpu.memory_space<vmem>>, vector<16x16x32xf32>
    %51 = vector.shape_cast %50 : vector<16x16x32xf32> to vector<256x32xf32>
    %c0_53 = arith.constant 0 : index
    %c2_54 = arith.constant 2 : index
    %c0_55 = arith.constant 0 : index
    %52 = vector.load %arg8[%c0_53, %c2_54, %c0_55] : memref<18x18x32xf32, #tpu.memory_space<vmem>>, vector<16x16x32xf32>
    %53 = vector.shape_cast %52 : vector<16x16x32xf32> to vector<256x32xf32>
    %c1_56 = arith.constant 1 : index
    %c0_57 = arith.constant 0 : index
    %c0_58 = arith.constant 0 : index
    %54 = vector.load %arg8[%c1_56, %c0_57, %c0_58] : memref<18x18x32xf32, #tpu.memory_space<vmem>>, vector<16x16x32xf32>
    %55 = vector.shape_cast %54 : vector<16x16x32xf32> to vector<256x32xf32>
    %c1_59 = arith.constant 1 : index
    %c1_60 = arith.constant 1 : index
    %c0_61 = arith.constant 0 : index
    %56 = vector.load %arg8[%c1_59, %c1_60, %c0_61] : memref<18x18x32xf32, #tpu.memory_space<vmem>>, vector<16x16x32xf32>
    %57 = vector.shape_cast %56 : vector<16x16x32xf32> to vector<256x32xf32>
    %c1_62 = arith.constant 1 : index
    %c2_63 = arith.constant 2 : index
    %c0_64 = arith.constant 0 : index
    %58 = vector.load %arg8[%c1_62, %c2_63, %c0_64] : memref<18x18x32xf32, #tpu.memory_space<vmem>>, vector<16x16x32xf32>
    %59 = vector.shape_cast %58 : vector<16x16x32xf32> to vector<256x32xf32>
    %c2_65 = arith.constant 2 : index
    %c0_66 = arith.constant 0 : index
    %c0_67 = arith.constant 0 : index
    %60 = vector.load %arg8[%c2_65, %c0_66, %c0_67] : memref<18x18x32xf32, #tpu.memory_space<vmem>>, vector<16x16x32xf32>
    %61 = vector.shape_cast %60 : vector<16x16x32xf32> to vector<256x32xf32>
    %c2_68 = arith.constant 2 : index
    %c1_69 = arith.constant 1 : index
    %c0_70 = arith.constant 0 : index
    %62 = vector.load %arg8[%c2_68, %c1_69, %c0_70] : memref<18x18x32xf32, #tpu.memory_space<vmem>>, vector<16x16x32xf32>
    %63 = vector.shape_cast %62 : vector<16x16x32xf32> to vector<256x32xf32>
    %c2_71 = arith.constant 2 : index
    %c2_72 = arith.constant 2 : index
    %c0_73 = arith.constant 0 : index
    %64 = vector.load %arg8[%c2_71, %c2_72, %c0_73] : memref<18x18x32xf32, #tpu.memory_space<vmem>>, vector<16x16x32xf32>
    %65 = vector.shape_cast %64 : vector<16x16x32xf32> to vector<256x32xf32>
    %66 = tpu.concatenate %49, %51, %53, %55, %57, %59, %61, %63, %65 in 1 : vector<256x32xf32>, vector<256x32xf32>, vector<256x32xf32>, vector<256x32xf32>, vector<256x32xf32>, vector<256x32xf32>, vector<256x32xf32>, vector<256x32xf32>, vector<256x32xf32> -> vector<256x288xf32>
    %67 = arith.truncf %66 : vector<256x288xf32> to vector<256x288xbf16>
    %c0_74 = arith.constant 0 : index
    %c0_75 = arith.constant 0 : index
    %68 = vector.load %arg4[%c0_74, %c0_75] : memref<288x128xbf16, #tpu.memory_space<vmem>>, vector<288x128xbf16>
    %cst_76 = arith.constant dense<0.000000e+00> : vector<256x128xf32>
    %69 = tpu.matmul %67, %68, %cst_76 {dimension_numbers = #tpu.dot_dimension_numbers<[1], [0], [0], [1], [0, 0, 1, 1], [], []>} : vector<256x288xbf16>, vector<288x128xbf16>, vector<256x128xf32> -> vector<256x128xf32>
    %c0_77 = arith.constant 0 : index
    %c0_78 = arith.constant 0 : index
    %70 = vector.load %arg5[%c0_77, %c0_78] : memref<1x128xf32, #tpu.memory_space<vmem>>, vector<1x128xf32>
    %71 = vector.broadcast %70 : vector<1x128xf32> to vector<256x128xf32>
    %72 = arith.addf %69, %71 : vector<256x128xf32>
    %73 = vector.shape_cast %72 : vector<256x128xf32> to vector<1x16x16x128xf32>
    %c0_79 = arith.constant 0 : index
    %c0_80 = arith.constant 0 : index
    %c0_81 = arith.constant 0 : index
    %c0_82 = arith.constant 0 : index
    %74 = vector.load %arg6[%c0_79, %c0_80, %c0_81, %c0_82] : memref<1x16x16x128xf32, #tpu.memory_space<vmem>>, vector<1x16x16x128xf32>
    tpu.vector_store %arg6[%c0_79, %c0_80, %c0_81, %c0_82], %73 {strides = array<i32>} : memref<1x16x16x128xf32, #tpu.memory_space<vmem>>, vector<1x16x16x128xf32>,
    return
  }
  func.func @transform_0(%arg0: i32) -> (i32, i32, i32, i32) {
    %c0_i32 = arith.constant 0 : i32
    %c0_i32_0 = arith.constant 0 : i32
    %c0_i32_1 = arith.constant 0 : i32
    %c0_i32_2 = arith.constant 0 : i32
    return %arg0, %c0_i32, %c0_i32_0, %c0_i32_1 : i32, i32, i32, i32
  }
  func.func @transform_1(%arg0: i32) -> (i32, i32) {
    %c0_i32 = arith.constant 0 : i32
    %c0_i32_0 = arith.constant 0 : i32
    %c0_i32_1 = arith.constant 0 : i32
    return %c0_i32, %c0_i32_0 : i32, i32
  }
  func.func @transform_2(%arg0: i32) -> (i32, i32) {
    %c0_i32 = arith.constant 0 : i32
    %c0_i32_0 = arith.constant 0 : i32
    %c0_i32_1 = arith.constant 0 : i32
    return %c0_i32, %c0_i32_0 : i32, i32
  }
  func.func @transform_3(%arg0: i32) -> (i32, i32) {
    %c0_i32 = arith.constant 0 : i32
    %c0_i32_0 = arith.constant 0 : i32
    %c0_i32_1 = arith.constant 0 : i32
    return %c0_i32, %c0_i32_0 : i32, i32
  }
  func.func @transform_4(%arg0: i32) -> (i32, i32) {
    %c0_i32 = arith.constant 0 : i32
    %c0_i32_0 = arith.constant 0 : i32
    %c0_i32_1 = arith.constant 0 : i32
    return %c0_i32, %c0_i32_0 : i32, i32
  }
  func.func @transform_5(%arg0: i32) -> (i32, i32, i32, i32) {
    %c0_i32 = arith.constant 0 : i32
    %c0_i32_0 = arith.constant 0 : i32
    %c0_i32_1 = arith.constant 0 : i32
    %c0_i32_2 = arith.constant 0 : i32
    return %arg0, %c0_i32, %c0_i32_0, %c0_i32_1 : i32, i32, i32, i32
  }
}

</mosaic_0001>

<llo_original>
// kernel: tpu_custom_call.1
$region0: #{tpu_custom_call.1}
  #allocation0 [shape = 'u32[]', space=smem, size = 0x4, offset = 0x4, fixed_abs, tag = 'smem constant byte address 0x4 - core index']
  #allocation1 [shape = 'u32[144,128]{1,0:T(1,128)}', space=vmem, size = 0x12000, scoped, tag = 'internal scratch']
  #allocation2 [shape = 'f32[18,18,16]{2,1,0:T(8,128)}', space=vmem, size = 0x36000, scoped, tag = 'scratch operand']
  #allocation3 [shape = 'f32[18,18,32]{2,1,0:T(8,128)}', space=vmem, size = 0x36000, scoped, tag = 'scratch operand']
  %s0 = inlined_call_operand.vmem [shape: s32[2,16,16,2], index: 0, kind: input, shape index: {}]
  %s1 = inlined_call_operand.vmem [shape: bf16[144,32], index: 1, kind: input, shape index: {}]
  %s2 = inlined_call_operand.vmem [shape: f32[1,32], index: 2, kind: input, shape index: {}]
  %s3 = inlined_call_operand.vmem [shape: bf16[288,128], index: 3, kind: input, shape index: {}]
  %s4 = inlined_call_operand.vmem [shape: f32[1,128], index: 4, kind: input, shape index: {}]
  %s5 = inlined_call_operand.hbm [shape: f32[2,16,16,128], index: 5, kind: output, shape index: {}]
  %s6 = sld [smem:[#allocation0]]
  $region53: #{tpu_custom_call.1} parent=0
    _
  %s8 = ssub.s32 1, %s6
  %s9 = scalar_select 0, %s8, %s6
  $region1: #{tpu_custom_call.1} parent=0
    #allocation4 [shape = 'u8[262144]{0}', space=vmem, size = 0x40000, scoped, tag = 'output window, operand 0']
    #allocation5 [shape = 's32[2]{0}', space=sflag, size = 0x8, scoped, tag = 'scoped memory for tpu_custom_call.1']
    %10 = vsyncpa [#allocation5], 0
    %s11 = scalar_lea.sflag [#allocation5], 1
    %12 = vsyncpa %s11, 0
    loop: start=0, step=1, limit=4
    $region2: #{tpu_custom_call.1} parent=1 // loop_pre_header
      _
    $region3: #{tpu_custom_call.1} parent=1 // loop_header
      %s14 = sphi 0, %s18
      %p15 = scmp.ge.s32.totalorder %s14, 4
      %s24 = sphi 0, %s26
      %s27 = sphi 0, %s24
      %s28 = sphi 0, %s27
      %s44 = sphi 0, %s28
      %s48 = sphi 0, %s48
      %s50 = sphi 0, %s48
      %s51 = sphi 0, %s50
      %s65 = sphi 0, %s51
      %s69 = sphi 0, %s69
      %s71 = sphi 0, %s69
      %s72 = sphi 0, %s71
      %s86 = sphi 0, %s72
      %s90 = sphi 0, %s90
      %s92 = sphi 0, %s90
      %s93 = sphi 0, %s92
      %s107 = sphi 0, %s93
      %s111 = sphi 0, %s111
      %s113 = sphi 0, %s111
      %s114 = sphi 0, %s113
      %s128 = sphi 0, %s114
      %s134 = sphi 0, %s136
      %s137 = sphi 0, %s134
      %s138 = sphi 0, %s137
      %s154 = sphi 0, %s138
    $region4: #{tpu_custom_call.1} parent=1 // loop_header_branch
      %17 = sbr.rel (%p15) target = $region8
    $region5: #{tpu_custom_call.1} parent=1 // loop_body
      %s19 = ssub.s32 %s14, 1
      %s20 = ssub.s32 %s14, 2
      %s21 = sadd.s32 %s14, 1
      %s22 = ssub.s32 %s14, %s21
      %p23 = scmp.eq.s32.totalorder %s22, 0
      %s25 = sadd.s32 %s24, 1
      %s26 = scalar_select %p23, %s24, %s25
      %p29 = pneg %p23
      %p30 = scmp.eq.s32.totalorder %s14, 1
      %p31 = por %p29, %p30
      %p32 = scmp.ne.s32.totalorder %s24, %s27
      %p33 = scmp.eq.s32.totalorder %s14, 0
      %p34 = por %p32, %p33
      %p35 = scmp.ne.s32.totalorder %s24, %s27
      %p36 = scmp.eq.s32.totalorder %s19, 1
      %p37 = por %p35, %p36
      %p38 = scmp.ne.s32.totalorder %s27, %s28
      %p39 = scmp.eq.s32.totalorder %s19, 0
      %p40 = por %p38, %p39
      %p41 = scmp.ne.s32.totalorder %s27, %s28
      %p42 = scmp.eq.s32.totalorder %s20, 1
      %p43 = por %p41, %p42
      %p45 = scmp.ne.s32.totalorder %s28, %s44
      %p46 = scmp.eq.s32.totalorder %s20, 0
      %p47 = por %p45, %p46
      %s49 = sadd.s32 %s48, 1
      %p52 = scmp.eq.s32.totalorder %s14, 1
      %p53 = scmp.ne.s32.totalorder %s48, %s50
      %p54 = scmp.eq.s32.totalorder %s14, 0
      %p55 = por %p53, %p54
      %p56 = scmp.ne.s32.totalorder %s48, %s50
      %p57 = scmp.eq.s32.totalorder %s19, 1
      %p58 = por %p56, %p57
      %p59 = scmp.ne.s32.totalorder %s50, %s51
      %p60 = scmp.eq.s32.totalorder %s19, 0
      %p61 = por %p59, %p60
      %p62 = scmp.ne.s32.totalorder %s50, %s51
      %p63 = scmp.eq.s32.totalorder %s20, 1
      %p64 = por %p62, %p63
      %p66 = scmp.ne.s32.totalorder %s51, %s65
      %p67 = scmp.eq.s32.totalorder %s20, 0
      %p68 = por %p66, %p67
      %s70 = sadd.s32 %s69, 1
      %p73 = scmp.eq.s32.totalorder %s14, 1
      %p74 = scmp.ne.s32.totalorder %s69, %s71
      %p75 = scmp.eq.s32.totalorder %s14, 0
      %p76 = por %p74, %p75
      %p77 = scmp.ne.s32.totalorder %s69, %s71
      %p78 = scmp.eq.s32.totalorder %s19, 1
      %p79 = por %p77, %p78
      %p80 = scmp.ne.s32.totalorder %s71, %s72
      %p81 = scmp.eq.s32.totalorder %s19, 0
      %p82 = por %p80, %p81
      %p83 = scmp.ne.s32.totalorder %s71, %s72
      %p84 = scmp.eq.s32.totalorder %s20, 1
      %p85 = por %p83, %p84
      %p87 = scmp.ne.s32.totalorder %s72, %s86
      %p88 = scmp.eq.s32.totalorder %s20, 0
      %p89 = por %p87, %p88
      %s91 = sadd.s32 %s90, 1
      %p94 = scmp.eq.s32.totalorder %s14, 1
      %p95 = scmp.ne.s32.totalorder %s90, %s92
      %p96 = scmp.eq.s32.totalorder %s14, 0
      %p97 = por %p95, %p96
      %p98 = scmp.ne.s32.totalorder %s90, %s92
      %p99 = scmp.eq.s32.totalorder %s19, 1
      %p100 = por %p98, %p99
      %p101 = scmp.ne.s32.totalorder %s92, %s93
      %p102 = scmp.eq.s32.totalorder %s19, 0
      %p103 = por %p101, %p102
      %p104 = scmp.ne.s32.totalorder %s92, %s93
      %p105 = scmp.eq.s32.totalorder %s20, 1
      %p106 = por %p104, %p105
      %p108 = scmp.ne.s32.totalorder %s93, %s107
      %p109 = scmp.eq.s32.totalorder %s20, 0
      %p110 = por %p108, %p109
      %s112 = sadd.s32 %s111, 1
      %p115 = scmp.eq.s32.totalorder %s14, 1
      %p116 = scmp.ne.s32.totalorder %s111, %s113
      %p117 = scmp.eq.s32.totalorder %s14, 0
      %p118 = por %p116, %p117
      %p119 = scmp.ne.s32.totalorder %s111, %s113
      %p120 = scmp.eq.s32.totalorder %s19, 1
      %p121 = por %p119, %p120
      %p122 = scmp.ne.s32.totalorder %s113, %s114
      %p123 = scmp.eq.s32.totalorder %s19, 0
      %p124 = por %p122, %p123
      %p125 = scmp.ne.s32.totalorder %s113, %s114
      %p126 = scmp.eq.s32.totalorder %s20, 1
      %p127 = por %p125, %p126
      %p129 = scmp.ne.s32.totalorder %s114, %s128
      %p130 = scmp.eq.s32.totalorder %s20, 0
      %p131 = por %p129, %p130
      %s132 = ssub.s32 %s14, %s21
      %p133 = scmp.eq.s32.totalorder %s132, 0
      %s135 = sadd.s32 %s134, 1
      %s136 = scalar_select %p133, %s134, %s135
      %p139 = pneg %p133
      %p140 = scmp.eq.s32.totalorder %s14, 1
      %p141 = por %p139, %p140
      %p142 = scmp.ne.s32.totalorder %s134, %s137
      %p143 = scmp.eq.s32.totalorder %s14, 0
      %p144 = por %p142, %p143
      %p145 = scmp.ne.s32.totalorder %s134, %s137
      %p146 = scmp.eq.s32.totalorder %s19, 1
      %p147 = por %p145, %p146
      %p148 = scmp.ne.s32.totalorder %s137, %s138
      %p149 = scmp.eq.s32.totalorder %s19, 0
      %p150 = por %p148, %p149
      %p151 = scmp.ne.s32.totalorder %s137, %s138
      %p152 = scmp.eq.s32.totalorder %s20, 1
      %p153 = por %p151, %p152
      %p155 = scmp.ne.s32.totalorder %s138, %s154
      %p156 = scmp.eq.s32.totalorder %s20, 0
      %p157 = por %p155, %p156
      %p158 = scmp.le.s32.totalorder 1, %s14
      %p159 = scmp.lt.s32.totalorder %s14, 3
      %p160 = pnand %p158, %p159
      %p161 = pneg %p160
      // Predicated region
      $region9: #{tpu_custom_call.1} parent=5 // pred_check
        _
      $region10: #{tpu_custom_call.1} parent=5 // pred_check_branch
        %163 = sbr.rel (%p160) target = $region12
      $region11: #{tpu_custom_call.1} parent=5 // pred_region
        %s164 = ssub.s32 %s14, 1
        // Predicated region
        $region13: #{tpu_custom_call.1} parent=11 // pred_check
          %p165 = pneg %p61
        $region14: #{tpu_custom_call.1} parent=11 // pred_check_branch
          %167 = sbr.rel (%p165) target = $region16
        $region15: #{tpu_custom_call.1} parent=11 // pred_region
          _
        $region16: #{tpu_custom_call.1} parent=11 // pred_fallthru
          _
        // Predicated region
        $region17: #{tpu_custom_call.1} parent=11 // pred_check
          %p168 = pneg %p82
        $region18: #{tpu_custom_call.1} parent=11 // pred_check_branch
          %170 = sbr.rel (%p168) target = $region20
        $region19: #{tpu_custom_call.1} parent=11 // pred_region
          _
        $region20: #{tpu_custom_call.1} parent=11 // pred_fallthru
          _
        // Predicated region
        $region21: #{tpu_custom_call.1} parent=11 // pred_check
          %p171 = pneg %p103
        $region22: #{tpu_custom_call.1} parent=11 // pred_check_branch
          %173 = sbr.rel (%p171) target = $region24
        $region23: #{tpu_custom_call.1} parent=11 // pred_region
          _
        $region24: #{tpu_custom_call.1} parent=11 // pred_fallthru
          _
        // Predicated region
        $region25: #{tpu_custom_call.1} parent=11 // pred_check
          %p174 = pneg %p124
        $region26: #{tpu_custom_call.1} parent=11 // pred_check_branch
          %176 = sbr.rel (%p174) target = $region28
        $region27: #{tpu_custom_call.1} parent=11 // pred_region
          _
        $region28: #{tpu_custom_call.1} parent=11 // pred_fallthru
          _
      $region12: #{tpu_custom_call.1} parent=5 // pred_fallthru
        _
      %p177 = scmp.lt.s32.totalorder %s14, 2
      // Predicated region
      $region29: #{tpu_custom_call.1} parent=5 // pred_check
        %p178 = pneg %p177
      $region30: #{tpu_custom_call.1} parent=5 // pred_check_branch
        %180 = sbr.rel (%p178) target = $region32
      $region31: #{tpu_custom_call.1} parent=5 // pred_region
        // Predicated region
        $region33: #{tpu_custom_call.1} parent=31 // pred_check
          %p181 = pneg %p34
        $region34: #{tpu_custom_call.1} parent=31 // pred_check_branch
          %183 = sbr.rel (%p181) target = $region36
        $region35: #{tpu_custom_call.1} parent=31 // pred_region
          %p184 = scmp.lt.s32.totalorder %s14, 1
          %s185 = scalar_select %p184, %s14, 1
          %s186 = smul.addr %s185, 32
          %s187 = smul.addr %s186, 8
          %s188 = scalar_lea.vmem %s0, %s187
        $region36: #{tpu_custom_call.1} parent=31 // pred_fallthru
          _
      $region32: #{tpu_custom_call.1} parent=5 // pred_fallthru
        _
      %p189 = scmp.le.s32.totalorder 1, %s14
      %p190 = scmp.lt.s32.totalorder %s14, 3
      %p191 = pnand %p189, %p190
      %p192 = pneg %p191
      // Predicated region
      $region37: #{tpu_custom_call.1} parent=5 // pred_check
        _
      $region38: #{tpu_custom_call.1} parent=5 // pred_check_branch
        %194 = sbr.rel (%p191) target = $region40
      $region39: #{tpu_custom_call.1} parent=5 // pred_region
        %s195 = ssub.s32 %s14, 1
        %p196 = scmp.lt.s32.totalorder %s19, 1
        %s197 = scalar_select %p196, %s19, 1
        %s198 = smul.addr %s197, 32
        %s199 = smul.addr %s198, 8
        %s200 = scalar_lea.vmem %s0, %s199
        %p201 = pneg %p40
        %p202 = pneg %p37
        %p203 = pneg %p61
        %p204 = pneg %p58
        %p205 = pneg %p82
        %p206 = pneg %p79
        %p207 = pneg %p103
        %p208 = pneg %p100
        %p209 = pneg %p124
        %p210 = pneg %p121
        %p211 = pneg %p150
        %p212 = pneg %p147
        %s213 = sand.u32 %s137, 1
        %s214 = scalar_lea.sflag [#allocation5], %s213
        %s215 = sand.u32 %s137, 1
        %s216 = smul.addr %s215, 256
        %s217 = scalar_lea.vmem [#allocation4], %s216
        %p218 = scmp.lt.s32.totalorder %s19, 1
        %s219 = scalar_select %p218, %s19, 1
        %s220 = smul.addr %s219, 32
        %s221 = smul.addr %s220, 8
        %s222 = scalar_lea.vmem %s0, %s221
        %vm224 = vcmask 130048
        %225 = vst.msk [vmem:[#allocation2] sm:$0xff] %vm224, 0.0
        %226 = vst.msk [vmem:[#allocation2 + $0x8] sm:$0xff] %vm224, 0.0
        %vm227 = vcmask 123904
        %228 = vst.msk [vmem:[#allocation2 + $0x10] sm:$0x3] %vm227, 0.0
        %229 = vst.msk [vmem:[#allocation2 + $0x18] sm:$0xff] %vm224, 0.0
        %230 = vst.msk [vmem:[#allocation2 + $0x20] sm:$0xff] %vm224, 0.0
        %231 = vst.msk [vmem:[#allocation2 + $0x28] sm:$0x3] %vm227, 0.0
        %232 = vst.msk [vmem:[#allocation2 + $0x30] sm:$0xff] %vm224, 0.0
        %233 = vst.msk [vmem:[#allocation2 + $0x38] sm:$0xff] %vm224, 0.0
        %234 = vst.msk [vmem:[#allocation2 + $0x40] sm:$0x3] %vm227, 0.0
        %235 = vst.msk [vmem:[#allocation2 + $0x48] sm:$0xff] %vm224, 0.0
        %236 = vst.msk [vmem:[#allocation2 + $0x50] sm:$0xff] %vm224, 0.0
        %237 = vst.msk [vmem:[#allocation2 + $0x58] sm:$0x3] %vm227, 0.0
        %238 = vst.msk [vmem:[#allocation2 + $0x60] sm:$0xff] %vm224, 0.0
        %239 = vst.msk [vmem:[#allocation2 + $0x68] sm:$0xff] %vm224, 0.0
        %240 = vst.msk [vmem:[#allocation2 + $0x70] sm:$0x3] %vm227, 0.0
        %241 = vst.msk [vmem:[#allocation2 + $0x78] sm:$0xff] %vm224, 0.0
        %242 = vst.msk [vmem:[#allocation2 + $0x80] sm:$0xff] %vm224, 0.0
        %243 = vst.msk [vmem:[#allocation2 + $0x88] sm:$0x3] %vm227, 0.0
        %244 = vst.msk [vmem:[#allocation2 + $0x90] sm:$0xff] %vm224, 0.0
        %245 = vst.msk [vmem:[#allocation2 + $0x98] sm:$0xff] %vm224, 0.0
        %246 = vst.msk [vmem:[#allocation2 + $0xa0] sm:$0x3] %vm227, 0.0
        %247 = vst.msk [vmem:[#allocation2 + $0xa8] sm:$0xff] %vm224, 0.0
        %248 = vst.msk [vmem:[#allocation2 + $0xb0] sm:$0xff] %vm224, 0.0
        %249 = vst.msk [vmem:[#allocation2 + $0xb8] sm:$0x3] %vm227, 0.0
        %250 = vst.msk [vmem:[#allocation2 + $0xc0] sm:$0xff] %vm224, 0.0
        %251 = vst.msk [vmem:[#allocation2 + $0xc8] sm:$0xff] %vm224, 0.0
        %252 = vst.msk [vmem:[#allocation2 + $0xd0] sm:$0x3] %vm227, 0.0
        %253 = vst.msk [vmem:[#allocation2 + $0xd8] sm:$0xff] %vm224, 0.0
        %254 = vst.msk [vmem:[#allocation2 + $0xe0] sm:$0xff] %vm224, 0.0
        %255 = vst.msk [vmem:[#allocation2 + $0xe8] sm:$0x3] %vm227, 0.0
        %256 = vst.msk [vmem:[#allocation2 + $0xf0] sm:$0xff] %vm224, 0.0
        %257 = vst.msk [vmem:[#allocation2 + $0xf8] sm:$0xff] %vm224, 0.0
        %258 = vst.msk [vmem:[#allocation2 + $0x100] sm:$0x3] %vm227, 0.0
        %259 = vst.msk [vmem:[#allocation2 + $0x108] sm:$0xff] %vm224, 0.0
        %260 = vst.msk [vmem:[#allocation2 + $0x110] sm:$0xff] %vm224, 0.0
        %261 = vst.msk [vmem:[#allocation2 + $0x118] sm:$0x3] %vm227, 0.0
        %262 = vst.msk [vmem:[#allocation2 + $0x120] sm:$0xff] %vm224, 0.0
        %263 = vst.msk [vmem:[#allocation2 + $0x128] sm:$0xff] %vm224, 0.0
        %264 = vst.msk [vmem:[#allocation2 + $0x130] sm:$0x3] %vm227, 0.0
        %265 = vst.msk [vmem:[#allocation2 + $0x138] sm:$0xff] %vm224, 0.0
        %266 = vst.msk [vmem:[#allocation2 + $0x140] sm:$0xff] %vm224, 0.0
        %267 = vst.msk [vmem:[#allocation2 + $0x148] sm:$0x3] %vm227, 0.0
        %268 = vst.msk [vmem:[#allocation2 + $0x150] sm:$0xff] %vm224, 0.0
        %269 = vst.msk [vmem:[#allocation2 + $0x158] sm:$0xff] %vm224, 0.0
        %270 = vst.msk [vmem:[#allocation2 + $0x160] sm:$0x3] %vm227, 0.0
        %271 = vst.msk [vmem:[#allocation2 + $0x168] sm:$0xff] %vm224, 0.0
        %272 = vst.msk [vmem:[#allocation2 + $0x170] sm:$0xff] %vm224, 0.0
        %273 = vst.msk [vmem:[#allocation2 + $0x178] sm:$0x3] %vm227, 0.0
        %274 = vst.msk [vmem:[#allocation2 + $0x180] sm:$0xff] %vm224, 0.0
        %275 = vst.msk [vmem:[#allocation2 + $0x188] sm:$0xff] %vm224, 0.0
        %276 = vst.msk [vmem:[#allocation2 + $0x190] sm:$0x3] %vm227, 0.0
        %277 = vst.msk [vmem:[#allocation2 + $0x198] sm:$0xff] %vm224, 0.0
        %278 = vst.msk [vmem:[#allocation2 + $0x1a0] sm:$0xff] %vm224, 0.0
        %279 = vst.msk [vmem:[#allocation2 + $0x1a8] sm:$0x3] %vm227, 0.0
        %vm280 = vcmask 261120
        %281 = vst.msk [vmem:[#allocation3] sm:$0xff] %vm280, 0.0
        %282 = vst.msk [vmem:[#allocation3 + $0x8] sm:$0xff] %vm280, 0.0
        %vm283 = vcmask 254976
        %284 = vst.msk [vmem:[#allocation3 + $0x10] sm:$0x3] %vm283, 0.0
        %285 = vst.msk [vmem:[#allocation3 + $0x18] sm:$0xff] %vm280, 0.0
        %286 = vst.msk [vmem:[#allocation3 + $0x20] sm:$0xff] %vm280, 0.0
        %287 = vst.msk [vmem:[#allocation3 + $0x28] sm:$0x3] %vm283, 0.0
        %288 = vst.msk [vmem:[#allocation3 + $0x30] sm:$0xff] %vm280, 0.0
        %289 = vst.msk [vmem:[#allocation3 + $0x38] sm:$0xff] %vm280, 0.0
        %290 = vst.msk [vmem:[#allocation3 + $0x40] sm:$0x3] %vm283, 0.0
        %291 = vst.msk [vmem:[#allocation3 + $0x48] sm:$0xff] %vm280, 0.0
        %292 = vst.msk [vmem:[#allocation3 + $0x50] sm:$0xff] %vm280, 0.0
        %293 = vst.msk [vmem:[#allocation3 + $0x58] sm:$0x3] %vm283, 0.0
        %294 = vst.msk [vmem:[#allocation3 + $0x60] sm:$0xff] %vm280, 0.0
        %295 = vst.msk [vmem:[#allocation3 + $0x68] sm:$0xff] %vm280, 0.0
        %296 = vst.msk [vmem:[#allocation3 + $0x70] sm:$0x3] %vm283, 0.0
        %297 = vst.msk [vmem:[#allocation3 + $0x78] sm:$0xff] %vm280, 0.0
        %298 = vst.msk [vmem:[#allocation3 + $0x80] sm:$0xff] %vm280, 0.0
        %299 = vst.msk [vmem:[#allocation3 + $0x88] sm:$0x3] %vm283, 0.0
        %300 = vst.msk [vmem:[#allocation3 + $0x90] sm:$0xff] %vm280, 0.0
        %301 = vst.msk [vmem:[#allocation3 + $0x98] sm:$0xff] %vm280, 0.0
        %302 = vst.msk [vmem:[#allocation3 + $0xa0] sm:$0x3] %vm283, 0.0
        %303 = vst.msk [vmem:[#allocation3 + $0xa8] sm:$0xff] %vm280, 0.0
        %304 = vst.msk [vmem:[#allocation3 + $0xb0] sm:$0xff] %vm280, 0.0
        %305 = vst.msk [vmem:[#allocation3 + $0xb8] sm:$0x3] %vm283, 0.0
        %306 = vst.msk [vmem:[#allocation3 + $0xc0] sm:$0xff] %vm280, 0.0
        %307 = vst.msk [vmem:[#allocation3 + $0xc8] sm:$0xff] %vm280, 0.0
        %308 = vst.msk [vmem:[#allocation3 + $0xd0] sm:$0x3] %vm283, 0.0
        %309 = vst.msk [vmem:[#allocation3 + $0xd8] sm:$0xff] %vm280, 0.0
        %310 = vst.msk [vmem:[#allocation3 + $0xe0] sm:$0xff] %vm280, 0.0
        %311 = vst.msk [vmem:[#allocation3 + $0xe8] sm:$0x3] %vm283, 0.0
        %312 = vst.msk [vmem:[#allocation3 + $0xf0] sm:$0xff] %vm280, 0.0
        %313 = vst.msk [vmem:[#allocation3 + $0xf8] sm:$0xff] %vm280, 0.0
        %314 = vst.msk [vmem:[#allocation3 + $0x100] sm:$0x3] %vm283, 0.0
        %315 = vst.msk [vmem:[#allocation3 + $0x108] sm:$0xff] %vm280, 0.0
        %316 = vst.msk [vmem:[#allocation3 + $0x110] sm:$0xff] %vm280, 0.0
        %317 = vst.msk [vmem:[#allocation3 + $0x118] sm:$0x3] %vm283, 0.0
        %318 = vst.msk [vmem:[#allocation3 + $0x120] sm:$0xff] %vm280, 0.0
        %319 = vst.msk [vmem:[#allocation3 + $0x128] sm:$0xff] %vm280, 0.0
        %320 = vst.msk [vmem:[#allocation3 + $0x130] sm:$0x3] %vm283, 0.0
        %321 = vst.msk [vmem:[#allocation3 + $0x138] sm:$0xff] %vm280, 0.0
        %322 = vst.msk [vmem:[#allocation3 + $0x140] sm:$0xff] %vm280, 0.0
        %323 = vst.msk [vmem:[#allocation3 + $0x148] sm:$0x3] %vm283, 0.0
        %324 = vst.msk [vmem:[#allocation3 + $0x150] sm:$0xff] %vm280, 0.0
        %325 = vst.msk [vmem:[#allocation3 + $0x158] sm:$0xff] %vm280, 0.0
        %326 = vst.msk [vmem:[#allocation3 + $0x160] sm:$0x3] %vm283, 0.0
        %327 = vst.msk [vmem:[#allocation3 + $0x168] sm:$0xff] %vm280, 0.0
        %328 = vst.msk [vmem:[#allocation3 + $0x170] sm:$0xff] %vm280, 0.0
        %329 = vst.msk [vmem:[#allocation3 + $0x178] sm:$0x3] %vm283, 0.0
        %330 = vst.msk [vmem:[#allocation3 + $0x180] sm:$0xff] %vm280, 0.0
        %331 = vst.msk [vmem:[#allocation3 + $0x188] sm:$0xff] %vm280, 0.0
        %332 = vst.msk [vmem:[#allocation3 + $0x190] sm:$0x3] %vm283, 0.0
        %333 = vst.msk [vmem:[#allocation3 + $0x198] sm:$0xff] %vm280, 0.0
        %334 = vst.msk [vmem:[#allocation3 + $0x1a0] sm:$0xff] %vm280, 0.0
        %335 = vst.msk [vmem:[#allocation3 + $0x1a8] sm:$0x3] %vm283, 0.0
        %v336 = vld [vmem:[%s222] sm:$0xff]
        %v337 = vld [vmem:[%s222 + $0x8] sm:$0xff]
        %v338 = vld [vmem:[%s222 + $0x10] sm:$0xff]
        %v339 = vld [vmem:[%s222 + $0x18] sm:$0xff]
        %v340 = vld [vmem:[%s222 + $0x20] sm:$0xff]
        %v341 = vld [vmem:[%s222 + $0x28] sm:$0xff]
        %v342 = vld [vmem:[%s222 + $0x30] sm:$0xff]
        %v343 = vld [vmem:[%s222 + $0x38] sm:$0xff]
        %v344 = vld [vmem:[%s222 + $0x40] sm:$0xff]
        %v345 = vld [vmem:[%s222 + $0x48] sm:$0xff]
        %v346 = vld [vmem:[%s222 + $0x50] sm:$0xff]
        %v347 = vld [vmem:[%s222 + $0x58] sm:$0xff]
        %v348 = vld [vmem:[%s222 + $0x60] sm:$0xff]
        %v349 = vld [vmem:[%s222 + $0x68] sm:$0xff]
        %v350 = vld [vmem:[%s222 + $0x70] sm:$0xff]
        %v351 = vld [vmem:[%s222 + $0x78] sm:$0xff]
        %v352 = vld [vmem:[%s222 + $0x80] sm:$0xff]
        %v353 = vld [vmem:[%s222 + $0x88] sm:$0xff]
        %v354 = vld [vmem:[%s222 + $0x90] sm:$0xff]
        %v355 = vld [vmem:[%s222 + $0x98] sm:$0xff]
        %v356 = vld [vmem:[%s222 + $0xa0] sm:$0xff]
        %v357 = vld [vmem:[%s222 + $0xa8] sm:$0xff]
        %v358 = vld [vmem:[%s222 + $0xb0] sm:$0xff]
        %v359 = vld [vmem:[%s222 + $0xb8] sm:$0xff]
        %v360 = vld [vmem:[%s222 + $0xc0] sm:$0xff]
        %v361 = vld [vmem:[%s222 + $0xc8] sm:$0xff]
        %v362 = vld [vmem:[%s222 + $0xd0] sm:$0xff]
        %v363 = vld [vmem:[%s222 + $0xd8] sm:$0xff]
        %v364 = vld [vmem:[%s222 + $0xe0] sm:$0xff]
        %v365 = vld [vmem:[%s222 + $0xe8] sm:$0xff]
        %v366 = vld [vmem:[%s222 + $0xf0] sm:$0xff]
        %v367 = vld [vmem:[%s222 + $0xf8] sm:$0xff]
        %v368 = vlaneseq
        %v369 = vand.u32 %v368, 127
        %370 = vset.pattern.permute.xlu0 0
        %371 = vperm.xlu0 %370, %v336
        %v372 = vpop.permute.xlu0 %371
        %373 = vset.pattern.permute.xlu0 0
        %374 = vperm.xlu0 %373, %v337
        %v375 = vpop.permute.xlu0 %374
        %376 = vset.pattern.permute.xlu0 0
        %377 = vperm.xlu0 %376, %v338
        %v378 = vpop.permute.xlu0 %377
        %379 = vset.pattern.permute.xlu0 0
        %380 = vperm.xlu0 %379, %v339
        %v381 = vpop.permute.xlu0 %380
        %382 = vset.pattern.permute.xlu0 0
        %383 = vperm.xlu0 %382, %v340
        %v384 = vpop.permute.xlu0 %383
        %385 = vset.pattern.permute.xlu0 0
        %386 = vperm.xlu0 %385, %v341
        %v387 = vpop.permute.xlu0 %386
        %388 = vset.pattern.permute.xlu0 0
        %389 = vperm.xlu0 %388, %v342
        %v390 = vpop.permute.xlu0 %389
        %391 = vset.pattern.permute.xlu0 0
        %392 = vperm.xlu0 %391, %v343
        %v393 = vpop.permute.xlu0 %392
        %394 = vset.pattern.permute.xlu0 0
        %395 = vperm.xlu0 %394, %v344
        %v396 = vpop.permute.xlu0 %395
        %397 = vset.pattern.permute.xlu0 0
        %398 = vperm.xlu0 %397, %v345
        %v399 = vpop.permute.xlu0 %398
        %400 = vset.pattern.permute.xlu0 0
        %401 = vperm.xlu0 %400, %v346
        %v402 = vpop.permute.xlu0 %401
        %403 = vset.pattern.permute.xlu0 0
        %404 = vperm.xlu0 %403, %v347
        %v405 = vpop.permute.xlu0 %404
        %406 = vset.pattern.permute.xlu0 0
        %407 = vperm.xlu0 %406, %v348
        %v408 = vpop.permute.xlu0 %407
        %409 = vset.pattern.permute.xlu0 0
        %410 = vperm.xlu0 %409, %v349
        %v411 = vpop.permute.xlu0 %410
        %412 = vset.pattern.permute.xlu0 0
        %413 = vperm.xlu0 %412, %v350
        %v414 = vpop.permute.xlu0 %413
        %415 = vset.pattern.permute.xlu0 0
        %416 = vperm.xlu0 %415, %v351
        %v417 = vpop.permute.xlu0 %416
        %418 = vset.pattern.permute.xlu0 0
        %419 = vperm.xlu0 %418, %v352
        %v420 = vpop.permute.xlu0 %419
        %421 = vset.pattern.permute.xlu0 0
        %422 = vperm.xlu0 %421, %v353
        %v423 = vpop.permute.xlu0 %422
        %424 = vset.pattern.permute.xlu0 0
        %425 = vperm.xlu0 %424, %v354
        %v426 = vpop.permute.xlu0 %425
        %427 = vset.pattern.permute.xlu0 0
        %428 = vperm.xlu0 %427, %v355
        %v429 = vpop.permute.xlu0 %428
        %430 = vset.pattern.permute.xlu0 0
        %431 = vperm.xlu0 %430, %v356
        %v432 = vpop.permute.xlu0 %431
        %433 = vset.pattern.permute.xlu0 0
        %434 = vperm.xlu0 %433, %v357
        %v435 = vpop.permute.xlu0 %434
        %436 = vset.pattern.permute.xlu0 0
        %437 = vperm.xlu0 %436, %v358
        %v438 = vpop.permute.xlu0 %437
        %439 = vset.pattern.permute.xlu0 0
        %440 = vperm.xlu0 %439, %v359
        %v441 = vpop.permute.xlu0 %440
        %442 = vset.pattern.permute.xlu0 0
        %443 = vperm.xlu0 %442, %v360
        %v444 = vpop.permute.xlu0 %443
        %445 = vset.pattern.permute.xlu0 0
        %446 = vperm.xlu0 %445, %v361
        %v447 = vpop.permute.xlu0 %446
        %448 = vset.pattern.permute.xlu0 0
        %449 = vperm.xlu0 %448, %v362
        %v450 = vpop.permute.xlu0 %449
        %451 = vset.pattern.permute.xlu0 0
        %452 = vperm.xlu0 %451, %v363
        %v453 = vpop.permute.xlu0 %452
        %454 = vset.pattern.permute.xlu0 0
        %455 = vperm.xlu0 %454, %v364
        %v456 = vpop.permute.xlu0 %455
        %457 = vset.pattern.permute.xlu0 0
        %458 = vperm.xlu0 %457, %v365
        %v459 = vpop.permute.xlu0 %458
        %460 = vset.pattern.permute.xlu0 0
        %461 = vperm.xlu0 %460, %v366
        %v462 = vpop.permute.xlu0 %461
        %463 = vset.pattern.permute.xlu0 0
        %464 = vperm.xlu0 %463, %v367
        %v465 = vpop.permute.xlu0 %464
        %vm466 = vcmp.eq.s32.totalorder %v372, %v369
        %vm467 = vcmp.eq.s32.totalorder %v375, %v369
        %vm468 = vcmp.eq.s32.totalorder %v378, %v369
        %vm469 = vcmp.eq.s32.totalorder %v381, %v369
        %vm470 = vcmp.eq.s32.totalorder %v384, %v369
        %vm471 = vcmp.eq.s32.totalorder %v387, %v369
        %vm472 = vcmp.eq.s32.totalorder %v390, %v369
        %vm473 = vcmp.eq.s32.totalorder %v393, %v369
        %vm474 = vcmp.eq.s32.totalorder %v396, %v369
        %vm475 = vcmp.eq.s32.totalorder %v399, %v369
        %vm476 = vcmp.eq.s32.totalorder %v402, %v369
        %vm477 = vcmp.eq.s32.totalorder %v405, %v369
        %vm478 = vcmp.eq.s32.totalorder %v408, %v369
        %vm479 = vcmp.eq.s32.totalorder %v411, %v369
        %vm480 = vcmp.eq.s32.totalorder %v414, %v369
        %vm481 = vcmp.eq.s32.totalorder %v417, %v369
        %vm482 = vcmp.eq.s32.totalorder %v420, %v369
        %vm483 = vcmp.eq.s32.totalorder %v423, %v369
        %vm484 = vcmp.eq.s32.totalorder %v426, %v369
        %vm485 = vcmp.eq.s32.totalorder %v429, %v369
        %vm486 = vcmp.eq.s32.totalorder %v432, %v369
        %vm487 = vcmp.eq.s32.totalorder %v435, %v369
        %vm488 = vcmp.eq.s32.totalorder %v438, %v369
        %vm489 = vcmp.eq.s32.totalorder %v441, %v369
        %vm490 = vcmp.eq.s32.totalorder %v444, %v369
        %vm491 = vcmp.eq.s32.totalorder %v447, %v369
        %vm492 = vcmp.eq.s32.totalorder %v450, %v369
        %vm493 = vcmp.eq.s32.totalorder %v453, %v369
        %vm494 = vcmp.eq.s32.totalorder %v456, %v369
        %vm495 = vcmp.eq.s32.totalorder %v459, %v369
        %vm496 = vcmp.eq.s32.totalorder %v462, %v369
        %vm497 = vcmp.eq.s32.totalorder %v465, %v369
        %v498 = vsel %vm466, 1, 0
        %v499 = vsel %vm467, 1, 0
        %v500 = vsel %vm468, 1, 0
        %v501 = vsel %vm469, 1, 0
        %v502 = vsel %vm470, 1, 0
        %v503 = vsel %vm471, 1, 0
        %v504 = vsel %vm472, 1, 0
        %v505 = vsel %vm473, 1, 0
        %v506 = vsel %vm474, 1, 0
        %v507 = vsel %vm475, 1, 0
        %v508 = vsel %vm476, 1, 0
        %v509 = vsel %vm477, 1, 0
        %v510 = vsel %vm478, 1, 0
        %v511 = vsel %vm479, 1, 0
        %v512 = vsel %vm480, 1, 0
        %v513 = vsel %vm481, 1, 0
        %v514 = vsel %vm482, 1, 0
        %v515 = vsel %vm483, 1, 0
        %v516 = vsel %vm484, 1, 0
        %v517 = vsel %vm485, 1, 0
        %v518 = vsel %vm486, 1, 0
        %v519 = vsel %vm487, 1, 0
        %v520 = vsel %vm488, 1, 0
        %v521 = vsel %vm489, 1, 0
        %v522 = vsel %vm490, 1, 0
        %v523 = vsel %vm491, 1, 0
        %v524 = vsel %vm492, 1, 0
        %v525 = vsel %vm493, 1, 0
        %v526 = vsel %vm494, 1, 0
        %v527 = vsel %vm495, 1, 0
        %v528 = vsel %vm496, 1, 0
        %v529 = vsel %vm497, 1, 0
        %v530 = vcvt.s32.f32 %v498
        %v531 = vcvt.s32.f32 %v499
        %v532 = vcvt.s32.f32 %v500
        %v533 = vcvt.s32.f32 %v501
        %v534 = vcvt.s32.f32 %v502
        %v535 = vcvt.s32.f32 %v503
        %v536 = vcvt.s32.f32 %v504
        %v537 = vcvt.s32.f32 %v505
        %v538 = vcvt.s32.f32 %v506
        %v539 = vcvt.s32.f32 %v507
        %v540 = vcvt.s32.f32 %v508
        %v541 = vcvt.s32.f32 %v509
        %v542 = vcvt.s32.f32 %v510
        %v543 = vcvt.s32.f32 %v511
        %v544 = vcvt.s32.f32 %v512
        %v545 = vcvt.s32.f32 %v513
        %v546 = vcvt.s32.f32 %v514
        %v547 = vcvt.s32.f32 %v515
        %v548 = vcvt.s32.f32 %v516
        %v549 = vcvt.s32.f32 %v517
        %v550 = vcvt.s32.f32 %v518
        %v551 = vcvt.s32.f32 %v519
        %v552 = vcvt.s32.f32 %v520
        %v553 = vcvt.s32.f32 %v521
        %v554 = vcvt.s32.f32 %v522
        %v555 = vcvt.s32.f32 %v523
        %v556 = vcvt.s32.f32 %v524
        %v557 = vcvt.s32.f32 %v525
        %v558 = vcvt.s32.f32 %v526
        %v559 = vcvt.s32.f32 %v527
        %v560 = vcvt.s32.f32 %v528
        %v561 = vcvt.s32.f32 %v529
        %562 = vset.pattern.permute.xlu0 1
        %563 = vperm.xlu0 %562, %v336
        %v564 = vpop.permute.xlu0 %563
        %565 = vset.pattern.permute.xlu0 1
        %566 = vperm.xlu0 %565, %v337
        %v567 = vpop.permute.xlu0 %566
        %568 = vset.pattern.permute.xlu0 1
        %569 = vperm.xlu0 %568, %v338
        %v570 = vpop.permute.xlu0 %569
        %571 = vset.pattern.permute.xlu0 1
        %572 = vperm.xlu0 %571, %v339
        %v573 = vpop.permute.xlu0 %572
        %574 = vset.pattern.permute.xlu0 1
        %575 = vperm.xlu0 %574, %v340
        %v576 = vpop.permute.xlu0 %575
        %577 = vset.pattern.permute.xlu0 1
        %578 = vperm.xlu0 %577, %v341
        %v579 = vpop.permute.xlu0 %578
        %580 = vset.pattern.permute.xlu0 1
        %581 = vperm.xlu0 %580, %v342
        %v582 = vpop.permute.xlu0 %581
        %583 = vset.pattern.permute.xlu0 1
        %584 = vperm.xlu0 %583, %v343
        %v585 = vpop.permute.xlu0 %584
        %586 = vset.pattern.permute.xlu0 1
        %587 = vperm.xlu0 %586, %v344
        %v588 = vpop.permute.xlu0 %587
        %589 = vset.pattern.permute.xlu0 1
        %590 = vperm.xlu0 %589, %v345
        %v591 = vpop.permute.xlu0 %590
        %592 = vset.pattern.permute.xlu0 1
        %593 = vperm.xlu0 %592, %v346
        %v594 = vpop.permute.xlu0 %593
        %595 = vset.pattern.permute.xlu0 1
        %596 = vperm.xlu0 %595, %v347
        %v597 = vpop.permute.xlu0 %596
        %598 = vset.pattern.permute.xlu0 1
        %599 = vperm.xlu0 %598, %v348
        %v600 = vpop.permute.xlu0 %599
        %601 = vset.pattern.permute.xlu0 1
        %602 = vperm.xlu0 %601, %v349
        %v603 = vpop.permute.xlu0 %602
        %604 = vset.pattern.permute.xlu0 1
        %605 = vperm.xlu0 %604, %v350
        %v606 = vpop.permute.xlu0 %605
        %607 = vset.pattern.permute.xlu0 1
        %608 = vperm.xlu0 %607, %v351
        %v609 = vpop.permute.xlu0 %608
        %610 = vset.pattern.permute.xlu0 1
        %611 = vperm.xlu0 %610, %v352
        %v612 = vpop.permute.xlu0 %611
        %613 = vset.pattern.permute.xlu0 1
        %614 = vperm.xlu0 %613, %v353
        %v615 = vpop.permute.xlu0 %614
        %616 = vset.pattern.permute.xlu0 1
        %617 = vperm.xlu0 %616, %v354
        %v618 = vpop.permute.xlu0 %617
        %619 = vset.pattern.permute.xlu0 1
        %620 = vperm.xlu0 %619, %v355
        %v621 = vpop.permute.xlu0 %620
        %622 = vset.pattern.permute.xlu0 1
        %623 = vperm.xlu0 %622, %v356
        %v624 = vpop.permute.xlu0 %623
        %625 = vset.pattern.permute.xlu0 1
        %626 = vperm.xlu0 %625, %v357
        %v627 = vpop.permute.xlu0 %626
        %628 = vset.pattern.permute.xlu0 1
        %629 = vperm.xlu0 %628, %v358
        %v630 = vpop.permute.xlu0 %629
        %631 = vset.pattern.permute.xlu0 1
        %632 = vperm.xlu0 %631, %v359
        %v633 = vpop.permute.xlu0 %632
        %634 = vset.pattern.permute.xlu0 1
        %635 = vperm.xlu0 %634, %v360
        %v636 = vpop.permute.xlu0 %635
        %637 = vset.pattern.permute.xlu0 1
        %638 = vperm.xlu0 %637, %v361
        %v639 = vpop.permute.xlu0 %638
        %640 = vset.pattern.permute.xlu0 1
        %641 = vperm.xlu0 %640, %v362
        %v642 = vpop.permute.xlu0 %641
        %643 = vset.pattern.permute.xlu0 1
        %644 = vperm.xlu0 %643, %v363
        %v645 = vpop.permute.xlu0 %644
        %646 = vset.pattern.permute.xlu0 1
        %647 = vperm.xlu0 %646, %v364
        %v648 = vpop.permute.xlu0 %647
        %649 = vset.pattern.permute.xlu0 1
        %650 = vperm.xlu0 %649, %v365
        %v651 = vpop.permute.xlu0 %650
        %652 = vset.pattern.permute.xlu0 1
        %653 = vperm.xlu0 %652, %v366
        %v654 = vpop.permute.xlu0 %653
        %655 = vset.pattern.permute.xlu0 1
        %656 = vperm.xlu0 %655, %v367
        %v657 = vpop.permute.xlu0 %656
        %vm658 = vcmp.eq.s32.totalorder %v564, %v369
        %vm659 = vcmp.eq.s32.totalorder %v567, %v369
        %vm660 = vcmp.eq.s32.totalorder %v570, %v369
        %vm661 = vcmp.eq.s32.totalorder %v573, %v369
        %vm662 = vcmp.eq.s32.totalorder %v576, %v369
        %vm663 = vcmp.eq.s32.totalorder %v579, %v369
        %vm664 = vcmp.eq.s32.totalorder %v582, %v369
        %vm665 = vcmp.eq.s32.totalorder %v585, %v369
        %vm666 = vcmp.eq.s32.totalorder %v588, %v369
        %vm667 = vcmp.eq.s32.totalorder %v591, %v369
        %vm668 = vcmp.eq.s32.totalorder %v594, %v369
        %vm669 = vcmp.eq.s32.totalorder %v597, %v369
        %vm670 = vcmp.eq.s32.totalorder %v600, %v369
        %vm671 = vcmp.eq.s32.totalorder %v603, %v369
        %vm672 = vcmp.eq.s32.totalorder %v606, %v369
        %vm673 = vcmp.eq.s32.totalorder %v609, %v369
        %vm674 = vcmp.eq.s32.totalorder %v612, %v369
        %vm675 = vcmp.eq.s32.totalorder %v615, %v369
        %vm676 = vcmp.eq.s32.totalorder %v618, %v369
        %vm677 = vcmp.eq.s32.totalorder %v621, %v369
        %vm678 = vcmp.eq.s32.totalorder %v624, %v369
        %vm679 = vcmp.eq.s32.totalorder %v627, %v369
        %vm680 = vcmp.eq.s32.totalorder %v630, %v369
        %vm681 = vcmp.eq.s32.totalorder %v633, %v369
        %vm682 = vcmp.eq.s32.totalorder %v636, %v369
        %vm683 = vcmp.eq.s32.totalorder %v639, %v369
        %vm684 = vcmp.eq.s32.totalorder %v642, %v369
        %vm685 = vcmp.eq.s32.totalorder %v645, %v369
        %vm686 = vcmp.eq.s32.totalorder %v648, %v369
        %vm687 = vcmp.eq.s32.totalorder %v651, %v369
        %vm688 = vcmp.eq.s32.totalorder %v654, %v369
        %vm689 = vcmp.eq.s32.totalorder %v657, %v369
        %v690 = vsel %vm658, 1, 0
        %v691 = vsel %vm659, 1, 0
        %v692 = vsel %vm660, 1, 0
        %v693 = vsel %vm661, 1, 0
        %v694 = vsel %vm662, 1, 0
        %v695 = vsel %vm663, 1, 0
        %v696 = vsel %vm664, 1, 0
        %v697 = vsel %vm665, 1, 0
        %v698 = vsel %vm666, 1, 0
        %v699 = vsel %vm667, 1, 0
        %v700 = vsel %vm668, 1, 0
        %v701 = vsel %vm669, 1, 0
        %v702 = vsel %vm670, 1, 0
        %v703 = vsel %vm671, 1, 0
        %v704 = vsel %vm672, 1, 0
        %v705 = vsel %vm673, 1, 0
        %v706 = vsel %vm674, 1, 0
        %v707 = vsel %vm675, 1, 0
        %v708 = vsel %vm676, 1, 0
        %v709 = vsel %vm677, 1, 0
        %v710 = vsel %vm678, 1, 0
        %v711 = vsel %vm679, 1, 0
        %v712 = vsel %vm680, 1, 0
        %v713 = vsel %vm681, 1, 0
        %v714 = vsel %vm682, 1, 0
        %v715 = vsel %vm683, 1, 0
        %v716 = vsel %vm684, 1, 0
        %v717 = vsel %vm685, 1, 0
        %v718 = vsel %vm686, 1, 0
        %v719 = vsel %vm687, 1, 0
        %v720 = vsel %vm688, 1, 0
        %v721 = vsel %vm689, 1, 0
        %v722 = vcvt.s32.f32 %v690
        %v723 = vcvt.s32.f32 %v691
        %v724 = vcvt.s32.f32 %v692
        %v725 = vcvt.s32.f32 %v693
        %v726 = vcvt.s32.f32 %v694
        %v727 = vcvt.s32.f32 %v695
        %v728 = vcvt.s32.f32 %v696
        %v729 = vcvt.s32.f32 %v697
        %v730 = vcvt.s32.f32 %v698
        %v731 = vcvt.s32.f32 %v699
        %v732 = vcvt.s32.f32 %v700
        %v733 = vcvt.s32.f32 %v701
        %v734 = vcvt.s32.f32 %v702
        %v735 = vcvt.s32.f32 %v703
        %v736 = vcvt.s32.f32 %v704
        %v737 = vcvt.s32.f32 %v705
        %v738 = vcvt.s32.f32 %v706
        %v739 = vcvt.s32.f32 %v707
        %v740 = vcvt.s32.f32 %v708
        %v741 = vcvt.s32.f32 %v709
        %v742 = vcvt.s32.f32 %v710
        %v743 = vcvt.s32.f32 %v711
        %v744 = vcvt.s32.f32 %v712
        %v745 = vcvt.s32.f32 %v713
        %v746 = vcvt.s32.f32 %v714
        %v747 = vcvt.s32.f32 %v715
        %v748 = vcvt.s32.f32 %v716
        %v749 = vcvt.s32.f32 %v717
        %v750 = vcvt.s32.f32 %v718
        %v751 = vcvt.s32.f32 %v719
        %v752 = vcvt.s32.f32 %v720
        %v753 = vcvt.s32.f32 %v721
        %786 = vrot.lane.b32.xlu0 %v722, 8
        %v787 = vpop.permute.xlu0 %786
        %788 = vrot.lane.b32.xlu0 %v723, 8
        %v789 = vpop.permute.xlu0 %788
        %790 = vrot.lane.b32.xlu0 %v724, 8
        %v791 = vpop.permute.xlu0 %790
        %792 = vrot.lane.b32.xlu0 %v725, 8
        %v793 = vpop.permute.xlu0 %792
        %794 = vrot.lane.b32.xlu0 %v726, 8
        %v795 = vpop.permute.xlu0 %794
        %796 = vrot.lane.b32.xlu0 %v727, 8
        %v797 = vpop.permute.xlu0 %796
        %798 = vrot.lane.b32.xlu0 %v728, 8
        %v799 = vpop.permute.xlu0 %798
        %800 = vrot.lane.b32.xlu0 %v729, 8
        %v801 = vpop.permute.xlu0 %800
        %802 = vrot.lane.b32.xlu0 %v730, 8
        %v803 = vpop.permute.xlu0 %802
        %804 = vrot.lane.b32.xlu0 %v731, 8
        %v805 = vpop.permute.xlu0 %804
        %806 = vrot.lane.b32.xlu0 %v732, 8
        %v807 = vpop.permute.xlu0 %806
        %808 = vrot.lane.b32.xlu0 %v733, 8
        %v809 = vpop.permute.xlu0 %808
        %810 = vrot.lane.b32.xlu0 %v734, 8
        %v811 = vpop.permute.xlu0 %810
        %812 = vrot.lane.b32.xlu0 %v735, 8
        %v813 = vpop.permute.xlu0 %812
        %814 = vrot.lane.b32.xlu0 %v736, 8
        %v815 = vpop.permute.xlu0 %814
        %816 = vrot.lane.b32.xlu0 %v737, 8
        %v817 = vpop.permute.xlu0 %816
        %818 = vrot.lane.b32.xlu0 %v738, 8
        %v819 = vpop.permute.xlu0 %818
        %820 = vrot.lane.b32.xlu0 %v739, 8
        %v821 = vpop.permute.xlu0 %820
        %822 = vrot.lane.b32.xlu0 %v740, 8
        %v823 = vpop.permute.xlu0 %822
        %824 = vrot.lane.b32.xlu0 %v741, 8
        %v825 = vpop.permute.xlu0 %824
        %826 = vrot.lane.b32.xlu0 %v742, 8
        %v827 = vpop.permute.xlu0 %826
        %828 = vrot.lane.b32.xlu0 %v743, 8
        %v829 = vpop.permute.xlu0 %828
        %830 = vrot.lane.b32.xlu0 %v744, 8
        %v831 = vpop.permute.xlu0 %830
        %832 = vrot.lane.b32.xlu0 %v745, 8
        %v833 = vpop.permute.xlu0 %832
        %834 = vrot.lane.b32.xlu0 %v746, 8
        %v835 = vpop.permute.xlu0 %834
        %836 = vrot.lane.b32.xlu0 %v747, 8
        %v837 = vpop.permute.xlu0 %836
        %838 = vrot.lane.b32.xlu0 %v748, 8
        %v839 = vpop.permute.xlu0 %838
        %840 = vrot.lane.b32.xlu0 %v749, 8
        %v841 = vpop.permute.xlu0 %840
        %842 = vrot.lane.b32.xlu0 %v750, 8
        %v843 = vpop.permute.xlu0 %842
        %844 = vrot.lane.b32.xlu0 %v751, 8
        %v845 = vpop.permute.xlu0 %844
        %846 = vrot.lane.b32.xlu0 %v752, 8
        %v847 = vpop.permute.xlu0 %846
        %848 = vrot.lane.b32.xlu0 %v753, 8
        %v849 = vpop.permute.xlu0 %848
        %vm882 = vcmask 64512
        %v883 = vsel %vm882, %v530, %v787
        %v884 = vsel %vm882, %v531, %v789
        %v885 = vsel %vm882, %v532, %v791
        %v886 = vsel %vm882, %v533, %v793
        %v887 = vsel %vm882, %v534, %v795
        %v888 = vsel %vm882, %v535, %v797
        %v889 = vsel %vm882, %v536, %v799
        %v890 = vsel %vm882, %v537, %v801
        %v891 = vsel %vm882, %v538, %v803
        %v892 = vsel %vm882, %v539, %v805
        %v893 = vsel %vm882, %v540, %v807
        %v894 = vsel %vm882, %v541, %v809
        %v895 = vsel %vm882, %v542, %v811
        %v896 = vsel %vm882, %v543, %v813
        %v897 = vsel %vm882, %v544, %v815
        %v898 = vsel %vm882, %v545, %v817
        %v899 = vsel %vm882, %v546, %v819
        %v900 = vsel %vm882, %v547, %v821
        %v901 = vsel %vm882, %v548, %v823
        %v902 = vsel %vm882, %v549, %v825
        %v903 = vsel %vm882, %v550, %v827
        %v904 = vsel %vm882, %v551, %v829
        %v905 = vsel %vm882, %v552, %v831
        %v906 = vsel %vm882, %v553, %v833
        %v907 = vsel %vm882, %v554, %v835
        %v908 = vsel %vm882, %v555, %v837
        %v909 = vsel %vm882, %v556, %v839
        %v910 = vsel %vm882, %v557, %v841
        %v911 = vsel %vm882, %v558, %v843
        %v912 = vsel %vm882, %v559, %v845
        %v913 = vsel %vm882, %v560, %v847
        %v914 = vsel %vm882, %v561, %v849
        %s915 = scalar_lea.vmem [#allocation2], 24
        %916 = vst.msk [vmem:[%s915 + $0x1] sm:$0xff] %vm224, %v883
        %917 = vst.msk [vmem:[%s915 + $0x9] sm:$0xff] %vm224, %v884
        %918 = vst.msk [vmem:[%s915 + $0x19] sm:$0xff] %vm224, %v885
        %919 = vst.msk [vmem:[%s915 + $0x21] sm:$0xff] %vm224, %v886
        %920 = vst.msk [vmem:[%s915 + $0x31] sm:$0xff] %vm224, %v887
        %921 = vst.msk [vmem:[%s915 + $0x39] sm:$0xff] %vm224, %v888
        %922 = vst.msk [vmem:[%s915 + $0x49] sm:$0xff] %vm224, %v889
        %923 = vst.msk [vmem:[%s915 + $0x51] sm:$0xff] %vm224, %v890
        %924 = vst.msk [vmem:[%s915 + $0x61] sm:$0xff] %vm224, %v891
        %925 = vst.msk [vmem:[%s915 + $0x69] sm:$0xff] %vm224, %v892
        %926 = vst.msk [vmem:[%s915 + $0x79] sm:$0xff] %vm224, %v893
        %927 = vst.msk [vmem:[%s915 + $0x81] sm:$0xff] %vm224, %v894
        %928 = vst.msk [vmem:[%s915 + $0x91] sm:$0xff] %vm224, %v895
        %929 = vst.msk [vmem:[%s915 + $0x99] sm:$0xff] %vm224, %v896
        %930 = vst.msk [vmem:[%s915 + $0xa9] sm:$0xff] %vm224, %v897
        %931 = vst.msk [vmem:[%s915 + $0xb1] sm:$0xff] %vm224, %v898
        %932 = vst.msk [vmem:[%s915 + $0xc1] sm:$0xff] %vm224, %v899
        %933 = vst.msk [vmem:[%s915 + $0xc9] sm:$0xff] %vm224, %v900
        %934 = vst.msk [vmem:[%s915 + $0xd9] sm:$0xff] %vm224, %v901
        %935 = vst.msk [vmem:[%s915 + $0xe1] sm:$0xff] %vm224, %v902
        %936 = vst.msk [vmem:[%s915 + $0xf1] sm:$0xff] %vm224, %v903
        %937 = vst.msk [vmem:[%s915 + $0xf9] sm:$0xff] %vm224, %v904
        %938 = vst.msk [vmem:[%s915 + $0x109] sm:$0xff] %vm224, %v905
        %939 = vst.msk [vmem:[%s915 + $0x111] sm:$0xff] %vm224, %v906
        %940 = vst.msk [vmem:[%s915 + $0x121] sm:$0xff] %vm224, %v907
        %941 = vst.msk [vmem:[%s915 + $0x129] sm:$0xff] %vm224, %v908
        %942 = vst.msk [vmem:[%s915 + $0x139] sm:$0xff] %vm224, %v909
        %943 = vst.msk [vmem:[%s915 + $0x141] sm:$0xff] %vm224, %v910
        %944 = vst.msk [vmem:[%s915 + $0x151] sm:$0xff] %vm224, %v911
        %945 = vst.msk [vmem:[%s915 + $0x159] sm:$0xff] %vm224, %v912
        %946 = vst.msk [vmem:[%s915 + $0x169] sm:$0xff] %vm224, %v913
        %947 = vst.msk [vmem:[%s915 + $0x171] sm:$0xff] %vm224, %v914
        %v948 = vld [vmem:[#allocation2] sm:$0xff]
        %v949 = vld [vmem:[#allocation2 + $0x8] sm:$0xff]
        %v950 = vld [vmem:[#allocation2 + $0x18] sm:$0xff]
        %v951 = vld [vmem:[#allocation2 + $0x20] sm:$0xff]
        %v952 = vld [vmem:[#allocation2 + $0x30] sm:$0xff]
        %v953 = vld [vmem:[#allocation2 + $0x38] sm:$0xff]
        %v954 = vld [vmem:[#allocation2 + $0x48] sm:$0xff]
        %v955 = vld [vmem:[#allocation2 + $0x50] sm:$0xff]
        %v956 = vld [vmem:[#allocation2 + $0x60] sm:$0xff]
        %v957 = vld [vmem:[#allocation2 + $0x68] sm:$0xff]
        %v958 = vld [vmem:[#allocation2 + $0x78] sm:$0xff]
        %v959 = vld [vmem:[#allocation2 + $0x80] sm:$0xff]
        %v960 = vld [vmem:[#allocation2 + $0x90] sm:$0xff]
        %v961 = vld [vmem:[#allocation2 + $0x98] sm:$0xff]
        %v962 = vld [vmem:[#allocation2 + $0xa8] sm:$0xff]
        %v963 = vld [vmem:[#allocation2 + $0xb0] sm:$0xff]
        %v964 = vld [vmem:[#allocation2 + $0xc0] sm:$0xff]
        %v965 = vld [vmem:[#allocation2 + $0xc8] sm:$0xff]
        %v966 = vld [vmem:[#allocation2 + $0xd8] sm:$0xff]
        %v967 = vld [vmem:[#allocation2 + $0xe0] sm:$0xff]
        %v968 = vld [vmem:[#allocation2 + $0xf0] sm:$0xff]
        %v969 = vld [vmem:[#allocation2 + $0xf8] sm:$0xff]
        %v970 = vld [vmem:[#allocation2 + $0x108] sm:$0xff]
        %v971 = vld [vmem:[#allocation2 + $0x110] sm:$0xff]
        %v972 = vld [vmem:[#allocation2 + $0x120] sm:$0xff]
        %v973 = vld [vmem:[#allocation2 + $0x128] sm:$0xff]
        %v974 = vld [vmem:[#allocation2 + $0x138] sm:$0xff]
        %v975 = vld [vmem:[#allocation2 + $0x140] sm:$0xff]
        %v976 = vld [vmem:[#allocation2 + $0x150] sm:$0xff]
        %v977 = vld [vmem:[#allocation2 + $0x158] sm:$0xff]
        %v978 = vld [vmem:[#allocation2 + $0x168] sm:$0xff]
        %v979 = vld [vmem:[#allocation2 + $0x170] sm:$0xff]
        %v980 = vld [vmem:[#allocation2 + $0x1] sm:$0xff]
        %v981 = vld [vmem:[#allocation2 + $0x9] sm:$0xff]
        %v982 = vld [vmem:[#allocation2 + $0x19] sm:$0xff]
        %v983 = vld [vmem:[#allocation2 + $0x21] sm:$0xff]
        %v984 = vld [vmem:[#allocation2 + $0x31] sm:$0xff]
        %v985 = vld [vmem:[#allocation2 + $0x39] sm:$0xff]
        %v986 = vld [vmem:[#allocation2 + $0x49] sm:$0xff]
        %v987 = vld [vmem:[#allocation2 + $0x51] sm:$0xff]
        %v988 = vld [vmem:[#allocation2 + $0x61] sm:$0xff]
        %v989 = vld [vmem:[#allocation2 + $0x69] sm:$0xff]
        %v990 = vld [vmem:[#allocation2 + $0x79] sm:$0xff]
        %v991 = vld [vmem:[#allocation2 + $0x81] sm:$0xff]
        %v992 = vld [vmem:[#allocation2 + $0x91] sm:$0xff]
        %v993 = vld [vmem:[#allocation2 + $0x99] sm:$0xff]
        %v994 = vld [vmem:[#allocation2 + $0xa9] sm:$0xff]
        %v995 = vld [vmem:[#allocation2 + $0xb1] sm:$0xff]
        %v996 = vld [vmem:[#allocation2 + $0xc1] sm:$0xff]
        %v997 = vld [vmem:[#allocation2 + $0xc9] sm:$0xff]
        %v998 = vld [vmem:[#allocation2 + $0xd9] sm:$0xff]
        %v999 = vld [vmem:[#allocation2 + $0xe1] sm:$0xff]
        %v1000 = vld [vmem:[#allocation2 + $0xf1] sm:$0xff]
        %v1001 = vld [vmem:[#allocation2 + $0xf9] sm:$0xff]
        %v1002 = vld [vmem:[#allocation2 + $0x109] sm:$0xff]
        %v1003 = vld [vmem:[#allocation2 + $0x111] sm:$0xff]
        %v1004 = vld [vmem:[#allocation2 + $0x121] sm:$0xff]
        %v1005 = vld [vmem:[#allocation2 + $0x129] sm:$0xff]
        %v1006 = vld [vmem:[#allocation2 + $0x139] sm:$0xff]
        %v1007 = vld [vmem:[#allocation2 + $0x141] sm:$0xff]
        %v1008 = vld [vmem:[#allocation2 + $0x151] sm:$0xff]
        %v1009 = vld [vmem:[#allocation2 + $0x159] sm:$0xff]
        %v1010 = vld [vmem:[#allocation2 + $0x169] sm:$0xff]
        %v1011 = vld [vmem:[#allocation2 + $0x171] sm:$0xff]
        %v1012 = vld [vmem:[#allocation2 + $0x2] sm:$0xff]
        %v1013 = vld [vmem:[#allocation2 + $0xa] sm:$0xff]
        %v1014 = vld [vmem:[#allocation2 + $0x1a] sm:$0xff]
        %v1015 = vld [vmem:[#allocation2 + $0x22] sm:$0xff]
        %v1016 = vld [vmem:[#allocation2 + $0x32] sm:$0xff]
        %v1017 = vld [vmem:[#allocation2 + $0x3a] sm:$0xff]
        %v1018 = vld [vmem:[#allocation2 + $0x4a] sm:$0xff]
        %v1019 = vld [vmem:[#allocation2 + $0x52] sm:$0xff]
        %v1020 = vld [vmem:[#allocation2 + $0x62] sm:$0xff]
        %v1021 = vld [vmem:[#allocation2 + $0x6a] sm:$0xff]
        %v1022 = vld [vmem:[#allocation2 + $0x7a] sm:$0xff]
        %v1023 = vld [vmem:[#allocation2 + $0x82] sm:$0xff]
        %v1024 = vld [vmem:[#allocation2 + $0x92] sm:$0xff]
        %v1025 = vld [vmem:[#allocation2 + $0x9a] sm:$0xff]
        %v1026 = vld [vmem:[#allocation2 + $0xaa] sm:$0xff]
        %v1027 = vld [vmem:[#allocation2 + $0xb2] sm:$0xff]
        %v1028 = vld [vmem:[#allocation2 + $0xc2] sm:$0xff]
        %v1029 = vld [vmem:[#allocation2 + $0xca] sm:$0xff]
        %v1030 = vld [vmem:[#allocation2 + $0xda] sm:$0xff]
        %v1031 = vld [vmem:[#allocation2 + $0xe2] sm:$0xff]
        %v1032 = vld [vmem:[#allocation2 + $0xf2] sm:$0xff]
        %v1033 = vld [vmem:[#allocation2 + $0xfa] sm:$0xff]
        %v1034 = vld [vmem:[#allocation2 + $0x10a] sm:$0xff]
        %v1035 = vld [vmem:[#allocation2 + $0x112] sm:$0xff]
        %v1036 = vld [vmem:[#allocation2 + $0x122] sm:$0xff]
        %v1037 = vld [vmem:[#allocation2 + $0x12a] sm:$0xff]
        %v1038 = vld [vmem:[#allocation2 + $0x13a] sm:$0xff]
        %v1039 = vld [vmem:[#allocation2 + $0x142] sm:$0xff]
        %v1040 = vld [vmem:[#allocation2 + $0x152] sm:$0xff]
        %v1041 = vld [vmem:[#allocation2 + $0x15a] sm:$0xff]
        %v1042 = vld [vmem:[#allocation2 + $0x16a] sm:$0xff]
        %v1043 = vld [vmem:[#allocation2 + $0x172] sm:$0xff]
        %v1044 = vld [vmem:[%s915] sm:$0xff]
        %v1045 = vld [vmem:[%s915 + $0x8] sm:$0xff]
        %v1046 = vld [vmem:[%s915 + $0x18] sm:$0xff]
        %v1047 = vld [vmem:[%s915 + $0x20] sm:$0xff]
        %v1048 = vld [vmem:[%s915 + $0x30] sm:$0xff]
        %v1049 = vld [vmem:[%s915 + $0x38] sm:$0xff]
        %v1050 = vld [vmem:[%s915 + $0x48] sm:$0xff]
        %v1051 = vld [vmem:[%s915 + $0x50] sm:$0xff]
        %v1052 = vld [vmem:[%s915 + $0x60] sm:$0xff]
        %v1053 = vld [vmem:[%s915 + $0x68] sm:$0xff]
        %v1054 = vld [vmem:[%s915 + $0x78] sm:$0xff]
        %v1055 = vld [vmem:[%s915 + $0x80] sm:$0xff]
        %v1056 = vld [vmem:[%s915 + $0x90] sm:$0xff]
        %v1057 = vld [vmem:[%s915 + $0x98] sm:$0xff]
        %v1058 = vld [vmem:[%s915 + $0xa8] sm:$0xff]
        %v1059 = vld [vmem:[%s915 + $0xb0] sm:$0xff]
        %v1060 = vld [vmem:[%s915 + $0xc0] sm:$0xff]
        %v1061 = vld [vmem:[%s915 + $0xc8] sm:$0xff]
        %v1062 = vld [vmem:[%s915 + $0xd8] sm:$0xff]
        %v1063 = vld [vmem:[%s915 + $0xe0] sm:$0xff]
        %v1064 = vld [vmem:[%s915 + $0xf0] sm:$0xff]
        %v1065 = vld [vmem:[%s915 + $0xf8] sm:$0xff]
        %v1066 = vld [vmem:[%s915 + $0x108] sm:$0xff]
        %v1067 = vld [vmem:[%s915 + $0x110] sm:$0xff]
        %v1068 = vld [vmem:[%s915 + $0x120] sm:$0xff]
        %v1069 = vld [vmem:[%s915 + $0x128] sm:$0xff]
        %v1070 = vld [vmem:[%s915 + $0x138] sm:$0xff]
        %v1071 = vld [vmem:[%s915 + $0x140] sm:$0xff]
        %v1072 = vld [vmem:[%s915 + $0x150] sm:$0xff]
        %v1073 = vld [vmem:[%s915 + $0x158] sm:$0xff]
        %v1074 = vld [vmem:[%s915 + $0x168] sm:$0xff]
        %v1075 = vld [vmem:[%s915 + $0x170] sm:$0xff]
        %v1076 = vld [vmem:[%s915 + $0x1] sm:$0xff]
        %v1077 = vld [vmem:[%s915 + $0x9] sm:$0xff]
        %v1078 = vld [vmem:[%s915 + $0x19] sm:$0xff]
        %v1079 = vld [vmem:[%s915 + $0x21] sm:$0xff]
        %v1080 = vld [vmem:[%s915 + $0x31] sm:$0xff]
        %v1081 = vld [vmem:[%s915 + $0x39] sm:$0xff]
        %v1082 = vld [vmem:[%s915 + $0x49] sm:$0xff]
        %v1083 = vld [vmem:[%s915 + $0x51] sm:$0xff]
        %v1084 = vld [vmem:[%s915 + $0x61] sm:$0xff]
        %v1085 = vld [vmem:[%s915 + $0x69] sm:$0xff]
        %v1086 = vld [vmem:[%s915 + $0x79] sm:$0xff]
        %v1087 = vld [vmem:[%s915 + $0x81] sm:$0xff]
        %v1088 = vld [vmem:[%s915 + $0x91] sm:$0xff]
        %v1089 = vld [vmem:[%s915 + $0x99] sm:$0xff]
        %v1090 = vld [vmem:[%s915 + $0xa9] sm:$0xff]
        %v1091 = vld [vmem:[%s915 + $0xb1] sm:$0xff]
        %v1092 = vld [vmem:[%s915 + $0xc1] sm:$0xff]
        %v1093 = vld [vmem:[%s915 + $0xc9] sm:$0xff]
        %v1094 = vld [vmem:[%s915 + $0xd9] sm:$0xff]
        %v1095 = vld [vmem:[%s915 + $0xe1] sm:$0xff]
        %v1096 = vld [vmem:[%s915 + $0xf1] sm:$0xff]
        %v1097 = vld [vmem:[%s915 + $0xf9] sm:$0xff]
        %v1098 = vld [vmem:[%s915 + $0x109] sm:$0xff]
        %v1099 = vld [vmem:[%s915 + $0x111] sm:$0xff]
        %v1100 = vld [vmem:[%s915 + $0x121] sm:$0xff]
        %v1101 = vld [vmem:[%s915 + $0x129] sm:$0xff]
        %v1102 = vld [vmem:[%s915 + $0x139] sm:$0xff]
        %v1103 = vld [vmem:[%s915 + $0x141] sm:$0xff]
        %v1104 = vld [vmem:[%s915 + $0x151] sm:$0xff]
        %v1105 = vld [vmem:[%s915 + $0x159] sm:$0xff]
        %v1106 = vld [vmem:[%s915 + $0x169] sm:$0xff]
        %v1107 = vld [vmem:[%s915 + $0x171] sm:$0xff]
        %v1108 = vld [vmem:[%s915 + $0x2] sm:$0xff]
        %v1109 = vld [vmem:[%s915 + $0xa] sm:$0xff]
        %v1110 = vld [vmem:[%s915 + $0x1a] sm:$0xff]
        %v1111 = vld [vmem:[%s915 + $0x22] sm:$0xff]
        %v1112 = vld [vmem:[%s915 + $0x32] sm:$0xff]
        %v1113 = vld [vmem:[%s915 + $0x3a] sm:$0xff]
        %v1114 = vld [vmem:[%s915 + $0x4a] sm:$0xff]
        %v1115 = vld [vmem:[%s915 + $0x52] sm:$0xff]
        %v1116 = vld [vmem:[%s915 + $0x62] sm:$0xff]
        %v1117 = vld [vmem:[%s915 + $0x6a] sm:$0xff]
        %v1118 = vld [vmem:[%s915 + $0x7a] sm:$0xff]
        %v1119 = vld [vmem:[%s915 + $0x82] sm:$0xff]
        %v1120 = vld [vmem:[%s915 + $0x92] sm:$0xff]
        %v1121 = vld [vmem:[%s915 + $0x9a] sm:$0xff]
        %v1122 = vld [vmem:[%s915 + $0xaa] sm:$0xff]
        %v1123 = vld [vmem:[%s915 + $0xb2] sm:$0xff]
        %v1124 = vld [vmem:[%s915 + $0xc2] sm:$0xff]
        %v1125 = vld [vmem:[%s915 + $0xca] sm:$0xff]
        %v1126 = vld [vmem:[%s915 + $0xda] sm:$0xff]
        %v1127 = vld [vmem:[%s915 + $0xe2] sm:$0xff]
        %v1128 = vld [vmem:[%s915 + $0xf2] sm:$0xff]
        %v1129 = vld [vmem:[%s915 + $0xfa] sm:$0xff]
        %v1130 = vld [vmem:[%s915 + $0x10a] sm:$0xff]
        %v1131 = vld [vmem:[%s915 + $0x112] sm:$0xff]
        %v1132 = vld [vmem:[%s915 + $0x122] sm:$0xff]
        %v1133 = vld [vmem:[%s915 + $0x12a] sm:$0xff]
        %v1134 = vld [vmem:[%s915 + $0x13a] sm:$0xff]
        %v1135 = vld [vmem:[%s915 + $0x142] sm:$0xff]
        %v1136 = vld [vmem:[%s915 + $0x152] sm:$0xff]
        %v1137 = vld [vmem:[%s915 + $0x15a] sm:$0xff]
        %v1138 = vld [vmem:[%s915 + $0x16a] sm:$0xff]
        %v1139 = vld [vmem:[%s915 + $0x172] sm:$0xff]
        %s1140 = scalar_lea.vmem [#allocation2], 48
        %v1141 = vld [vmem:[%s1140] sm:$0xff]
        %v1142 = vld [vmem:[%s1140 + $0x8] sm:$0xff]
        %v1143 = vld [vmem:[%s1140 + $0x18] sm:$0xff]
        %v1144 = vld [vmem:[%s1140 + $0x20] sm:$0xff]
        %v1145 = vld [vmem:[%s1140 + $0x30] sm:$0xff]
        %v1146 = vld [vmem:[%s1140 + $0x38] sm:$0xff]
        %v1147 = vld [vmem:[%s1140 + $0x48] sm:$0xff]
        %v1148 = vld [vmem:[%s1140 + $0x50] sm:$0xff]
        %v1149 = vld [vmem:[%s1140 + $0x60] sm:$0xff]
        %v1150 = vld [vmem:[%s1140 + $0x68] sm:$0xff]
        %v1151 = vld [vmem:[%s1140 + $0x78] sm:$0xff]
        %v1152 = vld [vmem:[%s1140 + $0x80] sm:$0xff]
        %v1153 = vld [vmem:[%s1140 + $0x90] sm:$0xff]
        %v1154 = vld [vmem:[%s1140 + $0x98] sm:$0xff]
        %v1155 = vld [vmem:[%s1140 + $0xa8] sm:$0xff]
        %v1156 = vld [vmem:[%s1140 + $0xb0] sm:$0xff]
        %v1157 = vld [vmem:[%s1140 + $0xc0] sm:$0xff]
        %v1158 = vld [vmem:[%s1140 + $0xc8] sm:$0xff]
        %v1159 = vld [vmem:[%s1140 + $0xd8] sm:$0xff]
        %v1160 = vld [vmem:[%s1140 + $0xe0] sm:$0xff]
        %v1161 = vld [vmem:[%s1140 + $0xf0] sm:$0xff]
        %v1162 = vld [vmem:[%s1140 + $0xf8] sm:$0xff]
        %v1163 = vld [vmem:[%s1140 + $0x108] sm:$0xff]
        %v1164 = vld [vmem:[%s1140 + $0x110] sm:$0xff]
        %v1165 = vld [vmem:[%s1140 + $0x120] sm:$0xff]
        %v1166 = vld [vmem:[%s1140 + $0x128] sm:$0xff]
        %v1167 = vld [vmem:[%s1140 + $0x138] sm:$0xff]
        %v1168 = vld [vmem:[%s1140 + $0x140] sm:$0xff]
        %v1169 = vld [vmem:[%s1140 + $0x150] sm:$0xff]
        %v1170 = vld [vmem:[%s1140 + $0x158] sm:$0xff]
        %v1171 = vld [vmem:[%s1140 + $0x168] sm:$0xff]
        %v1172 = vld [vmem:[%s1140 + $0x170] sm:$0xff]
        %v1173 = vld [vmem:[%s1140 + $0x1] sm:$0xff]
        %v1174 = vld [vmem:[%s1140 + $0x9] sm:$0xff]
        %v1175 = vld [vmem:[%s1140 + $0x19] sm:$0xff]
        %v1176 = vld [vmem:[%s1140 + $0x21] sm:$0xff]
        %v1177 = vld [vmem:[%s1140 + $0x31] sm:$0xff]
        %v1178 = vld [vmem:[%s1140 + $0x39] sm:$0xff]
        %v1179 = vld [vmem:[%s1140 + $0x49] sm:$0xff]
        %v1180 = vld [vmem:[%s1140 + $0x51] sm:$0xff]
        %v1181 = vld [vmem:[%s1140 + $0x61] sm:$0xff]
        %v1182 = vld [vmem:[%s1140 + $0x69] sm:$0xff]
        %v1183 = vld [vmem:[%s1140 + $0x79] sm:$0xff]
        %v1184 = vld [vmem:[%s1140 + $0x81] sm:$0xff]
        %v1185 = vld [vmem:[%s1140 + $0x91] sm:$0xff]
        %v1186 = vld [vmem:[%s1140 + $0x99] sm:$0xff]
        %v1187 = vld [vmem:[%s1140 + $0xa9] sm:$0xff]
        %v1188 = vld [vmem:[%s1140 + $0xb1] sm:$0xff]
        %v1189 = vld [vmem:[%s1140 + $0xc1] sm:$0xff]
        %v1190 = vld [vmem:[%s1140 + $0xc9] sm:$0xff]
        %v1191 = vld [vmem:[%s1140 + $0xd9] sm:$0xff]
        %v1192 = vld [vmem:[%s1140 + $0xe1] sm:$0xff]
        %v1193 = vld [vmem:[%s1140 + $0xf1] sm:$0xff]
        %v1194 = vld [vmem:[%s1140 + $0xf9] sm:$0xff]
        %v1195 = vld [vmem:[%s1140 + $0x109] sm:$0xff]
        %v1196 = vld [vmem:[%s1140 + $0x111] sm:$0xff]
        %v1197 = vld [vmem:[%s1140 + $0x121] sm:$0xff]
        %v1198 = vld [vmem:[%s1140 + $0x129] sm:$0xff]
        %v1199 = vld [vmem:[%s1140 + $0x139] sm:$0xff]
        %v1200 = vld [vmem:[%s1140 + $0x141] sm:$0xff]
        %v1201 = vld [vmem:[%s1140 + $0x151] sm:$0xff]
        %v1202 = vld [vmem:[%s1140 + $0x159] sm:$0xff]
        %v1203 = vld [vmem:[%s1140 + $0x169] sm:$0xff]
        %v1204 = vld [vmem:[%s1140 + $0x171] sm:$0xff]
        %v1205 = vld [vmem:[%s1140 + $0x2] sm:$0xff]
        %v1206 = vld [vmem:[%s1140 + $0xa] sm:$0xff]
        %v1207 = vld [vmem:[%s1140 + $0x1a] sm:$0xff]
        %v1208 = vld [vmem:[%s1140 + $0x22] sm:$0xff]
        %v1209 = vld [vmem:[%s1140 + $0x32] sm:$0xff]
        %v1210 = vld [vmem:[%s1140 + $0x3a] sm:$0xff]
        %v1211 = vld [vmem:[%s1140 + $0x4a] sm:$0xff]
        %v1212 = vld [vmem:[%s1140 + $0x52] sm:$0xff]
        %v1213 = vld [vmem:[%s1140 + $0x62] sm:$0xff]
        %v1214 = vld [vmem:[%s1140 + $0x6a] sm:$0xff]
        %v1215 = vld [vmem:[%s1140 + $0x7a] sm:$0xff]
        %v1216 = vld [vmem:[%s1140 + $0x82] sm:$0xff]
        %v1217 = vld [vmem:[%s1140 + $0x92] sm:$0xff]
        %v1218 = vld [vmem:[%s1140 + $0x9a] sm:$0xff]
        %v1219 = vld [vmem:[%s1140 + $0xaa] sm:$0xff]
        %v1220 = vld [vmem:[%s1140 + $0xb2] sm:$0xff]
        %v1221 = vld [vmem:[%s1140 + $0xc2] sm:$0xff]
        %v1222 = vld [vmem:[%s1140 + $0xca] sm:$0xff]
        %v1223 = vld [vmem:[%s1140 + $0xda] sm:$0xff]
        %v1224 = vld [vmem:[%s1140 + $0xe2] sm:$0xff]
        %v1225 = vld [vmem:[%s1140 + $0xf2] sm:$0xff]
        %v1226 = vld [vmem:[%s1140 + $0xfa] sm:$0xff]
        %v1227 = vld [vmem:[%s1140 + $0x10a] sm:$0xff]
        %v1228 = vld [vmem:[%s1140 + $0x112] sm:$0xff]
        %v1229 = vld [vmem:[%s1140 + $0x122] sm:$0xff]
        %v1230 = vld [vmem:[%s1140 + $0x12a] sm:$0xff]
        %v1231 = vld [vmem:[%s1140 + $0x13a] sm:$0xff]
        %v1232 = vld [vmem:[%s1140 + $0x142] sm:$0xff]
        %v1233 = vld [vmem:[%s1140 + $0x152] sm:$0xff]
        %v1234 = vld [vmem:[%s1140 + $0x15a] sm:$0xff]
        %v1235 = vld [vmem:[%s1140 + $0x16a] sm:$0xff]
        %v1236 = vld [vmem:[%s1140 + $0x172] sm:$0xff]
        %1269 = vrot.lane.b32.xlu0 %v980, 16
        %v1270 = vpop.permute.xlu0 %1269
        %1271 = vrot.lane.b32.xlu0 %v981, 16
        %v1272 = vpop.permute.xlu0 %1271
        %1273 = vrot.lane.b32.xlu0 %v982, 16
        %v1274 = vpop.permute.xlu0 %1273
        %1275 = vrot.lane.b32.xlu0 %v983, 16
        %v1276 = vpop.permute.xlu0 %1275
        %1277 = vrot.lane.b32.xlu0 %v984, 16
        %v1278 = vpop.permute.xlu0 %1277
        %1279 = vrot.lane.b32.xlu0 %v985, 16
        %v1280 = vpop.permute.xlu0 %1279
        %1281 = vrot.lane.b32.xlu0 %v986, 16
        %v1282 = vpop.permute.xlu0 %1281
        %1283 = vrot.lane.b32.xlu0 %v987, 16
        %v1284 = vpop.permute.xlu0 %1283
        %1285 = vrot.lane.b32.xlu0 %v988, 16
        %v1286 = vpop.permute.xlu0 %1285
        %1287 = vrot.lane.b32.xlu0 %v989, 16
        %v1288 = vpop.permute.xlu0 %1287
        %1289 = vrot.lane.b32.xlu0 %v990, 16
        %v1290 = vpop.permute.xlu0 %1289
        %1291 = vrot.lane.b32.xlu0 %v991, 16
        %v1292 = vpop.permute.xlu0 %1291
        %1293 = vrot.lane.b32.xlu0 %v992, 16
        %v1294 = vpop.permute.xlu0 %1293
        %1295 = vrot.lane.b32.xlu0 %v993, 16
        %v1296 = vpop.permute.xlu0 %1295
        %1297 = vrot.lane.b32.xlu0 %v994, 16
        %v1298 = vpop.permute.xlu0 %1297
        %1299 = vrot.lane.b32.xlu0 %v995, 16
        %v1300 = vpop.permute.xlu0 %1299
        %1301 = vrot.lane.b32.xlu0 %v996, 16
        %v1302 = vpop.permute.xlu0 %1301
        %1303 = vrot.lane.b32.xlu0 %v997, 16
        %v1304 = vpop.permute.xlu0 %1303
        %1305 = vrot.lane.b32.xlu0 %v998, 16
        %v1306 = vpop.permute.xlu0 %1305
        %1307 = vrot.lane.b32.xlu0 %v999, 16
        %v1308 = vpop.permute.xlu0 %1307
        %1309 = vrot.lane.b32.xlu0 %v1000, 16
        %v1310 = vpop.permute.xlu0 %1309
        %1311 = vrot.lane.b32.xlu0 %v1001, 16
        %v1312 = vpop.permute.xlu0 %1311
        %1313 = vrot.lane.b32.xlu0 %v1002, 16
        %v1314 = vpop.permute.xlu0 %1313
        %1315 = vrot.lane.b32.xlu0 %v1003, 16
        %v1316 = vpop.permute.xlu0 %1315
        %1317 = vrot.lane.b32.xlu0 %v1004, 16
        %v1318 = vpop.permute.xlu0 %1317
        %1319 = vrot.lane.b32.xlu0 %v1005, 16
        %v1320 = vpop.permute.xlu0 %1319
        %1321 = vrot.lane.b32.xlu0 %v1006, 16
        %v1322 = vpop.permute.xlu0 %1321
        %1323 = vrot.lane.b32.xlu0 %v1007, 16
        %v1324 = vpop.permute.xlu0 %1323
        %1325 = vrot.lane.b32.xlu0 %v1008, 16
        %v1326 = vpop.permute.xlu0 %1325
        %1327 = vrot.lane.b32.xlu0 %v1009, 16
        %v1328 = vpop.permute.xlu0 %1327
        %1329 = vrot.lane.b32.xlu0 %v1010, 16
        %v1330 = vpop.permute.xlu0 %1329
        %1331 = vrot.lane.b32.xlu0 %v1011, 16
        %v1332 = vpop.permute.xlu0 %1331
        %1397 = vrot.lane.b32.xlu0 %v1012, 32
        %v1398 = vpop.permute.xlu0 %1397
        %1399 = vrot.lane.b32.xlu0 %v1013, 32
        %v1400 = vpop.permute.xlu0 %1399
        %1401 = vrot.lane.b32.xlu0 %v1014, 32
        %v1402 = vpop.permute.xlu0 %1401
        %1403 = vrot.lane.b32.xlu0 %v1015, 32
        %v1404 = vpop.permute.xlu0 %1403
        %1405 = vrot.lane.b32.xlu0 %v1016, 32
        %v1406 = vpop.permute.xlu0 %1405
        %1407 = vrot.lane.b32.xlu0 %v1017, 32
        %v1408 = vpop.permute.xlu0 %1407
        %1409 = vrot.lane.b32.xlu0 %v1018, 32
        %v1410 = vpop.permute.xlu0 %1409
        %1411 = vrot.lane.b32.xlu0 %v1019, 32
        %v1412 = vpop.permute.xlu0 %1411
        %1413 = vrot.lane.b32.xlu0 %v1020, 32
        %v1414 = vpop.permute.xlu0 %1413
        %1415 = vrot.lane.b32.xlu0 %v1021, 32
        %v1416 = vpop.permute.xlu0 %1415
        %1417 = vrot.lane.b32.xlu0 %v1022, 32
        %v1418 = vpop.permute.xlu0 %1417
        %1419 = vrot.lane.b32.xlu0 %v1023, 32
        %v1420 = vpop.permute.xlu0 %1419
        %1421 = vrot.lane.b32.xlu0 %v1024, 32
        %v1422 = vpop.permute.xlu0 %1421
        %1423 = vrot.lane.b32.xlu0 %v1025, 32
        %v1424 = vpop.permute.xlu0 %1423
        %1425 = vrot.lane.b32.xlu0 %v1026, 32
        %v1426 = vpop.permute.xlu0 %1425
        %1427 = vrot.lane.b32.xlu0 %v1027, 32
        %v1428 = vpop.permute.xlu0 %1427
        %1429 = vrot.lane.b32.xlu0 %v1028, 32
        %v1430 = vpop.permute.xlu0 %1429
        %1431 = vrot.lane.b32.xlu0 %v1029, 32
        %v1432 = vpop.permute.xlu0 %1431
        %1433 = vrot.lane.b32.xlu0 %v1030, 32
        %v1434 = vpop.permute.xlu0 %1433
        %1435 = vrot.lane.b32.xlu0 %v1031, 32
        %v1436 = vpop.permute.xlu0 %1435
        %1437 = vrot.lane.b32.xlu0 %v1032, 32
        %v1438 = vpop.permute.xlu0 %1437
        %1439 = vrot.lane.b32.xlu0 %v1033, 32
        %v1440 = vpop.permute.xlu0 %1439
        %1441 = vrot.lane.b32.xlu0 %v1034, 32
        %v1442 = vpop.permute.xlu0 %1441
        %1443 = vrot.lane.b32.xlu0 %v1035, 32
        %v1444 = vpop.permute.xlu0 %1443
        %1445 = vrot.lane.b32.xlu0 %v1036, 32
        %v1446 = vpop.permute.xlu0 %1445
        %1447 = vrot.lane.b32.xlu0 %v1037, 32
        %v1448 = vpop.permute.xlu0 %1447
        %1449 = vrot.lane.b32.xlu0 %v1038, 32
        %v1450 = vpop.permute.xlu0 %1449
        %1451 = vrot.lane.b32.xlu0 %v1039, 32
        %v1452 = vpop.permute.xlu0 %1451
        %1453 = vrot.lane.b32.xlu0 %v1040, 32
        %v1454 = vpop.permute.xlu0 %1453
        %1455 = vrot.lane.b32.xlu0 %v1041, 32
        %v1456 = vpop.permute.xlu0 %1455
        %1457 = vrot.lane.b32.xlu0 %v1042, 32
        %v1458 = vpop.permute.xlu0 %1457
        %1459 = vrot.lane.b32.xlu0 %v1043, 32
        %v1460 = vpop.permute.xlu0 %1459
        %1525 = vrot.lane.b32.xlu0 %v1044, 48
        %v1526 = vpop.permute.xlu0 %1525
        %1527 = vrot.lane.b32.xlu0 %v1045, 48
        %v1528 = vpop.permute.xlu0 %1527
        %1529 = vrot.lane.b32.xlu0 %v1046, 48
        %v1530 = vpop.permute.xlu0 %1529
        %1531 = vrot.lane.b32.xlu0 %v1047, 48
        %v1532 = vpop.permute.xlu0 %1531
        %1533 = vrot.lane.b32.xlu0 %v1048, 48
        %v1534 = vpop.permute.xlu0 %1533
        %1535 = vrot.lane.b32.xlu0 %v1049, 48
        %v1536 = vpop.permute.xlu0 %1535
        %1537 = vrot.lane.b32.xlu0 %v1050, 48
        %v1538 = vpop.permute.xlu0 %1537
        %1539 = vrot.lane.b32.xlu0 %v1051, 48
        %v1540 = vpop.permute.xlu0 %1539
        %1541 = vrot.lane.b32.xlu0 %v1052, 48
        %v1542 = vpop.permute.xlu0 %1541
        %1543 = vrot.lane.b32.xlu0 %v1053, 48
        %v1544 = vpop.permute.xlu0 %1543
        %1545 = vrot.lane.b32.xlu0 %v1054, 48
        %v1546 = vpop.permute.xlu0 %1545
        %1547 = vrot.lane.b32.xlu0 %v1055, 48
        %v1548 = vpop.permute.xlu0 %1547
        %1549 = vrot.lane.b32.xlu0 %v1056, 48
        %v1550 = vpop.permute.xlu0 %1549
        %1551 = vrot.lane.b32.xlu0 %v1057, 48
        %v1552 = vpop.permute.xlu0 %1551
        %1553 = vrot.lane.b32.xlu0 %v1058, 48
        %v1554 = vpop.permute.xlu0 %1553
        %1555 = vrot.lane.b32.xlu0 %v1059, 48
        %v1556 = vpop.permute.xlu0 %1555
        %1557 = vrot.lane.b32.xlu0 %v1060, 48
        %v1558 = vpop.permute.xlu0 %1557
        %1559 = vrot.lane.b32.xlu0 %v1061, 48
        %v1560 = vpop.permute.xlu0 %1559
        %1561 = vrot.lane.b32.xlu0 %v1062, 48
        %v1562 = vpop.permute.xlu0 %1561
        %1563 = vrot.lane.b32.xlu0 %v1063, 48
        %v1564 = vpop.permute.xlu0 %1563
        %1565 = vrot.lane.b32.xlu0 %v1064, 48
        %v1566 = vpop.permute.xlu0 %1565
        %1567 = vrot.lane.b32.xlu0 %v1065, 48
        %v1568 = vpop.permute.xlu0 %1567
        %1569 = vrot.lane.b32.xlu0 %v1066, 48
        %v1570 = vpop.permute.xlu0 %1569
        %1571 = vrot.lane.b32.xlu0 %v1067, 48
        %v1572 = vpop.permute.xlu0 %1571
        %1573 = vrot.lane.b32.xlu0 %v1068, 48
        %v1574 = vpop.permute.xlu0 %1573
        %1575 = vrot.lane.b32.xlu0 %v1069, 48
        %v1576 = vpop.permute.xlu0 %1575
        %1577 = vrot.lane.b32.xlu0 %v1070, 48
        %v1578 = vpop.permute.xlu0 %1577
        %1579 = vrot.lane.b32.xlu0 %v1071, 48
        %v1580 = vpop.permute.xlu0 %1579
        %1581 = vrot.lane.b32.xlu0 %v1072, 48
        %v1582 = vpop.permute.xlu0 %1581
        %1583 = vrot.lane.b32.xlu0 %v1073, 48
        %v1584 = vpop.permute.xlu0 %1583
        %1585 = vrot.lane.b32.xlu0 %v1074, 48
        %v1586 = vpop.permute.xlu0 %1585
        %1587 = vrot.lane.b32.xlu0 %v1075, 48
        %v1588 = vpop.permute.xlu0 %1587
        %1653 = vrot.lane.b32.xlu0 %v1076, 64
        %v1654 = vpop.permute.xlu0 %1653
        %1655 = vrot.lane.b32.xlu0 %v1077, 64
        %v1656 = vpop.permute.xlu0 %1655
        %1657 = vrot.lane.b32.xlu0 %v1078, 64
        %v1658 = vpop.permute.xlu0 %1657
        %1659 = vrot.lane.b32.xlu0 %v1079, 64
        %v1660 = vpop.permute.xlu0 %1659
        %1661 = vrot.lane.b32.xlu0 %v1080, 64
        %v1662 = vpop.permute.xlu0 %1661
        %1663 = vrot.lane.b32.xlu0 %v1081, 64
        %v1664 = vpop.permute.xlu0 %1663
        %1665 = vrot.lane.b32.xlu0 %v1082, 64
        %v1666 = vpop.permute.xlu0 %1665
        %1667 = vrot.lane.b32.xlu0 %v1083, 64
        %v1668 = vpop.permute.xlu0 %1667
        %1669 = vrot.lane.b32.xlu0 %v1084, 64
        %v1670 = vpop.permute.xlu0 %1669
        %1671 = vrot.lane.b32.xlu0 %v1085, 64
        %v1672 = vpop.permute.xlu0 %1671
        %1673 = vrot.lane.b32.xlu0 %v1086, 64
        %v1674 = vpop.permute.xlu0 %1673
        %1675 = vrot.lane.b32.xlu0 %v1087, 64
        %v1676 = vpop.permute.xlu0 %1675
        %1677 = vrot.lane.b32.xlu0 %v1088, 64
        %v1678 = vpop.permute.xlu0 %1677
        %1679 = vrot.lane.b32.xlu0 %v1089, 64
        %v1680 = vpop.permute.xlu0 %1679
        %1681 = vrot.lane.b32.xlu0 %v1090, 64
        %v1682 = vpop.permute.xlu0 %1681
        %1683 = vrot.lane.b32.xlu0 %v1091, 64
        %v1684 = vpop.permute.xlu0 %1683
        %1685 = vrot.lane.b32.xlu0 %v1092, 64
        %v1686 = vpop.permute.xlu0 %1685
        %1687 = vrot.lane.b32.xlu0 %v1093, 64
        %v1688 = vpop.permute.xlu0 %1687
        %1689 = vrot.lane.b32.xlu0 %v1094, 64
        %v1690 = vpop.permute.xlu0 %1689
        %1691 = vrot.lane.b32.xlu0 %v1095, 64
        %v1692 = vpop.permute.xlu0 %1691
        %1693 = vrot.lane.b32.xlu0 %v1096, 64
        %v1694 = vpop.permute.xlu0 %1693
        %1695 = vrot.lane.b32.xlu0 %v1097, 64
        %v1696 = vpop.permute.xlu0 %1695
        %1697 = vrot.lane.b32.xlu0 %v1098, 64
        %v1698 = vpop.permute.xlu0 %1697
        %1699 = vrot.lane.b32.xlu0 %v1099, 64
        %v1700 = vpop.permute.xlu0 %1699
        %1701 = vrot.lane.b32.xlu0 %v1100, 64
        %v1702 = vpop.permute.xlu0 %1701
        %1703 = vrot.lane.b32.xlu0 %v1101, 64
        %v1704 = vpop.permute.xlu0 %1703
        %1705 = vrot.lane.b32.xlu0 %v1102, 64
        %v1706 = vpop.permute.xlu0 %1705
        %1707 = vrot.lane.b32.xlu0 %v1103, 64
        %v1708 = vpop.permute.xlu0 %1707
        %1709 = vrot.lane.b32.xlu0 %v1104, 64
        %v1710 = vpop.permute.xlu0 %1709
        %1711 = vrot.lane.b32.xlu0 %v1105, 64
        %v1712 = vpop.permute.xlu0 %1711
        %1713 = vrot.lane.b32.xlu0 %v1106, 64
        %v1714 = vpop.permute.xlu0 %1713
        %1715 = vrot.lane.b32.xlu0 %v1107, 64
        %v1716 = vpop.permute.xlu0 %1715
        %1781 = vrot.lane.b32.xlu0 %v1108, 80
        %v1782 = vpop.permute.xlu0 %1781
        %1783 = vrot.lane.b32.xlu0 %v1109, 80
        %v1784 = vpop.permute.xlu0 %1783
        %1785 = vrot.lane.b32.xlu0 %v1110, 80
        %v1786 = vpop.permute.xlu0 %1785
        %1787 = vrot.lane.b32.xlu0 %v1111, 80
        %v1788 = vpop.permute.xlu0 %1787
        %1789 = vrot.lane.b32.xlu0 %v1112, 80
        %v1790 = vpop.permute.xlu0 %1789
        %1791 = vrot.lane.b32.xlu0 %v1113, 80
        %v1792 = vpop.permute.xlu0 %1791
        %1793 = vrot.lane.b32.xlu0 %v1114, 80
        %v1794 = vpop.permute.xlu0 %1793
        %1795 = vrot.lane.b32.xlu0 %v1115, 80
        %v1796 = vpop.permute.xlu0 %1795
        %1797 = vrot.lane.b32.xlu0 %v1116, 80
        %v1798 = vpop.permute.xlu0 %1797
        %1799 = vrot.lane.b32.xlu0 %v1117, 80
        %v1800 = vpop.permute.xlu0 %1799
        %1801 = vrot.lane.b32.xlu0 %v1118, 80
        %v1802 = vpop.permute.xlu0 %1801
        %1803 = vrot.lane.b32.xlu0 %v1119, 80
        %v1804 = vpop.permute.xlu0 %1803
        %1805 = vrot.lane.b32.xlu0 %v1120, 80
        %v1806 = vpop.permute.xlu0 %1805
        %1807 = vrot.lane.b32.xlu0 %v1121, 80
        %v1808 = vpop.permute.xlu0 %1807
        %1809 = vrot.lane.b32.xlu0 %v1122, 80
        %v1810 = vpop.permute.xlu0 %1809
        %1811 = vrot.lane.b32.xlu0 %v1123, 80
        %v1812 = vpop.permute.xlu0 %1811
        %1813 = vrot.lane.b32.xlu0 %v1124, 80
        %v1814 = vpop.permute.xlu0 %1813
        %1815 = vrot.lane.b32.xlu0 %v1125, 80
        %v1816 = vpop.permute.xlu0 %1815
        %1817 = vrot.lane.b32.xlu0 %v1126, 80
        %v1818 = vpop.permute.xlu0 %1817
        %1819 = vrot.lane.b32.xlu0 %v1127, 80
        %v1820 = vpop.permute.xlu0 %1819
        %1821 = vrot.lane.b32.xlu0 %v1128, 80
        %v1822 = vpop.permute.xlu0 %1821
        %1823 = vrot.lane.b32.xlu0 %v1129, 80
        %v1824 = vpop.permute.xlu0 %1823
        %1825 = vrot.lane.b32.xlu0 %v1130, 80
        %v1826 = vpop.permute.xlu0 %1825
        %1827 = vrot.lane.b32.xlu0 %v1131, 80
        %v1828 = vpop.permute.xlu0 %1827
        %1829 = vrot.lane.b32.xlu0 %v1132, 80
        %v1830 = vpop.permute.xlu0 %1829
        %1831 = vrot.lane.b32.xlu0 %v1133, 80
        %v1832 = vpop.permute.xlu0 %1831
        %1833 = vrot.lane.b32.xlu0 %v1134, 80
        %v1834 = vpop.permute.xlu0 %1833
        %1835 = vrot.lane.b32.xlu0 %v1135, 80
        %v1836 = vpop.permute.xlu0 %1835
        %1837 = vrot.lane.b32.xlu0 %v1136, 80
        %v1838 = vpop.permute.xlu0 %1837
        %1839 = vrot.lane.b32.xlu0 %v1137, 80
        %v1840 = vpop.permute.xlu0 %1839
        %1841 = vrot.lane.b32.xlu0 %v1138, 80
        %v1842 = vpop.permute.xlu0 %1841
        %1843 = vrot.lane.b32.xlu0 %v1139, 80
        %v1844 = vpop.permute.xlu0 %1843
        %1909 = vrot.lane.b32.xlu0 %v1141, 96
        %v1910 = vpop.permute.xlu0 %1909
        %1911 = vrot.lane.b32.xlu0 %v1142, 96
        %v1912 = vpop.permute.xlu0 %1911
        %1913 = vrot.lane.b32.xlu0 %v1143, 96
        %v1914 = vpop.permute.xlu0 %1913
        %1915 = vrot.lane.b32.xlu0 %v1144, 96
        %v1916 = vpop.permute.xlu0 %1915
        %1917 = vrot.lane.b32.xlu0 %v1145, 96
        %v1918 = vpop.permute.xlu0 %1917
        %1919 = vrot.lane.b32.xlu0 %v1146, 96
        %v1920 = vpop.permute.xlu0 %1919
        %1921 = vrot.lane.b32.xlu0 %v1147, 96
        %v1922 = vpop.permute.xlu0 %1921
        %1923 = vrot.lane.b32.xlu0 %v1148, 96
        %v1924 = vpop.permute.xlu0 %1923
        %1925 = vrot.lane.b32.xlu0 %v1149, 96
        %v1926 = vpop.permute.xlu0 %1925
        %1927 = vrot.lane.b32.xlu0 %v1150, 96
        %v1928 = vpop.permute.xlu0 %1927
        %1929 = vrot.lane.b32.xlu0 %v1151, 96
        %v1930 = vpop.permute.xlu0 %1929
        %1931 = vrot.lane.b32.xlu0 %v1152, 96
        %v1932 = vpop.permute.xlu0 %1931
        %1933 = vrot.lane.b32.xlu0 %v1153, 96
        %v1934 = vpop.permute.xlu0 %1933
        %1935 = vrot.lane.b32.xlu0 %v1154, 96
        %v1936 = vpop.permute.xlu0 %1935
        %1937 = vrot.lane.b32.xlu0 %v1155, 96
        %v1938 = vpop.permute.xlu0 %1937
        %1939 = vrot.lane.b32.xlu0 %v1156, 96
        %v1940 = vpop.permute.xlu0 %1939
        %1941 = vrot.lane.b32.xlu0 %v1157, 96
        %v1942 = vpop.permute.xlu0 %1941
        %1943 = vrot.lane.b32.xlu0 %v1158, 96
        %v1944 = vpop.permute.xlu0 %1943
        %1945 = vrot.lane.b32.xlu0 %v1159, 96
        %v1946 = vpop.permute.xlu0 %1945
        %1947 = vrot.lane.b32.xlu0 %v1160, 96
        %v1948 = vpop.permute.xlu0 %1947
        %1949 = vrot.lane.b32.xlu0 %v1161, 96
        %v1950 = vpop.permute.xlu0 %1949
        %1951 = vrot.lane.b32.xlu0 %v1162, 96
        %v1952 = vpop.permute.xlu0 %1951
        %1953 = vrot.lane.b32.xlu0 %v1163, 96
        %v1954 = vpop.permute.xlu0 %1953
        %1955 = vrot.lane.b32.xlu0 %v1164, 96
        %v1956 = vpop.permute.xlu0 %1955
        %1957 = vrot.lane.b32.xlu0 %v1165, 96
        %v1958 = vpop.permute.xlu0 %1957
        %1959 = vrot.lane.b32.xlu0 %v1166, 96
        %v1960 = vpop.permute.xlu0 %1959
        %1961 = vrot.lane.b32.xlu0 %v1167, 96
        %v1962 = vpop.permute.xlu0 %1961
        %1963 = vrot.lane.b32.xlu0 %v1168, 96
        %v1964 = vpop.permute.xlu0 %1963
        %1965 = vrot.lane.b32.xlu0 %v1169, 96
        %v1966 = vpop.permute.xlu0 %1965
        %1967 = vrot.lane.b32.xlu0 %v1170, 96
        %v1968 = vpop.permute.xlu0 %1967
        %1969 = vrot.lane.b32.xlu0 %v1171, 96
        %v1970 = vpop.permute.xlu0 %1969
        %1971 = vrot.lane.b32.xlu0 %v1172, 96
        %v1972 = vpop.permute.xlu0 %1971
        %2037 = vrot.lane.b32.xlu0 %v1173, 112
        %v2038 = vpop.permute.xlu0 %2037
        %2039 = vrot.lane.b32.xlu0 %v1174, 112
        %v2040 = vpop.permute.xlu0 %2039
        %2041 = vrot.lane.b32.xlu0 %v1175, 112
        %v2042 = vpop.permute.xlu0 %2041
        %2043 = vrot.lane.b32.xlu0 %v1176, 112
        %v2044 = vpop.permute.xlu0 %2043
        %2045 = vrot.lane.b32.xlu0 %v1177, 112
        %v2046 = vpop.permute.xlu0 %2045
        %2047 = vrot.lane.b32.xlu0 %v1178, 112
        %v2048 = vpop.permute.xlu0 %2047
        %2049 = vrot.lane.b32.xlu0 %v1179, 112
        %v2050 = vpop.permute.xlu0 %2049
        %2051 = vrot.lane.b32.xlu0 %v1180, 112
        %v2052 = vpop.permute.xlu0 %2051
        %2053 = vrot.lane.b32.xlu0 %v1181, 112
        %v2054 = vpop.permute.xlu0 %2053
        %2055 = vrot.lane.b32.xlu0 %v1182, 112
        %v2056 = vpop.permute.xlu0 %2055
        %2057 = vrot.lane.b32.xlu0 %v1183, 112
        %v2058 = vpop.permute.xlu0 %2057
        %2059 = vrot.lane.b32.xlu0 %v1184, 112
        %v2060 = vpop.permute.xlu0 %2059
        %2061 = vrot.lane.b32.xlu0 %v1185, 112
        %v2062 = vpop.permute.xlu0 %2061
        %2063 = vrot.lane.b32.xlu0 %v1186, 112
        %v2064 = vpop.permute.xlu0 %2063
        %2065 = vrot.lane.b32.xlu0 %v1187, 112
        %v2066 = vpop.permute.xlu0 %2065
        %2067 = vrot.lane.b32.xlu0 %v1188, 112
        %v2068 = vpop.permute.xlu0 %2067
        %2069 = vrot.lane.b32.xlu0 %v1189, 112
        %v2070 = vpop.permute.xlu0 %2069
        %2071 = vrot.lane.b32.xlu0 %v1190, 112
        %v2072 = vpop.permute.xlu0 %2071
        %2073 = vrot.lane.b32.xlu0 %v1191, 112
        %v2074 = vpop.permute.xlu0 %2073
        %2075 = vrot.lane.b32.xlu0 %v1192, 112
        %v2076 = vpop.permute.xlu0 %2075
        %2077 = vrot.lane.b32.xlu0 %v1193, 112
        %v2078 = vpop.permute.xlu0 %2077
        %2079 = vrot.lane.b32.xlu0 %v1194, 112
        %v2080 = vpop.permute.xlu0 %2079
        %2081 = vrot.lane.b32.xlu0 %v1195, 112
        %v2082 = vpop.permute.xlu0 %2081
        %2083 = vrot.lane.b32.xlu0 %v1196, 112
        %v2084 = vpop.permute.xlu0 %2083
        %2085 = vrot.lane.b32.xlu0 %v1197, 112
        %v2086 = vpop.permute.xlu0 %2085
        %2087 = vrot.lane.b32.xlu0 %v1198, 112
        %v2088 = vpop.permute.xlu0 %2087
        %2089 = vrot.lane.b32.xlu0 %v1199, 112
        %v2090 = vpop.permute.xlu0 %2089
        %2091 = vrot.lane.b32.xlu0 %v1200, 112
        %v2092 = vpop.permute.xlu0 %2091
        %2093 = vrot.lane.b32.xlu0 %v1201, 112
        %v2094 = vpop.permute.xlu0 %2093
        %2095 = vrot.lane.b32.xlu0 %v1202, 112
        %v2096 = vpop.permute.xlu0 %2095
        %2097 = vrot.lane.b32.xlu0 %v1203, 112
        %v2098 = vpop.permute.xlu0 %2097
        %2099 = vrot.lane.b32.xlu0 %v1204, 112
        %v2100 = vpop.permute.xlu0 %2099
        %v2133 = vsel %vm224, %v948, %v1270
        %v2134 = vsel %vm224, %v949, %v1272
        %v2135 = vsel %vm224, %v950, %v1274
        %v2136 = vsel %vm224, %v951, %v1276
        %v2137 = vsel %vm224, %v952, %v1278
        %v2138 = vsel %vm224, %v953, %v1280
        %v2139 = vsel %vm224, %v954, %v1282
        %v2140 = vsel %vm224, %v955, %v1284
        %v2141 = vsel %vm224, %v956, %v1286
        %v2142 = vsel %vm224, %v957, %v1288
        %v2143 = vsel %vm224, %v958, %v1290
        %v2144 = vsel %vm224, %v959, %v1292
        %v2145 = vsel %vm224, %v960, %v1294
        %v2146 = vsel %vm224, %v961, %v1296
        %v2147 = vsel %vm224, %v962, %v1298
        %v2148 = vsel %vm224, %v963, %v1300
        %v2149 = vsel %vm224, %v964, %v1302
        %v2150 = vsel %vm224, %v965, %v1304
        %v2151 = vsel %vm224, %v966, %v1306
        %v2152 = vsel %vm224, %v967, %v1308
        %v2153 = vsel %vm224, %v968, %v1310
        %v2154 = vsel %vm224, %v969, %v1312
        %v2155 = vsel %vm224, %v970, %v1314
        %v2156 = vsel %vm224, %v971, %v1316
        %v2157 = vsel %vm224, %v972, %v1318
        %v2158 = vsel %vm224, %v973, %v1320
        %v2159 = vsel %vm224, %v974, %v1322
        %v2160 = vsel %vm224, %v975, %v1324
        %v2161 = vsel %vm224, %v976, %v1326
        %v2162 = vsel %vm224, %v977, %v1328
        %v2163 = vsel %vm224, %v978, %v1330
        %v2164 = vsel %vm224, %v979, %v1332
        %v2165 = vsel %vm280, %v2133, %v1398
        %v2166 = vsel %vm280, %v2134, %v1400
        %v2167 = vsel %vm280, %v2135, %v1402
        %v2168 = vsel %vm280, %v2136, %v1404
        %v2169 = vsel %vm280, %v2137, %v1406
        %v2170 = vsel %vm280, %v2138, %v1408
        %v2171 = vsel %vm280, %v2139, %v1410
        %v2172 = vsel %vm280, %v2140, %v1412
        %v2173 = vsel %vm280, %v2141, %v1414
        %v2174 = vsel %vm280, %v2142, %v1416
        %v2175 = vsel %vm280, %v2143, %v1418
        %v2176 = vsel %vm280, %v2144, %v1420
        %v2177 = vsel %vm280, %v2145, %v1422
        %v2178 = vsel %vm280, %v2146, %v1424
        %v2179 = vsel %vm280, %v2147, %v1426
        %v2180 = vsel %vm280, %v2148, %v1428
        %v2181 = vsel %vm280, %v2149, %v1430
        %v2182 = vsel %vm280, %v2150, %v1432
        %v2183 = vsel %vm280, %v2151, %v1434
        %v2184 = vsel %vm280, %v2152, %v1436
        %v2185 = vsel %vm280, %v2153, %v1438
        %v2186 = vsel %vm280, %v2154, %v1440
        %v2187 = vsel %vm280, %v2155, %v1442
        %v2188 = vsel %vm280, %v2156, %v1444
        %v2189 = vsel %vm280, %v2157, %v1446
        %v2190 = vsel %vm280, %v2158, %v1448
        %v2191 = vsel %vm280, %v2159, %v1450
        %v2192 = vsel %vm280, %v2160, %v1452
        %v2193 = vsel %vm280, %v2161, %v1454
        %v2194 = vsel %vm280, %v2162, %v1456
        %v2195 = vsel %vm280, %v2163, %v1458
        %v2196 = vsel %vm280, %v2164, %v1460
        %vm2197 = vcmask 392192
        %v2198 = vsel %vm2197, %v2165, %v1526
        %v2199 = vsel %vm2197, %v2166, %v1528
        %v2200 = vsel %vm2197, %v2167, %v1530
        %v2201 = vsel %vm2197, %v2168, %v1532
        %v2202 = vsel %vm2197, %v2169, %v1534
        %v2203 = vsel %vm2197, %v2170, %v1536
        %v2204 = vsel %vm2197, %v2171, %v1538
        %v2205 = vsel %vm2197, %v2172, %v1540
        %v2206 = vsel %vm2197, %v2173, %v1542
        %v2207 = vsel %vm2197, %v2174, %v1544
        %v2208 = vsel %vm2197, %v2175, %v1546
        %v2209 = vsel %vm2197, %v2176, %v1548
        %v2210 = vsel %vm2197, %v2177, %v1550
        %v2211 = vsel %vm2197, %v2178, %v1552
        %v2212 = vsel %vm2197, %v2179, %v1554
        %v2213 = vsel %vm2197, %v2180, %v1556
        %v2214 = vsel %vm2197, %v2181, %v1558
        %v2215 = vsel %vm2197, %v2182, %v1560
        %v2216 = vsel %vm2197, %v2183, %v1562
        %v2217 = vsel %vm2197, %v2184, %v1564
        %v2218 = vsel %vm2197, %v2185, %v1566
        %v2219 = vsel %vm2197, %v2186, %v1568
        %v2220 = vsel %vm2197, %v2187, %v1570
        %v2221 = vsel %vm2197, %v2188, %v1572
        %v2222 = vsel %vm2197, %v2189, %v1574
        %v2223 = vsel %vm2197, %v2190, %v1576
        %v2224 = vsel %vm2197, %v2191, %v1578
        %v2225 = vsel %vm2197, %v2192, %v1580
        %v2226 = vsel %vm2197, %v2193, %v1582
        %v2227 = vsel %vm2197, %v2194, %v1584
        %v2228 = vsel %vm2197, %v2195, %v1586
        %v2229 = vsel %vm2197, %v2196, %v1588
        %vm2230 = vcmask 523264
        %v2231 = vsel %vm2230, %v2198, %v1654
        %v2232 = vsel %vm2230, %v2199, %v1656
        %v2233 = vsel %vm2230, %v2200, %v1658
        %v2234 = vsel %vm2230, %v2201, %v1660
        %v2235 = vsel %vm2230, %v2202, %v1662
        %v2236 = vsel %vm2230, %v2203, %v1664
        %v2237 = vsel %vm2230, %v2204, %v1666
        %v2238 = vsel %vm2230, %v2205, %v1668
        %v2239 = vsel %vm2230, %v2206, %v1670
        %v2240 = vsel %vm2230, %v2207, %v1672
        %v2241 = vsel %vm2230, %v2208, %v1674
        %v2242 = vsel %vm2230, %v2209, %v1676
        %v2243 = vsel %vm2230, %v2210, %v1678
        %v2244 = vsel %vm2230, %v2211, %v1680
        %v2245 = vsel %vm2230, %v2212, %v1682
        %v2246 = vsel %vm2230, %v2213, %v1684
        %v2247 = vsel %vm2230, %v2214, %v1686
        %v2248 = vsel %vm2230, %v2215, %v1688
        %v2249 = vsel %vm2230, %v2216, %v1690
        %v2250 = vsel %vm2230, %v2217, %v1692
        %v2251 = vsel %vm2230, %v2218, %v1694
        %v2252 = vsel %vm2230, %v2219, %v1696
        %v2253 = vsel %vm2230, %v2220, %v1698
        %v2254 = vsel %vm2230, %v2221, %v1700
        %v2255 = vsel %vm2230, %v2222, %v1702
        %v2256 = vsel %vm2230, %v2223, %v1704
        %v2257 = vsel %vm2230, %v2224, %v1706
        %v2258 = vsel %vm2230, %v2225, %v1708
        %v2259 = vsel %vm2230, %v2226, %v1710
        %v2260 = vsel %vm2230, %v2227, %v1712
        %v2261 = vsel %vm2230, %v2228, %v1714
        %v2262 = vsel %vm2230, %v2229, %v1716
        %vm2263 = vcmask 654336
        %v2264 = vsel %vm2263, %v2231, %v1782
        %v2265 = vsel %vm2263, %v2232, %v1784
        %v2266 = vsel %vm2263, %v2233, %v1786
        %v2267 = vsel %vm2263, %v2234, %v1788
        %v2268 = vsel %vm2263, %v2235, %v1790
        %v2269 = vsel %vm2263, %v2236, %v1792
        %v2270 = vsel %vm2263, %v2237, %v1794
        %v2271 = vsel %vm2263, %v2238, %v1796
        %v2272 = vsel %vm2263, %v2239, %v1798
        %v2273 = vsel %vm2263, %v2240, %v1800
        %v2274 = vsel %vm2263, %v2241, %v1802
        %v2275 = vsel %vm2263, %v2242, %v1804
        %v2276 = vsel %vm2263, %v2243, %v1806
        %v2277 = vsel %vm2263, %v2244, %v1808
        %v2278 = vsel %vm2263, %v2245, %v1810
        %v2279 = vsel %vm2263, %v2246, %v1812
        %v2280 = vsel %vm2263, %v2247, %v1814
        %v2281 = vsel %vm2263, %v2248, %v1816
        %v2282 = vsel %vm2263, %v2249, %v1818
        %v2283 = vsel %vm2263, %v2250, %v1820
        %v2284 = vsel %vm2263, %v2251, %v1822
        %v2285 = vsel %vm2263, %v2252, %v1824
        %v2286 = vsel %vm2263, %v2253, %v1826
        %v2287 = vsel %vm2263, %v2254, %v1828
        %v2288 = vsel %vm2263, %v2255, %v1830
        %v2289 = vsel %vm2263, %v2256, %v1832
        %v2290 = vsel %vm2263, %v2257, %v1834
        %v2291 = vsel %vm2263, %v2258, %v1836
        %v2292 = vsel %vm2263, %v2259, %v1838
        %v2293 = vsel %vm2263, %v2260, %v1840
        %v2294 = vsel %vm2263, %v2261, %v1842
        %v2295 = vsel %vm2263, %v2262, %v1844
        %vm2296 = vcmask 785408
        %v2297 = vsel %vm2296, %v2264, %v1910
        %v2298 = vsel %vm2296, %v2265, %v1912
        %v2299 = vsel %vm2296, %v2266, %v1914
        %v2300 = vsel %vm2296, %v2267, %v1916
        %v2301 = vsel %vm2296, %v2268, %v1918
        %v2302 = vsel %vm2296, %v2269, %v1920
        %v2303 = vsel %vm2296, %v2270, %v1922
        %v2304 = vsel %vm2296, %v2271, %v1924
        %v2305 = vsel %vm2296, %v2272, %v1926
        %v2306 = vsel %vm2296, %v2273, %v1928
        %v2307 = vsel %vm2296, %v2274, %v1930
        %v2308 = vsel %vm2296, %v2275, %v1932
        %v2309 = vsel %vm2296, %v2276, %v1934
        %v2310 = vsel %vm2296, %v2277, %v1936
        %v2311 = vsel %vm2296, %v2278, %v1938
        %v2312 = vsel %vm2296, %v2279, %v1940
        %v2313 = vsel %vm2296, %v2280, %v1942
        %v2314 = vsel %vm2296, %v2281, %v1944
        %v2315 = vsel %vm2296, %v2282, %v1946
        %v2316 = vsel %vm2296, %v2283, %v1948
        %v2317 = vsel %vm2296, %v2284, %v1950
        %v2318 = vsel %vm2296, %v2285, %v1952
        %v2319 = vsel %vm2296, %v2286, %v1954
        %v2320 = vsel %vm2296, %v2287, %v1956
        %v2321 = vsel %vm2296, %v2288, %v1958
        %v2322 = vsel %vm2296, %v2289, %v1960
        %v2323 = vsel %vm2296, %v2290, %v1962
        %v2324 = vsel %vm2296, %v2291, %v1964
        %v2325 = vsel %vm2296, %v2292, %v1966
        %v2326 = vsel %vm2296, %v2293, %v1968
        %v2327 = vsel %vm2296, %v2294, %v1970
        %v2328 = vsel %vm2296, %v2295, %v1972
        %vm2329 = vcmask 916480
        %v2330 = vsel %vm2329, %v2297, %v2038
        %v2331 = vsel %vm2329, %v2298, %v2040
        %v2332 = vsel %vm2329, %v2299, %v2042
        %v2333 = vsel %vm2329, %v2300, %v2044
        %v2334 = vsel %vm2329, %v2301, %v2046
        %v2335 = vsel %vm2329, %v2302, %v2048
        %v2336 = vsel %vm2329, %v2303, %v2050
        %v2337 = vsel %vm2329, %v2304, %v2052
        %v2338 = vsel %vm2329, %v2305, %v2054
        %v2339 = vsel %vm2329, %v2306, %v2056
        %v2340 = vsel %vm2329, %v2307, %v2058
        %v2341 = vsel %vm2329, %v2308, %v2060
        %v2342 = vsel %vm2329, %v2309, %v2062
        %v2343 = vsel %vm2329, %v2310, %v2064
        %v2344 = vsel %vm2329, %v2311, %v2066
        %v2345 = vsel %vm2329, %v2312, %v2068
        %v2346 = vsel %vm2329, %v2313, %v2070
        %v2347 = vsel %vm2329, %v2314, %v2072
        %v2348 = vsel %vm2329, %v2315, %v2074
        %v2349 = vsel %vm2329, %v2316, %v2076
        %v2350 = vsel %vm2329, %v2317, %v2078
        %v2351 = vsel %vm2329, %v2318, %v2080
        %v2352 = vsel %vm2329, %v2319, %v2082
        %v2353 = vsel %vm2329, %v2320, %v2084
        %v2354 = vsel %vm2329, %v2321, %v2086
        %v2355 = vsel %vm2329, %v2322, %v2088
        %v2356 = vsel %vm2329, %v2323, %v2090
        %v2357 = vsel %vm2329, %v2324, %v2092
        %v2358 = vsel %vm2329, %v2325, %v2094
        %v2359 = vsel %vm2329, %v2326, %v2096
        %v2360 = vsel %vm2329, %v2327, %v2098
        %v2361 = vsel %vm2329, %v2328, %v2100
        %v2362 = vpack.c.bf16 %v2331, %v2330
        %v2363 = vpack.c.bf16 %v1206, %v1205
        %v2364 = vpack.c.bf16 %v2333, %v2332
        %v2365 = vpack.c.bf16 %v1208, %v1207
        %v2366 = vpack.c.bf16 %v2335, %v2334
        %v2367 = vpack.c.bf16 %v1210, %v1209
        %v2368 = vpack.c.bf16 %v2337, %v2336
        %v2369 = vpack.c.bf16 %v1212, %v1211
        %v2370 = vpack.c.bf16 %v2339, %v2338
        %v2371 = vpack.c.bf16 %v1214, %v1213
        %v2372 = vpack.c.bf16 %v2341, %v2340
        %v2373 = vpack.c.bf16 %v1216, %v1215
        %v2374 = vpack.c.bf16 %v2343, %v2342
        %v2375 = vpack.c.bf16 %v1218, %v1217
        %v2376 = vpack.c.bf16 %v2345, %v2344
        %v2377 = vpack.c.bf16 %v1220, %v1219
        %v2378 = vpack.c.bf16 %v2347, %v2346
        %v2379 = vpack.c.bf16 %v1222, %v1221
        %v2380 = vpack.c.bf16 %v2349, %v2348
        %v2381 = vpack.c.bf16 %v1224, %v1223
        %v2382 = vpack.c.bf16 %v2351, %v2350
        %v2383 = vpack.c.bf16 %v1226, %v1225
        %v2384 = vpack.c.bf16 %v2353, %v2352
        %v2385 = vpack.c.bf16 %v1228, %v1227
        %v2386 = vpack.c.bf16 %v2355, %v2354
        %v2387 = vpack.c.bf16 %v1230, %v1229
        %v2388 = vpack.c.bf16 %v2357, %v2356
        %v2389 = vpack.c.bf16 %v1232, %v1231
        %v2390 = vpack.c.bf16 %v2359, %v2358
        %v2391 = vpack.c.bf16 %v1234, %v1233
        %v2392 = vpack.c.bf16 %v2361, %v2360
        %v2393 = vpack.c.bf16 %v1236, %v1235
        %v2394 = vld [vmem:[%s1] sm:$0xf]
        %v2395 = vld [vmem:[%s1 + $0x4] sm:$0xf]
        %v2396 = vld [vmem:[%s1 + $0x8] sm:$0xf]
        %v2397 = vld [vmem:[%s1 + $0xc] sm:$0xf]
        %v2398 = vld [vmem:[%s1 + $0x10] sm:$0xf]
        %v2399 = vld [vmem:[%s1 + $0x14] sm:$0xf]
        %v2400 = vld [vmem:[%s1 + $0x18] sm:$0xf]
        %v2401 = vld [vmem:[%s1 + $0x1c] sm:$0xf]
        %v2402 = vld [vmem:[%s1 + $0x20] sm:$0xf]
        %v2403 = vld [vmem:[%s1 + $0x24] sm:$0xf]
        %v2404 = vld [vmem:[%s1 + $0x28] sm:$0xf]
        %v2405 = vld [vmem:[%s1 + $0x2c] sm:$0xf]
        %v2406 = vld [vmem:[%s1 + $0x30] sm:$0xf]
        %v2407 = vld [vmem:[%s1 + $0x34] sm:$0xf]
        %v2408 = vld [vmem:[%s1 + $0x38] sm:$0xf]
        %v2409 = vld [vmem:[%s1 + $0x3c] sm:$0xf]
        %v2410 = vld [vmem:[%s1 + $0x40] sm:$0xf]
        %v2411 = vld [vmem:[%s1 + $0x44] sm:$0xf]
        %v2412 = vld [vmem:[%s2] sm:$0x1]
        %v2414 = vlaneseq
        %v2415 = vshrl.u32 %v2414, 7
        %v2416 = vsub.s32 0, %v2415
        %v2417 = vrot.slane %v2412, %v2416
        %v2437 = vunpack.c.l.b16 %v2394
        %v2438 = vunpack.c.l.b16 %v2395
        %v2439 = vunpack.c.l.b16 %v2396
        %v2440 = vunpack.c.l.b16 %v2397
        %v2441 = vunpack.c.l.b16 %v2398
        %v2442 = vunpack.c.l.b16 %v2399
        %v2443 = vunpack.c.l.b16 %v2400
        %v2444 = vunpack.c.l.b16 %v2401
        %v2445 = vunpack.c.l.b16 %v2402
        %v2446 = vunpack.c.l.b16 %v2403
        %v2447 = vunpack.c.l.b16 %v2404
        %v2448 = vunpack.c.l.b16 %v2405
        %v2449 = vunpack.c.l.b16 %v2406
        %v2450 = vunpack.c.l.b16 %v2407
        %v2451 = vunpack.c.l.b16 %v2408
        %v2452 = vunpack.c.l.b16 %v2409
        %v2453 = vunpack.c.l.b16 %v2410
        %v2454 = vunpack.c.l.b16 %v2411
        %v2455 = vpack.c.b16 %v2438, %v2437
        %v2456 = vpack.c.b16 %v2440, %v2439
        %v2457 = vpack.c.b16 %v2442, %v2441
        %v2458 = vpack.c.b16 %v2444, %v2443
        %v2459 = vpack.c.b16 %v2446, %v2445
        %v2460 = vpack.c.b16 %v2448, %v2447
        %v2461 = vpack.c.b16 %v2450, %v2449
        %v2462 = vpack.c.b16 %v2452, %v2451
        %v2463 = vpack.c.b16 %v2454, %v2453
        %v2474 = vsel %vm224, %v2363, 0
        %v2477 = vsel %vm224, %v2365, 0
        %v2480 = vsel %vm224, %v2367, 0
        %v2483 = vsel %vm224, %v2369, 0
        %v2486 = vsel %vm224, %v2371, 0
        %v2489 = vsel %vm224, %v2373, 0
        %v2492 = vsel %vm224, %v2375, 0
        %v2495 = vsel %vm224, %v2377, 0
        %v2498 = vsel %vm224, %v2379, 0
        %v2501 = vsel %vm224, %v2381, 0
        %v2504 = vsel %vm224, %v2383, 0
        %v2507 = vsel %vm224, %v2385, 0
        %v2510 = vsel %vm224, %v2387, 0
        %v2513 = vsel %vm224, %v2389, 0
        %v2516 = vsel %vm224, %v2391, 0
        %v2519 = vsel %vm224, %v2393, 0
        %2521 = vmatprep.subr.bf16.mxu0 0
        %2522 = vmatpush1.bf16.msra.mxu0 %v2455
        %2523 = vmatprep.subr.bf16.mxu0 0
        %2524 = vmatpush1.bf16.msra.mxu0 %v2456
        %2525 = vmatprep.subr.bf16.mxu0 0
        %2526 = vmatpush1.bf16.msra.mxu0 %v2457
        %2527 = vmatprep.subr.bf16.mxu0 0
        %2528 = vmatpush1.bf16.msra.mxu0 %v2458
        %2529 = vmatprep.subr.bf16.mxu0 0
        %2530 = vmatpush1.bf16.msra.mxu0 %v2459
        %2531 = vmatprep.subr.bf16.mxu0 0
        %2532 = vmatpush1.bf16.msra.mxu0 %v2460
        %2533 = vmatprep.subr.bf16.mxu0 0
        %2534 = vmatpush1.bf16.msra.mxu0 %v2461
        %2535 = vmatprep.subr.bf16.mxu0 0
        %2536 = vmatpush1.bf16.msra.mxu0 %v2462
        %2537 = vmatprep.subr.bf16.mxu0 0
        %2538 = vmatpush1.bf16.msra.mxu0 %v2463
        %2539 = vmatprep.subr.bf16.mxu0 0
        %2540 = vmatpush1.bf16.msra.mxu0 0
        %2541 = vmatprep.subr.bf16.mxu0 0
        %2542 = vmatpush1.bf16.msra.mxu0 0
        %2543 = vmatprep.subr.bf16.mxu0 0
        %2544 = vmatpush1.bf16.msra.mxu0 0
        %2545 = vmatprep.subr.bf16.mxu0 0
        %2546 = vmatpush1.bf16.msra.mxu0 0
        %2547 = vmatprep.subr.bf16.mxu0 0
        %2548 = vmatpush1.bf16.msra.mxu0 0
        %2549 = vmatprep.subr.bf16.mxu0 0
        %2550 = vmatpush1.bf16.msra.mxu0 0
        %2551 = vmatprep.subr.bf16.mxu0 0
        %2552 = vmatpush1.bf16.msra.mxu0 0
        %2553 = vmatprep.mubr.bf16.mxu0 %v2474
        %2554 = vmatmul.mubr.bf16.gmra.mrb[0].mxu0 %v2362
        %v2555 = vpop.f32.mrb[0].mxu0
        %v2556 = vadd.f32 %v2417, %v2555
        %v2557 = vpop.f32.mrb[0].mxu0
        %v2558 = vpop.f32.mrb[0].mxu0
        %v2559 = vadd.f32 %v2417, %v2558
        %v2560 = vpop.f32.mrb[0].mxu0
        %2561 = vmatprep.mubr.bf16.mxu0 %v2477
        %2562 = vmatmul.mubr.bf16.gmra.mrb[0].mxu0 %v2364
        %v2563 = vpop.f32.mrb[0].mxu0
        %v2564 = vadd.f32 %v2417, %v2563
        %v2565 = vpop.f32.mrb[0].mxu0
        %v2566 = vpop.f32.mrb[0].mxu0
        %v2567 = vadd.f32 %v2417, %v2566
        %v2568 = vpop.f32.mrb[0].mxu0
        %2569 = vmatprep.mubr.bf16.mxu0 %v2480
        %2570 = vmatmul.mubr.bf16.gmra.mrb[0].mxu0 %v2366
        %v2571 = vpop.f32.mrb[0].mxu0
        %v2572 = vadd.f32 %v2417, %v2571
        %v2573 = vpop.f32.mrb[0].mxu0
        %v2574 = vpop.f32.mrb[0].mxu0
        %v2575 = vadd.f32 %v2417, %v2574
        %v2576 = vpop.f32.mrb[0].mxu0
        %2577 = vmatprep.mubr.bf16.mxu0 %v2483
        %2578 = vmatmul.mubr.bf16.gmra.mrb[0].mxu0 %v2368
        %v2579 = vpop.f32.mrb[0].mxu0
        %v2580 = vadd.f32 %v2417, %v2579
        %v2581 = vpop.f32.mrb[0].mxu0
        %v2582 = vpop.f32.mrb[0].mxu0
        %v2583 = vadd.f32 %v2417, %v2582
        %v2584 = vpop.f32.mrb[0].mxu0
        %2585 = vmatprep.mubr.bf16.mxu0 %v2486
        %2586 = vmatmul.mubr.bf16.gmra.mrb[0].mxu0 %v2370
        %v2587 = vpop.f32.mrb[0].mxu0
        %v2588 = vadd.f32 %v2417, %v2587
        %v2589 = vpop.f32.mrb[0].mxu0
        %v2590 = vpop.f32.mrb[0].mxu0
        %v2591 = vadd.f32 %v2417, %v2590
        %v2592 = vpop.f32.mrb[0].mxu0
        %2593 = vmatprep.mubr.bf16.mxu0 %v2489
        %2594 = vmatmul.mubr.bf16.gmra.mrb[0].mxu0 %v2372
        %v2595 = vpop.f32.mrb[0].mxu0
        %v2596 = vadd.f32 %v2417, %v2595
        %v2597 = vpop.f32.mrb[0].mxu0
        %v2598 = vpop.f32.mrb[0].mxu0
        %v2599 = vadd.f32 %v2417, %v2598
        %v2600 = vpop.f32.mrb[0].mxu0
        %2601 = vmatprep.mubr.bf16.mxu0 %v2492
        %2602 = vmatmul.mubr.bf16.gmra.mrb[0].mxu0 %v2374
        %v2603 = vpop.f32.mrb[0].mxu0
        %v2604 = vadd.f32 %v2417, %v2603
        %v2605 = vpop.f32.mrb[0].mxu0
        %v2606 = vpop.f32.mrb[0].mxu0
        %v2607 = vadd.f32 %v2417, %v2606
        %v2608 = vpop.f32.mrb[0].mxu0
        %2609 = vmatprep.mubr.bf16.mxu0 %v2495
        %2610 = vmatmul.mubr.bf16.gmra.mrb[0].mxu0 %v2376
        %v2611 = vpop.f32.mrb[0].mxu0
        %v2612 = vadd.f32 %v2417, %v2611
        %v2613 = vpop.f32.mrb[0].mxu0
        %v2614 = vpop.f32.mrb[0].mxu0
        %v2615 = vadd.f32 %v2417, %v2614
        %v2616 = vpop.f32.mrb[0].mxu0
        %2617 = vmatprep.mubr.bf16.mxu0 %v2498
        %2618 = vmatmul.mubr.bf16.gmra.mrb[0].mxu0 %v2378
        %v2619 = vpop.f32.mrb[0].mxu0
        %v2620 = vadd.f32 %v2417, %v2619
        %v2621 = vpop.f32.mrb[0].mxu0
        %v2622 = vpop.f32.mrb[0].mxu0
        %v2623 = vadd.f32 %v2417, %v2622
        %v2624 = vpop.f32.mrb[0].mxu0
        %2625 = vmatprep.mubr.bf16.mxu0 %v2501
        %2626 = vmatmul.mubr.bf16.gmra.mrb[0].mxu0 %v2380
        %v2627 = vpop.f32.mrb[0].mxu0
        %v2628 = vadd.f32 %v2417, %v2627
        %v2629 = vpop.f32.mrb[0].mxu0
        %v2630 = vpop.f32.mrb[0].mxu0
        %v2631 = vadd.f32 %v2417, %v2630
        %v2632 = vpop.f32.mrb[0].mxu0
        %2633 = vmatprep.mubr.bf16.mxu0 %v2504
        %2634 = vmatmul.mubr.bf16.gmra.mrb[0].mxu0 %v2382
        %v2635 = vpop.f32.mrb[0].mxu0
        %v2636 = vadd.f32 %v2417, %v2635
        %v2637 = vpop.f32.mrb[0].mxu0
        %v2638 = vpop.f32.mrb[0].mxu0
        %v2639 = vadd.f32 %v2417, %v2638
        %v2640 = vpop.f32.mrb[0].mxu0
        %2641 = vmatprep.mubr.bf16.mxu0 %v2507
        %2642 = vmatmul.mubr.bf16.gmra.mrb[0].mxu0 %v2384
        %v2643 = vpop.f32.mrb[0].mxu0
        %v2644 = vadd.f32 %v2417, %v2643
        %v2645 = vpop.f32.mrb[0].mxu0
        %v2646 = vpop.f32.mrb[0].mxu0
        %v2647 = vadd.f32 %v2417, %v2646
        %v2648 = vpop.f32.mrb[0].mxu0
        %2649 = vmatprep.mubr.bf16.mxu0 %v2510
        %2650 = vmatmul.mubr.bf16.gmra.mrb[0].mxu0 %v2386
        %v2651 = vpop.f32.mrb[0].mxu0
        %v2652 = vadd.f32 %v2417, %v2651
        %v2653 = vpop.f32.mrb[0].mxu0
        %v2654 = vpop.f32.mrb[0].mxu0
        %v2655 = vadd.f32 %v2417, %v2654
        %v2656 = vpop.f32.mrb[0].mxu0
        %2657 = vmatprep.mubr.bf16.mxu0 %v2513
        %2658 = vmatmul.mubr.bf16.gmra.mrb[0].mxu0 %v2388
        %v2659 = vpop.f32.mrb[0].mxu0
        %v2660 = vadd.f32 %v2417, %v2659
        %v2661 = vpop.f32.mrb[0].mxu0
        %v2662 = vpop.f32.mrb[0].mxu0
        %v2663 = vadd.f32 %v2417, %v2662
        %v2664 = vpop.f32.mrb[0].mxu0
        %2665 = vmatprep.mubr.bf16.mxu0 %v2516
        %2666 = vmatmul.mubr.bf16.gmra.mrb[0].mxu0 %v2390
        %v2667 = vpop.f32.mrb[0].mxu0
        %v2668 = vadd.f32 %v2417, %v2667
        %v2669 = vpop.f32.mrb[0].mxu0
        %v2670 = vpop.f32.mrb[0].mxu0
        %v2671 = vadd.f32 %v2417, %v2670
        %v2672 = vpop.f32.mrb[0].mxu0
        %2673 = vmatprep.mubr.bf16.mxu0 %v2519
        %2674 = vmatmul.mubr.bf16.gmra.mrb[0].mxu0 %v2392
        %v2675 = vpop.f32.mrb[0].mxu0
        %v2676 = vadd.f32 %v2417, %v2675
        %v2677 = vpop.f32.mrb[0].mxu0
        %v2678 = vpop.f32.mrb[0].mxu0
        %v2679 = vadd.f32 %v2417, %v2678
        %v2680 = vpop.f32.mrb[0].mxu0
        %2681 = vdwg.mxu0
        %v2682 = vmax.f32 %v2556, 0.0
        %v2683 = vmax.f32 %v2559, 0.0
        %v2684 = vmax.f32 %v2564, 0.0
        %v2685 = vmax.f32 %v2567, 0.0
        %v2686 = vmax.f32 %v2572, 0.0
        %v2687 = vmax.f32 %v2575, 0.0
        %v2688 = vmax.f32 %v2580, 0.0
        %v2689 = vmax.f32 %v2583, 0.0
        %v2690 = vmax.f32 %v2588, 0.0
        %v2691 = vmax.f32 %v2591, 0.0
        %v2692 = vmax.f32 %v2596, 0.0
        %v2693 = vmax.f32 %v2599, 0.0
        %v2694 = vmax.f32 %v2604, 0.0
        %v2695 = vmax.f32 %v2607, 0.0
        %v2696 = vmax.f32 %v2612, 0.0
        %v2697 = vmax.f32 %v2615, 0.0
        %v2698 = vmax.f32 %v2620, 0.0
        %v2699 = vmax.f32 %v2623, 0.0
        %v2700 = vmax.f32 %v2628, 0.0
        %v2701 = vmax.f32 %v2631, 0.0
        %v2702 = vmax.f32 %v2636, 0.0
        %v2703 = vmax.f32 %v2639, 0.0
        %v2704 = vmax.f32 %v2644, 0.0
        %v2705 = vmax.f32 %v2647, 0.0
        %v2706 = vmax.f32 %v2652, 0.0
        %v2707 = vmax.f32 %v2655, 0.0
        %v2708 = vmax.f32 %v2660, 0.0
        %v2709 = vmax.f32 %v2663, 0.0
        %v2710 = vmax.f32 %v2668, 0.0
        %v2711 = vmax.f32 %v2671, 0.0
        %v2712 = vmax.f32 %v2676, 0.0
        %v2713 = vmax.f32 %v2679, 0.0
        %s2714 = scalar_lea.vmem [#allocation3], 24
        %2715 = vst.msk [vmem:[%s2714 + $0x1] sm:$0xff] %vm280, %v2682
        %2716 = vst.msk [vmem:[%s2714 + $0x9] sm:$0xff] %vm280, %v2683
        %2717 = vst.msk [vmem:[%s2714 + $0x19] sm:$0xff] %vm280, %v2684
        %2718 = vst.msk [vmem:[%s2714 + $0x21] sm:$0xff] %vm280, %v2685
        %2719 = vst.msk [vmem:[%s2714 + $0x31] sm:$0xff] %vm280, %v2686
        %2720 = vst.msk [vmem:[%s2714 + $0x39] sm:$0xff] %vm280, %v2687
        %2721 = vst.msk [vmem:[%s2714 + $0x49] sm:$0xff] %vm280, %v2688
        %2722 = vst.msk [vmem:[%s2714 + $0x51] sm:$0xff] %vm280, %v2689
        %2723 = vst.msk [vmem:[%s2714 + $0x61] sm:$0xff] %vm280, %v2690
        %2724 = vst.msk [vmem:[%s2714 + $0x69] sm:$0xff] %vm280, %v2691
        %2725 = vst.msk [vmem:[%s2714 + $0x79] sm:$0xff] %vm280, %v2692
        %2726 = vst.msk [vmem:[%s2714 + $0x81] sm:$0xff] %vm280, %v2693
        %2727 = vst.msk [vmem:[%s2714 + $0x91] sm:$0xff] %vm280, %v2694
        %2728 = vst.msk [vmem:[%s2714 + $0x99] sm:$0xff] %vm280, %v2695
        %2729 = vst.msk [vmem:[%s2714 + $0xa9] sm:$0xff] %vm280, %v2696
        %2730 = vst.msk [vmem:[%s2714 + $0xb1] sm:$0xff] %vm280, %v2697
        %2731 = vst.msk [vmem:[%s2714 + $0xc1] sm:$0xff] %vm280, %v2698
        %2732 = vst.msk [vmem:[%s2714 + $0xc9] sm:$0xff] %vm280, %v2699
        %2733 = vst.msk [vmem:[%s2714 + $0xd9] sm:$0xff] %vm280, %v2700
        %2734 = vst.msk [vmem:[%s2714 + $0xe1] sm:$0xff] %vm280, %v2701
        %2735 = vst.msk [vmem:[%s2714 + $0xf1] sm:$0xff] %vm280, %v2702
        %2736 = vst.msk [vmem:[%s2714 + $0xf9] sm:$0xff] %vm280, %v2703
        %2737 = vst.msk [vmem:[%s2714 + $0x109] sm:$0xff] %vm280, %v2704
        %2738 = vst.msk [vmem:[%s2714 + $0x111] sm:$0xff] %vm280, %v2705
        %2739 = vst.msk [vmem:[%s2714 + $0x121] sm:$0xff] %vm280, %v2706
        %2740 = vst.msk [vmem:[%s2714 + $0x129] sm:$0xff] %vm280, %v2707
        %2741 = vst.msk [vmem:[%s2714 + $0x139] sm:$0xff] %vm280, %v2708
        %2742 = vst.msk [vmem:[%s2714 + $0x141] sm:$0xff] %vm280, %v2709
        %2743 = vst.msk [vmem:[%s2714 + $0x151] sm:$0xff] %vm280, %v2710
        %2744 = vst.msk [vmem:[%s2714 + $0x159] sm:$0xff] %vm280, %v2711
        %2745 = vst.msk [vmem:[%s2714 + $0x169] sm:$0xff] %vm280, %v2712
        %2746 = vst.msk [vmem:[%s2714 + $0x171] sm:$0xff] %vm280, %v2713
        %v2747 = vld [vmem:[#allocation3] sm:$0xff]
        %v2748 = vld [vmem:[#allocation3 + $0x8] sm:$0xff]
        %v2749 = vld [vmem:[#allocation3 + $0x18] sm:$0xff]
        %v2750 = vld [vmem:[#allocation3 + $0x20] sm:$0xff]
        %v2751 = vld [vmem:[#allocation3 + $0x30] sm:$0xff]
        %v2752 = vld [vmem:[#allocation3 + $0x38] sm:$0xff]
        %v2753 = vld [vmem:[#allocation3 + $0x48] sm:$0xff]
        %v2754 = vld [vmem:[#allocation3 + $0x50] sm:$0xff]
        %v2755 = vld [vmem:[#allocation3 + $0x60] sm:$0xff]
        %v2756 = vld [vmem:[#allocation3 + $0x68] sm:$0xff]
        %v2757 = vld [vmem:[#allocation3 + $0x78] sm:$0xff]
        %v2758 = vld [vmem:[#allocation3 + $0x80] sm:$0xff]
        %v2759 = vld [vmem:[#allocation3 + $0x90] sm:$0xff]
        %v2760 = vld [vmem:[#allocation3 + $0x98] sm:$0xff]
        %v2761 = vld [vmem:[#allocation3 + $0xa8] sm:$0xff]
        %v2762 = vld [vmem:[#allocation3 + $0xb0] sm:$0xff]
        %v2763 = vld [vmem:[#allocation3 + $0xc0] sm:$0xff]
        %v2764 = vld [vmem:[#allocation3 + $0xc8] sm:$0xff]
        %v2765 = vld [vmem:[#allocation3 + $0xd8] sm:$0xff]
        %v2766 = vld [vmem:[#allocation3 + $0xe0] sm:$0xff]
        %v2767 = vld [vmem:[#allocation3 + $0xf0] sm:$0xff]
        %v2768 = vld [vmem:[#allocation3 + $0xf8] sm:$0xff]
        %v2769 = vld [vmem:[#allocation3 + $0x108] sm:$0xff]
        %v2770 = vld [vmem:[#allocation3 + $0x110] sm:$0xff]
        %v2771 = vld [vmem:[#allocation3 + $0x120] sm:$0xff]
        %v2772 = vld [vmem:[#allocation3 + $0x128] sm:$0xff]
        %v2773 = vld [vmem:[#allocation3 + $0x138] sm:$0xff]
        %v2774 = vld [vmem:[#allocation3 + $0x140] sm:$0xff]
        %v2775 = vld [vmem:[#allocation3 + $0x150] sm:$0xff]
        %v2776 = vld [vmem:[#allocation3 + $0x158] sm:$0xff]
        %v2777 = vld [vmem:[#allocation3 + $0x168] sm:$0xff]
        %v2778 = vld [vmem:[#allocation3 + $0x170] sm:$0xff]
        %v2779 = vld [vmem:[#allocation3 + $0x1] sm:$0xff]
        %v2780 = vld [vmem:[#allocation3 + $0x9] sm:$0xff]
        %v2781 = vld [vmem:[#allocation3 + $0x19] sm:$0xff]
        %v2782 = vld [vmem:[#allocation3 + $0x21] sm:$0xff]
        %v2783 = vld [vmem:[#allocation3 + $0x31] sm:$0xff]
        %v2784 = vld [vmem:[#allocation3 + $0x39] sm:$0xff]
        %v2785 = vld [vmem:[#allocation3 + $0x49] sm:$0xff]
        %v2786 = vld [vmem:[#allocation3 + $0x51] sm:$0xff]
        %v2787 = vld [vmem:[#allocation3 + $0x61] sm:$0xff]
        %v2788 = vld [vmem:[#allocation3 + $0x69] sm:$0xff]
        %v2789 = vld [vmem:[#allocation3 + $0x79] sm:$0xff]
        %v2790 = vld [vmem:[#allocation3 + $0x81] sm:$0xff]
        %v2791 = vld [vmem:[#allocation3 + $0x91] sm:$0xff]
        %v2792 = vld [vmem:[#allocation3 + $0x99] sm:$0xff]
        %v2793 = vld [vmem:[#allocation3 + $0xa9] sm:$0xff]
        %v2794 = vld [vmem:[#allocation3 + $0xb1] sm:$0xff]
        %v2795 = vld [vmem:[#allocation3 + $0xc1] sm:$0xff]
        %v2796 = vld [vmem:[#allocation3 + $0xc9] sm:$0xff]
        %v2797 = vld [vmem:[#allocation3 + $0xd9] sm:$0xff]
        %v2798 = vld [vmem:[#allocation3 + $0xe1] sm:$0xff]
        %v2799 = vld [vmem:[#allocation3 + $0xf1] sm:$0xff]
        %v2800 = vld [vmem:[#allocation3 + $0xf9] sm:$0xff]
        %v2801 = vld [vmem:[#allocation3 + $0x109] sm:$0xff]
        %v2802 = vld [vmem:[#allocation3 + $0x111] sm:$0xff]
        %v2803 = vld [vmem:[#allocation3 + $0x121] sm:$0xff]
        %v2804 = vld [vmem:[#allocation3 + $0x129] sm:$0xff]
        %v2805 = vld [vmem:[#allocation3 + $0x139] sm:$0xff]
        %v2806 = vld [vmem:[#allocation3 + $0x141] sm:$0xff]
        %v2807 = vld [vmem:[#allocation3 + $0x151] sm:$0xff]
        %v2808 = vld [vmem:[#allocation3 + $0x159] sm:$0xff]
        %v2809 = vld [vmem:[#allocation3 + $0x169] sm:$0xff]
        %v2810 = vld [vmem:[#allocation3 + $0x171] sm:$0xff]
        %v2811 = vld [vmem:[#allocation3 + $0x2] sm:$0xff]
        %v2812 = vld [vmem:[#allocation3 + $0xa] sm:$0xff]
        %v2813 = vld [vmem:[#allocation3 + $0x1a] sm:$0xff]
        %v2814 = vld [vmem:[#allocation3 + $0x22] sm:$0xff]
        %v2815 = vld [vmem:[#allocation3 + $0x32] sm:$0xff]
        %v2816 = vld [vmem:[#allocation3 + $0x3a] sm:$0xff]
        %v2817 = vld [vmem:[#allocation3 + $0x4a] sm:$0xff]
        %v2818 = vld [vmem:[#allocation3 + $0x52] sm:$0xff]
        %v2819 = vld [vmem:[#allocation3 + $0x62] sm:$0xff]
        %v2820 = vld [vmem:[#allocation3 + $0x6a] sm:$0xff]
        %v2821 = vld [vmem:[#allocation3 + $0x7a] sm:$0xff]
        %v2822 = vld [vmem:[#allocation3 + $0x82] sm:$0xff]
        %v2823 = vld [vmem:[#allocation3 + $0x92] sm:$0xff]
        %v2824 = vld [vmem:[#allocation3 + $0x9a] sm:$0xff]
        %v2825 = vld [vmem:[#allocation3 + $0xaa] sm:$0xff]
        %v2826 = vld [vmem:[#allocation3 + $0xb2] sm:$0xff]
        %v2827 = vld [vmem:[#allocation3 + $0xc2] sm:$0xff]
        %v2828 = vld [vmem:[#allocation3 + $0xca] sm:$0xff]
        %v2829 = vld [vmem:[#allocation3 + $0xda] sm:$0xff]
        %v2830 = vld [vmem:[#allocation3 + $0xe2] sm:$0xff]
        %v2831 = vld [vmem:[#allocation3 + $0xf2] sm:$0xff]
        %v2832 = vld [vmem:[#allocation3 + $0xfa] sm:$0xff]
        %v2833 = vld [vmem:[#allocation3 + $0x10a] sm:$0xff]
        %v2834 = vld [vmem:[#allocation3 + $0x112] sm:$0xff]
        %v2835 = vld [vmem:[#allocation3 + $0x122] sm:$0xff]
        %v2836 = vld [vmem:[#allocation3 + $0x12a] sm:$0xff]
        %v2837 = vld [vmem:[#allocation3 + $0x13a] sm:$0xff]
        %v2838 = vld [vmem:[#allocation3 + $0x142] sm:$0xff]
        %v2839 = vld [vmem:[#allocation3 + $0x152] sm:$0xff]
        %v2840 = vld [vmem:[#allocation3 + $0x15a] sm:$0xff]
        %v2841 = vld [vmem:[#allocation3 + $0x16a] sm:$0xff]
        %v2842 = vld [vmem:[#allocation3 + $0x172] sm:$0xff]
        %v2843 = vld [vmem:[%s2714] sm:$0xff]
        %v2844 = vld [vmem:[%s2714 + $0x8] sm:$0xff]
        %v2845 = vld [vmem:[%s2714 + $0x18] sm:$0xff]
        %v2846 = vld [vmem:[%s2714 + $0x20] sm:$0xff]
        %v2847 = vld [vmem:[%s2714 + $0x30] sm:$0xff]
        %v2848 = vld [vmem:[%s2714 + $0x38] sm:$0xff]
        %v2849 = vld [vmem:[%s2714 + $0x48] sm:$0xff]
        %v2850 = vld [vmem:[%s2714 + $0x50] sm:$0xff]
        %v2851 = vld [vmem:[%s2714 + $0x60] sm:$0xff]
        %v2852 = vld [vmem:[%s2714 + $0x68] sm:$0xff]
        %v2853 = vld [vmem:[%s2714 + $0x78] sm:$0xff]
        %v2854 = vld [vmem:[%s2714 + $0x80] sm:$0xff]
        %v2855 = vld [vmem:[%s2714 + $0x90] sm:$0xff]
        %v2856 = vld [vmem:[%s2714 + $0x98] sm:$0xff]
        %v2857 = vld [vmem:[%s2714 + $0xa8] sm:$0xff]
        %v2858 = vld [vmem:[%s2714 + $0xb0] sm:$0xff]
        %v2859 = vld [vmem:[%s2714 + $0xc0] sm:$0xff]
        %v2860 = vld [vmem:[%s2714 + $0xc8] sm:$0xff]
        %v2861 = vld [vmem:[%s2714 + $0xd8] sm:$0xff]
        %v2862 = vld [vmem:[%s2714 + $0xe0] sm:$0xff]
        %v2863 = vld [vmem:[%s2714 + $0xf0] sm:$0xff]
        %v2864 = vld [vmem:[%s2714 + $0xf8] sm:$0xff]
        %v2865 = vld [vmem:[%s2714 + $0x108] sm:$0xff]
        %v2866 = vld [vmem:[%s2714 + $0x110] sm:$0xff]
        %v2867 = vld [vmem:[%s2714 + $0x120] sm:$0xff]
        %v2868 = vld [vmem:[%s2714 + $0x128] sm:$0xff]
        %v2869 = vld [vmem:[%s2714 + $0x138] sm:$0xff]
        %v2870 = vld [vmem:[%s2714 + $0x140] sm:$0xff]
        %v2871 = vld [vmem:[%s2714 + $0x150] sm:$0xff]
        %v2872 = vld [vmem:[%s2714 + $0x158] sm:$0xff]
        %v2873 = vld [vmem:[%s2714 + $0x168] sm:$0xff]
        %v2874 = vld [vmem:[%s2714 + $0x170] sm:$0xff]
        %v2875 = vld [vmem:[%s2714 + $0x1] sm:$0xff]
        %v2876 = vld [vmem:[%s2714 + $0x9] sm:$0xff]
        %v2877 = vld [vmem:[%s2714 + $0x19] sm:$0xff]
        %v2878 = vld [vmem:[%s2714 + $0x21] sm:$0xff]
        %v2879 = vld [vmem:[%s2714 + $0x31] sm:$0xff]
        %v2880 = vld [vmem:[%s2714 + $0x39] sm:$0xff]
        %v2881 = vld [vmem:[%s2714 + $0x49] sm:$0xff]
        %v2882 = vld [vmem:[%s2714 + $0x51] sm:$0xff]
        %v2883 = vld [vmem:[%s2714 + $0x61] sm:$0xff]
        %v2884 = vld [vmem:[%s2714 + $0x69] sm:$0xff]
        %v2885 = vld [vmem:[%s2714 + $0x79] sm:$0xff]
        %v2886 = vld [vmem:[%s2714 + $0x81] sm:$0xff]
        %v2887 = vld [vmem:[%s2714 + $0x91] sm:$0xff]
        %v2888 = vld [vmem:[%s2714 + $0x99] sm:$0xff]
        %v2889 = vld [vmem:[%s2714 + $0xa9] sm:$0xff]
        %v2890 = vld [vmem:[%s2714 + $0xb1] sm:$0xff]
        %v2891 = vld [vmem:[%s2714 + $0xc1] sm:$0xff]
        %v2892 = vld [vmem:[%s2714 + $0xc9] sm:$0xff]
        %v2893 = vld [vmem:[%s2714 + $0xd9] sm:$0xff]
        %v2894 = vld [vmem:[%s2714 + $0xe1] sm:$0xff]
        %v2895 = vld [vmem:[%s2714 + $0xf1] sm:$0xff]
        %v2896 = vld [vmem:[%s2714 + $0xf9] sm:$0xff]
        %v2897 = vld [vmem:[%s2714 + $0x109] sm:$0xff]
        %v2898 = vld [vmem:[%s2714 + $0x111] sm:$0xff]
        %v2899 = vld [vmem:[%s2714 + $0x121] sm:$0xff]
        %v2900 = vld [vmem:[%s2714 + $0x129] sm:$0xff]
        %v2901 = vld [vmem:[%s2714 + $0x139] sm:$0xff]
        %v2902 = vld [vmem:[%s2714 + $0x141] sm:$0xff]
        %v2903 = vld [vmem:[%s2714 + $0x151] sm:$0xff]
        %v2904 = vld [vmem:[%s2714 + $0x159] sm:$0xff]
        %v2905 = vld [vmem:[%s2714 + $0x169] sm:$0xff]
        %v2906 = vld [vmem:[%s2714 + $0x171] sm:$0xff]
        %v2907 = vld [vmem:[%s2714 + $0x2] sm:$0xff]
        %v2908 = vld [vmem:[%s2714 + $0xa] sm:$0xff]
        %v2909 = vld [vmem:[%s2714 + $0x1a] sm:$0xff]
        %v2910 = vld [vmem:[%s2714 + $0x22] sm:$0xff]
        %v2911 = vld [vmem:[%s2714 + $0x32] sm:$0xff]
        %v2912 = vld [vmem:[%s2714 + $0x3a] sm:$0xff]
        %v2913 = vld [vmem:[%s2714 + $0x4a] sm:$0xff]
        %v2914 = vld [vmem:[%s2714 + $0x52] sm:$0xff]
        %v2915 = vld [vmem:[%s2714 + $0x62] sm:$0xff]
        %v2916 = vld [vmem:[%s2714 + $0x6a] sm:$0xff]
        %v2917 = vld [vmem:[%s2714 + $0x7a] sm:$0xff]
        %v2918 = vld [vmem:[%s2714 + $0x82] sm:$0xff]
        %v2919 = vld [vmem:[%s2714 + $0x92] sm:$0xff]
        %v2920 = vld [vmem:[%s2714 + $0x9a] sm:$0xff]
        %v2921 = vld [vmem:[%s2714 + $0xaa] sm:$0xff]
        %v2922 = vld [vmem:[%s2714 + $0xb2] sm:$0xff]
        %v2923 = vld [vmem:[%s2714 + $0xc2] sm:$0xff]
        %v2924 = vld [vmem:[%s2714 + $0xca] sm:$0xff]
        %v2925 = vld [vmem:[%s2714 + $0xda] sm:$0xff]
        %v2926 = vld [vmem:[%s2714 + $0xe2] sm:$0xff]
        %v2927 = vld [vmem:[%s2714 + $0xf2] sm:$0xff]
        %v2928 = vld [vmem:[%s2714 + $0xfa] sm:$0xff]
        %v2929 = vld [vmem:[%s2714 + $0x10a] sm:$0xff]
        %v2930 = vld [vmem:[%s2714 + $0x112] sm:$0xff]
        %v2931 = vld [vmem:[%s2714 + $0x122] sm:$0xff]
        %v2932 = vld [vmem:[%s2714 + $0x12a] sm:$0xff]
        %v2933 = vld [vmem:[%s2714 + $0x13a] sm:$0xff]
        %v2934 = vld [vmem:[%s2714 + $0x142] sm:$0xff]
        %v2935 = vld [vmem:[%s2714 + $0x152] sm:$0xff]
        %v2936 = vld [vmem:[%s2714 + $0x15a] sm:$0xff]
        %v2937 = vld [vmem:[%s2714 + $0x16a] sm:$0xff]
        %v2938 = vld [vmem:[%s2714 + $0x172] sm:$0xff]
        %s2939 = scalar_lea.vmem [#allocation3], 48
        %v2940 = vld [vmem:[%s2939] sm:$0xff]
        %v2941 = vld [vmem:[%s2939 + $0x8] sm:$0xff]
        %v2942 = vld [vmem:[%s2939 + $0x18] sm:$0xff]
        %v2943 = vld [vmem:[%s2939 + $0x20] sm:$0xff]
        %v2944 = vld [vmem:[%s2939 + $0x30] sm:$0xff]
        %v2945 = vld [vmem:[%s2939 + $0x38] sm:$0xff]
        %v2946 = vld [vmem:[%s2939 + $0x48] sm:$0xff]
        %v2947 = vld [vmem:[%s2939 + $0x50] sm:$0xff]
        %v2948 = vld [vmem:[%s2939 + $0x60] sm:$0xff]
        %v2949 = vld [vmem:[%s2939 + $0x68] sm:$0xff]
        %v2950 = vld [vmem:[%s2939 + $0x78] sm:$0xff]
        %v2951 = vld [vmem:[%s2939 + $0x80] sm:$0xff]
        %v2952 = vld [vmem:[%s2939 + $0x90] sm:$0xff]
        %v2953 = vld [vmem:[%s2939 + $0x98] sm:$0xff]
        %v2954 = vld [vmem:[%s2939 + $0xa8] sm:$0xff]
        %v2955 = vld [vmem:[%s2939 + $0xb0] sm:$0xff]
        %v2956 = vld [vmem:[%s2939 + $0xc0] sm:$0xff]
        %v2957 = vld [vmem:[%s2939 + $0xc8] sm:$0xff]
        %v2958 = vld [vmem:[%s2939 + $0xd8] sm:$0xff]
        %v2959 = vld [vmem:[%s2939 + $0xe0] sm:$0xff]
        %v2960 = vld [vmem:[%s2939 + $0xf0] sm:$0xff]
        %v2961 = vld [vmem:[%s2939 + $0xf8] sm:$0xff]
        %v2962 = vld [vmem:[%s2939 + $0x108] sm:$0xff]
        %v2963 = vld [vmem:[%s2939 + $0x110] sm:$0xff]
        %v2964 = vld [vmem:[%s2939 + $0x120] sm:$0xff]
        %v2965 = vld [vmem:[%s2939 + $0x128] sm:$0xff]
        %v2966 = vld [vmem:[%s2939 + $0x138] sm:$0xff]
        %v2967 = vld [vmem:[%s2939 + $0x140] sm:$0xff]
        %v2968 = vld [vmem:[%s2939 + $0x150] sm:$0xff]
        %v2969 = vld [vmem:[%s2939 + $0x158] sm:$0xff]
        %v2970 = vld [vmem:[%s2939 + $0x168] sm:$0xff]
        %v2971 = vld [vmem:[%s2939 + $0x170] sm:$0xff]
        %v2972 = vld [vmem:[%s2939 + $0x1] sm:$0xff]
        %v2973 = vld [vmem:[%s2939 + $0x9] sm:$0xff]
        %v2974 = vld [vmem:[%s2939 + $0x19] sm:$0xff]
        %v2975 = vld [vmem:[%s2939 + $0x21] sm:$0xff]
        %v2976 = vld [vmem:[%s2939 + $0x31] sm:$0xff]
        %v2977 = vld [vmem:[%s2939 + $0x39] sm:$0xff]
        %v2978 = vld [vmem:[%s2939 + $0x49] sm:$0xff]
        %v2979 = vld [vmem:[%s2939 + $0x51] sm:$0xff]
        %v2980 = vld [vmem:[%s2939 + $0x61] sm:$0xff]
        %v2981 = vld [vmem:[%s2939 + $0x69] sm:$0xff]
        %v2982 = vld [vmem:[%s2939 + $0x79] sm:$0xff]
        %v2983 = vld [vmem:[%s2939 + $0x81] sm:$0xff]
        %v2984 = vld [vmem:[%s2939 + $0x91] sm:$0xff]
        %v2985 = vld [vmem:[%s2939 + $0x99] sm:$0xff]
        %v2986 = vld [vmem:[%s2939 + $0xa9] sm:$0xff]
        %v2987 = vld [vmem:[%s2939 + $0xb1] sm:$0xff]
        %v2988 = vld [vmem:[%s2939 + $0xc1] sm:$0xff]
        %v2989 = vld [vmem:[%s2939 + $0xc9] sm:$0xff]
        %v2990 = vld [vmem:[%s2939 + $0xd9] sm:$0xff]
        %v2991 = vld [vmem:[%s2939 + $0xe1] sm:$0xff]
        %v2992 = vld [vmem:[%s2939 + $0xf1] sm:$0xff]
        %v2993 = vld [vmem:[%s2939 + $0xf9] sm:$0xff]
        %v2994 = vld [vmem:[%s2939 + $0x109] sm:$0xff]
        %v2995 = vld [vmem:[%s2939 + $0x111] sm:$0xff]
        %v2996 = vld [vmem:[%s2939 + $0x121] sm:$0xff]
        %v2997 = vld [vmem:[%s2939 + $0x129] sm:$0xff]
        %v2998 = vld [vmem:[%s2939 + $0x139] sm:$0xff]
        %v2999 = vld [vmem:[%s2939 + $0x141] sm:$0xff]
        %v3000 = vld [vmem:[%s2939 + $0x151] sm:$0xff]
        %v3001 = vld [vmem:[%s2939 + $0x159] sm:$0xff]
        %v3002 = vld [vmem:[%s2939 + $0x169] sm:$0xff]
        %v3003 = vld [vmem:[%s2939 + $0x171] sm:$0xff]
        %v3004 = vld [vmem:[%s2939 + $0x2] sm:$0xff]
        %v3005 = vld [vmem:[%s2939 + $0xa] sm:$0xff]
        %v3006 = vld [vmem:[%s2939 + $0x1a] sm:$0xff]
        %v3007 = vld [vmem:[%s2939 + $0x22] sm:$0xff]
        %v3008 = vld [vmem:[%s2939 + $0x32] sm:$0xff]
        %v3009 = vld [vmem:[%s2939 + $0x3a] sm:$0xff]
        %v3010 = vld [vmem:[%s2939 + $0x4a] sm:$0xff]
        %v3011 = vld [vmem:[%s2939 + $0x52] sm:$0xff]
        %v3012 = vld [vmem:[%s2939 + $0x62] sm:$0xff]
        %v3013 = vld [vmem:[%s2939 + $0x6a] sm:$0xff]
        %v3014 = vld [vmem:[%s2939 + $0x7a] sm:$0xff]
        %v3015 = vld [vmem:[%s2939 + $0x82] sm:$0xff]
        %v3016 = vld [vmem:[%s2939 + $0x92] sm:$0xff]
        %v3017 = vld [vmem:[%s2939 + $0x9a] sm:$0xff]
        %v3018 = vld [vmem:[%s2939 + $0xaa] sm:$0xff]
        %v3019 = vld [vmem:[%s2939 + $0xb2] sm:$0xff]
        %v3020 = vld [vmem:[%s2939 + $0xc2] sm:$0xff]
        %v3021 = vld [vmem:[%s2939 + $0xca] sm:$0xff]
        %v3022 = vld [vmem:[%s2939 + $0xda] sm:$0xff]
        %v3023 = vld [vmem:[%s2939 + $0xe2] sm:$0xff]
        %v3024 = vld [vmem:[%s2939 + $0xf2] sm:$0xff]
        %v3025 = vld [vmem:[%s2939 + $0xfa] sm:$0xff]
        %v3026 = vld [vmem:[%s2939 + $0x10a] sm:$0xff]
        %v3027 = vld [vmem:[%s2939 + $0x112] sm:$0xff]
        %v3028 = vld [vmem:[%s2939 + $0x122] sm:$0xff]
        %v3029 = vld [vmem:[%s2939 + $0x12a] sm:$0xff]
        %v3030 = vld [vmem:[%s2939 + $0x13a] sm:$0xff]
        %v3031 = vld [vmem:[%s2939 + $0x142] sm:$0xff]
        %v3032 = vld [vmem:[%s2939 + $0x152] sm:$0xff]
        %v3033 = vld [vmem:[%s2939 + $0x15a] sm:$0xff]
        %v3034 = vld [vmem:[%s2939 + $0x16a] sm:$0xff]
        %v3035 = vld [vmem:[%s2939 + $0x172] sm:$0xff]
        %3068 = vrot.lane.b32.xlu0 %v2779, 32
        %v3069 = vpop.permute.xlu0 %3068
        %3070 = vrot.lane.b32.xlu0 %v2780, 32
        %v3071 = vpop.permute.xlu0 %3070
        %3072 = vrot.lane.b32.xlu0 %v2781, 32
        %v3073 = vpop.permute.xlu0 %3072
        %3074 = vrot.lane.b32.xlu0 %v2782, 32
        %v3075 = vpop.permute.xlu0 %3074
        %3076 = vrot.lane.b32.xlu0 %v2783, 32
        %v3077 = vpop.permute.xlu0 %3076
        %3078 = vrot.lane.b32.xlu0 %v2784, 32
        %v3079 = vpop.permute.xlu0 %3078
        %3080 = vrot.lane.b32.xlu0 %v2785, 32
        %v3081 = vpop.permute.xlu0 %3080
        %3082 = vrot.lane.b32.xlu0 %v2786, 32
        %v3083 = vpop.permute.xlu0 %3082
        %3084 = vrot.lane.b32.xlu0 %v2787, 32
        %v3085 = vpop.permute.xlu0 %3084
        %3086 = vrot.lane.b32.xlu0 %v2788, 32
        %v3087 = vpop.permute.xlu0 %3086
        %3088 = vrot.lane.b32.xlu0 %v2789, 32
        %v3089 = vpop.permute.xlu0 %3088
        %3090 = vrot.lane.b32.xlu0 %v2790, 32
        %v3091 = vpop.permute.xlu0 %3090
        %3092 = vrot.lane.b32.xlu0 %v2791, 32
        %v3093 = vpop.permute.xlu0 %3092
        %3094 = vrot.lane.b32.xlu0 %v2792, 32
        %v3095 = vpop.permute.xlu0 %3094
        %3096 = vrot.lane.b32.xlu0 %v2793, 32
        %v3097 = vpop.permute.xlu0 %3096
        %3098 = vrot.lane.b32.xlu0 %v2794, 32
        %v3099 = vpop.permute.xlu0 %3098
        %3100 = vrot.lane.b32.xlu0 %v2795, 32
        %v3101 = vpop.permute.xlu0 %3100
        %3102 = vrot.lane.b32.xlu0 %v2796, 32
        %v3103 = vpop.permute.xlu0 %3102
        %3104 = vrot.lane.b32.xlu0 %v2797, 32
        %v3105 = vpop.permute.xlu0 %3104
        %3106 = vrot.lane.b32.xlu0 %v2798, 32
        %v3107 = vpop.permute.xlu0 %3106
        %3108 = vrot.lane.b32.xlu0 %v2799, 32
        %v3109 = vpop.permute.xlu0 %3108
        %3110 = vrot.lane.b32.xlu0 %v2800, 32
        %v3111 = vpop.permute.xlu0 %3110
        %3112 = vrot.lane.b32.xlu0 %v2801, 32
        %v3113 = vpop.permute.xlu0 %3112
        %3114 = vrot.lane.b32.xlu0 %v2802, 32
        %v3115 = vpop.permute.xlu0 %3114
        %3116 = vrot.lane.b32.xlu0 %v2803, 32
        %v3117 = vpop.permute.xlu0 %3116
        %3118 = vrot.lane.b32.xlu0 %v2804, 32
        %v3119 = vpop.permute.xlu0 %3118
        %3120 = vrot.lane.b32.xlu0 %v2805, 32
        %v3121 = vpop.permute.xlu0 %3120
        %3122 = vrot.lane.b32.xlu0 %v2806, 32
        %v3123 = vpop.permute.xlu0 %3122
        %3124 = vrot.lane.b32.xlu0 %v2807, 32
        %v3125 = vpop.permute.xlu0 %3124
        %3126 = vrot.lane.b32.xlu0 %v2808, 32
        %v3127 = vpop.permute.xlu0 %3126
        %3128 = vrot.lane.b32.xlu0 %v2809, 32
        %v3129 = vpop.permute.xlu0 %3128
        %3130 = vrot.lane.b32.xlu0 %v2810, 32
        %v3131 = vpop.permute.xlu0 %3130
        %3196 = vrot.lane.b32.xlu0 %v2811, 64
        %v3197 = vpop.permute.xlu0 %3196
        %3198 = vrot.lane.b32.xlu0 %v2812, 64
        %v3199 = vpop.permute.xlu0 %3198
        %3200 = vrot.lane.b32.xlu0 %v2813, 64
        %v3201 = vpop.permute.xlu0 %3200
        %3202 = vrot.lane.b32.xlu0 %v2814, 64
        %v3203 = vpop.permute.xlu0 %3202
        %3204 = vrot.lane.b32.xlu0 %v2815, 64
        %v3205 = vpop.permute.xlu0 %3204
        %3206 = vrot.lane.b32.xlu0 %v2816, 64
        %v3207 = vpop.permute.xlu0 %3206
        %3208 = vrot.lane.b32.xlu0 %v2817, 64
        %v3209 = vpop.permute.xlu0 %3208
        %3210 = vrot.lane.b32.xlu0 %v2818, 64
        %v3211 = vpop.permute.xlu0 %3210
        %3212 = vrot.lane.b32.xlu0 %v2819, 64
        %v3213 = vpop.permute.xlu0 %3212
        %3214 = vrot.lane.b32.xlu0 %v2820, 64
        %v3215 = vpop.permute.xlu0 %3214
        %3216 = vrot.lane.b32.xlu0 %v2821, 64
        %v3217 = vpop.permute.xlu0 %3216
        %3218 = vrot.lane.b32.xlu0 %v2822, 64
        %v3219 = vpop.permute.xlu0 %3218
        %3220 = vrot.lane.b32.xlu0 %v2823, 64
        %v3221 = vpop.permute.xlu0 %3220
        %3222 = vrot.lane.b32.xlu0 %v2824, 64
        %v3223 = vpop.permute.xlu0 %3222
        %3224 = vrot.lane.b32.xlu0 %v2825, 64
        %v3225 = vpop.permute.xlu0 %3224
        %3226 = vrot.lane.b32.xlu0 %v2826, 64
        %v3227 = vpop.permute.xlu0 %3226
        %3228 = vrot.lane.b32.xlu0 %v2827, 64
        %v3229 = vpop.permute.xlu0 %3228
        %3230 = vrot.lane.b32.xlu0 %v2828, 64
        %v3231 = vpop.permute.xlu0 %3230
        %3232 = vrot.lane.b32.xlu0 %v2829, 64
        %v3233 = vpop.permute.xlu0 %3232
        %3234 = vrot.lane.b32.xlu0 %v2830, 64
        %v3235 = vpop.permute.xlu0 %3234
        %3236 = vrot.lane.b32.xlu0 %v2831, 64
        %v3237 = vpop.permute.xlu0 %3236
        %3238 = vrot.lane.b32.xlu0 %v2832, 64
        %v3239 = vpop.permute.xlu0 %3238
        %3240 = vrot.lane.b32.xlu0 %v2833, 64
        %v3241 = vpop.permute.xlu0 %3240
        %3242 = vrot.lane.b32.xlu0 %v2834, 64
        %v3243 = vpop.permute.xlu0 %3242
        %3244 = vrot.lane.b32.xlu0 %v2835, 64
        %v3245 = vpop.permute.xlu0 %3244
        %3246 = vrot.lane.b32.xlu0 %v2836, 64
        %v3247 = vpop.permute.xlu0 %3246
        %3248 = vrot.lane.b32.xlu0 %v2837, 64
        %v3249 = vpop.permute.xlu0 %3248
        %3250 = vrot.lane.b32.xlu0 %v2838, 64
        %v3251 = vpop.permute.xlu0 %3250
        %3252 = vrot.lane.b32.xlu0 %v2839, 64
        %v3253 = vpop.permute.xlu0 %3252
        %3254 = vrot.lane.b32.xlu0 %v2840, 64
        %v3255 = vpop.permute.xlu0 %3254
        %3256 = vrot.lane.b32.xlu0 %v2841, 64
        %v3257 = vpop.permute.xlu0 %3256
        %3258 = vrot.lane.b32.xlu0 %v2842, 64
        %v3259 = vpop.permute.xlu0 %3258
        %3324 = vrot.lane.b32.xlu0 %v2843, 96
        %v3325 = vpop.permute.xlu0 %3324
        %3326 = vrot.lane.b32.xlu0 %v2844, 96
        %v3327 = vpop.permute.xlu0 %3326
        %3328 = vrot.lane.b32.xlu0 %v2845, 96
        %v3329 = vpop.permute.xlu0 %3328
        %3330 = vrot.lane.b32.xlu0 %v2846, 96
        %v3331 = vpop.permute.xlu0 %3330
        %3332 = vrot.lane.b32.xlu0 %v2847, 96
        %v3333 = vpop.permute.xlu0 %3332
        %3334 = vrot.lane.b32.xlu0 %v2848, 96
        %v3335 = vpop.permute.xlu0 %3334
        %3336 = vrot.lane.b32.xlu0 %v2849, 96
        %v3337 = vpop.permute.xlu0 %3336
        %3338 = vrot.lane.b32.xlu0 %v2850, 96
        %v3339 = vpop.permute.xlu0 %3338
        %3340 = vrot.lane.b32.xlu0 %v2851, 96
        %v3341 = vpop.permute.xlu0 %3340
        %3342 = vrot.lane.b32.xlu0 %v2852, 96
        %v3343 = vpop.permute.xlu0 %3342
        %3344 = vrot.lane.b32.xlu0 %v2853, 96
        %v3345 = vpop.permute.xlu0 %3344
        %3346 = vrot.lane.b32.xlu0 %v2854, 96
        %v3347 = vpop.permute.xlu0 %3346
        %3348 = vrot.lane.b32.xlu0 %v2855, 96
        %v3349 = vpop.permute.xlu0 %3348
        %3350 = vrot.lane.b32.xlu0 %v2856, 96
        %v3351 = vpop.permute.xlu0 %3350
        %3352 = vrot.lane.b32.xlu0 %v2857, 96
        %v3353 = vpop.permute.xlu0 %3352
        %3354 = vrot.lane.b32.xlu0 %v2858, 96
        %v3355 = vpop.permute.xlu0 %3354
        %3356 = vrot.lane.b32.xlu0 %v2859, 96
        %v3357 = vpop.permute.xlu0 %3356
        %3358 = vrot.lane.b32.xlu0 %v2860, 96
        %v3359 = vpop.permute.xlu0 %3358
        %3360 = vrot.lane.b32.xlu0 %v2861, 96
        %v3361 = vpop.permute.xlu0 %3360
        %3362 = vrot.lane.b32.xlu0 %v2862, 96
        %v3363 = vpop.permute.xlu0 %3362
        %3364 = vrot.lane.b32.xlu0 %v2863, 96
        %v3365 = vpop.permute.xlu0 %3364
        %3366 = vrot.lane.b32.xlu0 %v2864, 96
        %v3367 = vpop.permute.xlu0 %3366
        %3368 = vrot.lane.b32.xlu0 %v2865, 96
        %v3369 = vpop.permute.xlu0 %3368
        %3370 = vrot.lane.b32.xlu0 %v2866, 96
        %v3371 = vpop.permute.xlu0 %3370
        %3372 = vrot.lane.b32.xlu0 %v2867, 96
        %v3373 = vpop.permute.xlu0 %3372
        %3374 = vrot.lane.b32.xlu0 %v2868, 96
        %v3375 = vpop.permute.xlu0 %3374
        %3376 = vrot.lane.b32.xlu0 %v2869, 96
        %v3377 = vpop.permute.xlu0 %3376
        %3378 = vrot.lane.b32.xlu0 %v2870, 96
        %v3379 = vpop.permute.xlu0 %3378
        %3380 = vrot.lane.b32.xlu0 %v2871, 96
        %v3381 = vpop.permute.xlu0 %3380
        %3382 = vrot.lane.b32.xlu0 %v2872, 96
        %v3383 = vpop.permute.xlu0 %3382
        %3384 = vrot.lane.b32.xlu0 %v2873, 96
        %v3385 = vpop.permute.xlu0 %3384
        %3386 = vrot.lane.b32.xlu0 %v2874, 96
        %v3387 = vpop.permute.xlu0 %3386
        %3452 = vrot.lane.b32.xlu0 %v2907, 32
        %v3453 = vpop.permute.xlu0 %3452
        %3454 = vrot.lane.b32.xlu0 %v2908, 32
        %v3455 = vpop.permute.xlu0 %3454
        %3456 = vrot.lane.b32.xlu0 %v2909, 32
        %v3457 = vpop.permute.xlu0 %3456
        %3458 = vrot.lane.b32.xlu0 %v2910, 32
        %v3459 = vpop.permute.xlu0 %3458
        %3460 = vrot.lane.b32.xlu0 %v2911, 32
        %v3461 = vpop.permute.xlu0 %3460
        %3462 = vrot.lane.b32.xlu0 %v2912, 32
        %v3463 = vpop.permute.xlu0 %3462
        %3464 = vrot.lane.b32.xlu0 %v2913, 32
        %v3465 = vpop.permute.xlu0 %3464
        %3466 = vrot.lane.b32.xlu0 %v2914, 32
        %v3467 = vpop.permute.xlu0 %3466
        %3468 = vrot.lane.b32.xlu0 %v2915, 32
        %v3469 = vpop.permute.xlu0 %3468
        %3470 = vrot.lane.b32.xlu0 %v2916, 32
        %v3471 = vpop.permute.xlu0 %3470
        %3472 = vrot.lane.b32.xlu0 %v2917, 32
        %v3473 = vpop.permute.xlu0 %3472
        %3474 = vrot.lane.b32.xlu0 %v2918, 32
        %v3475 = vpop.permute.xlu0 %3474
        %3476 = vrot.lane.b32.xlu0 %v2919, 32
        %v3477 = vpop.permute.xlu0 %3476
        %3478 = vrot.lane.b32.xlu0 %v2920, 32
        %v3479 = vpop.permute.xlu0 %3478
        %3480 = vrot.lane.b32.xlu0 %v2921, 32
        %v3481 = vpop.permute.xlu0 %3480
        %3482 = vrot.lane.b32.xlu0 %v2922, 32
        %v3483 = vpop.permute.xlu0 %3482
        %3484 = vrot.lane.b32.xlu0 %v2923, 32
        %v3485 = vpop.permute.xlu0 %3484
        %3486 = vrot.lane.b32.xlu0 %v2924, 32
        %v3487 = vpop.permute.xlu0 %3486
        %3488 = vrot.lane.b32.xlu0 %v2925, 32
        %v3489 = vpop.permute.xlu0 %3488
        %3490 = vrot.lane.b32.xlu0 %v2926, 32
        %v3491 = vpop.permute.xlu0 %3490
        %3492 = vrot.lane.b32.xlu0 %v2927, 32
        %v3493 = vpop.permute.xlu0 %3492
        %3494 = vrot.lane.b32.xlu0 %v2928, 32
        %v3495 = vpop.permute.xlu0 %3494
        %3496 = vrot.lane.b32.xlu0 %v2929, 32
        %v3497 = vpop.permute.xlu0 %3496
        %3498 = vrot.lane.b32.xlu0 %v2930, 32
        %v3499 = vpop.permute.xlu0 %3498
        %3500 = vrot.lane.b32.xlu0 %v2931, 32
        %v3501 = vpop.permute.xlu0 %3500
        %3502 = vrot.lane.b32.xlu0 %v2932, 32
        %v3503 = vpop.permute.xlu0 %3502
        %3504 = vrot.lane.b32.xlu0 %v2933, 32
        %v3505 = vpop.permute.xlu0 %3504
        %3506 = vrot.lane.b32.xlu0 %v2934, 32
        %v3507 = vpop.permute.xlu0 %3506
        %3508 = vrot.lane.b32.xlu0 %v2935, 32
        %v3509 = vpop.permute.xlu0 %3508
        %3510 = vrot.lane.b32.xlu0 %v2936, 32
        %v3511 = vpop.permute.xlu0 %3510
        %3512 = vrot.lane.b32.xlu0 %v2937, 32
        %v3513 = vpop.permute.xlu0 %3512
        %3514 = vrot.lane.b32.xlu0 %v2938, 32
        %v3515 = vpop.permute.xlu0 %3514
        %3580 = vrot.lane.b32.xlu0 %v2940, 64
        %v3581 = vpop.permute.xlu0 %3580
        %3582 = vrot.lane.b32.xlu0 %v2941, 64
        %v3583 = vpop.permute.xlu0 %3582
        %3584 = vrot.lane.b32.xlu0 %v2942, 64
        %v3585 = vpop.permute.xlu0 %3584
        %3586 = vrot.lane.b32.xlu0 %v2943, 64
        %v3587 = vpop.permute.xlu0 %3586
        %3588 = vrot.lane.b32.xlu0 %v2944, 64
        %v3589 = vpop.permute.xlu0 %3588
        %3590 = vrot.lane.b32.xlu0 %v2945, 64
        %v3591 = vpop.permute.xlu0 %3590
        %3592 = vrot.lane.b32.xlu0 %v2946, 64
        %v3593 = vpop.permute.xlu0 %3592
        %3594 = vrot.lane.b32.xlu0 %v2947, 64
        %v3595 = vpop.permute.xlu0 %3594
        %3596 = vrot.lane.b32.xlu0 %v2948, 64
        %v3597 = vpop.permute.xlu0 %3596
        %3598 = vrot.lane.b32.xlu0 %v2949, 64
        %v3599 = vpop.permute.xlu0 %3598
        %3600 = vrot.lane.b32.xlu0 %v2950, 64
        %v3601 = vpop.permute.xlu0 %3600
        %3602 = vrot.lane.b32.xlu0 %v2951, 64
        %v3603 = vpop.permute.xlu0 %3602
        %3604 = vrot.lane.b32.xlu0 %v2952, 64
        %v3605 = vpop.permute.xlu0 %3604
        %3606 = vrot.lane.b32.xlu0 %v2953, 64
        %v3607 = vpop.permute.xlu0 %3606
        %3608 = vrot.lane.b32.xlu0 %v2954, 64
        %v3609 = vpop.permute.xlu0 %3608
        %3610 = vrot.lane.b32.xlu0 %v2955, 64
        %v3611 = vpop.permute.xlu0 %3610
        %3612 = vrot.lane.b32.xlu0 %v2956, 64
        %v3613 = vpop.permute.xlu0 %3612
        %3614 = vrot.lane.b32.xlu0 %v2957, 64
        %v3615 = vpop.permute.xlu0 %3614
        %3616 = vrot.lane.b32.xlu0 %v2958, 64
        %v3617 = vpop.permute.xlu0 %3616
        %3618 = vrot.lane.b32.xlu0 %v2959, 64
        %v3619 = vpop.permute.xlu0 %3618
        %3620 = vrot.lane.b32.xlu0 %v2960, 64
        %v3621 = vpop.permute.xlu0 %3620
        %3622 = vrot.lane.b32.xlu0 %v2961, 64
        %v3623 = vpop.permute.xlu0 %3622
        %3624 = vrot.lane.b32.xlu0 %v2962, 64
        %v3625 = vpop.permute.xlu0 %3624
        %3626 = vrot.lane.b32.xlu0 %v2963, 64
        %v3627 = vpop.permute.xlu0 %3626
        %3628 = vrot.lane.b32.xlu0 %v2964, 64
        %v3629 = vpop.permute.xlu0 %3628
        %3630 = vrot.lane.b32.xlu0 %v2965, 64
        %v3631 = vpop.permute.xlu0 %3630
        %3632 = vrot.lane.b32.xlu0 %v2966, 64
        %v3633 = vpop.permute.xlu0 %3632
        %3634 = vrot.lane.b32.xlu0 %v2967, 64
        %v3635 = vpop.permute.xlu0 %3634
        %3636 = vrot.lane.b32.xlu0 %v2968, 64
        %v3637 = vpop.permute.xlu0 %3636
        %3638 = vrot.lane.b32.xlu0 %v2969, 64
        %v3639 = vpop.permute.xlu0 %3638
        %3640 = vrot.lane.b32.xlu0 %v2970, 64
        %v3641 = vpop.permute.xlu0 %3640
        %3642 = vrot.lane.b32.xlu0 %v2971, 64
        %v3643 = vpop.permute.xlu0 %3642
        %3708 = vrot.lane.b32.xlu0 %v2972, 96
        %v3709 = vpop.permute.xlu0 %3708
        %3710 = vrot.lane.b32.xlu0 %v2973, 96
        %v3711 = vpop.permute.xlu0 %3710
        %3712 = vrot.lane.b32.xlu0 %v2974, 96
        %v3713 = vpop.permute.xlu0 %3712
        %3714 = vrot.lane.b32.xlu0 %v2975, 96
        %v3715 = vpop.permute.xlu0 %3714
        %3716 = vrot.lane.b32.xlu0 %v2976, 96
        %v3717 = vpop.permute.xlu0 %3716
        %3718 = vrot.lane.b32.xlu0 %v2977, 96
        %v3719 = vpop.permute.xlu0 %3718
        %3720 = vrot.lane.b32.xlu0 %v2978, 96
        %v3721 = vpop.permute.xlu0 %3720
        %3722 = vrot.lane.b32.xlu0 %v2979, 96
        %v3723 = vpop.permute.xlu0 %3722
        %3724 = vrot.lane.b32.xlu0 %v2980, 96
        %v3725 = vpop.permute.xlu0 %3724
        %3726 = vrot.lane.b32.xlu0 %v2981, 96
        %v3727 = vpop.permute.xlu0 %3726
        %3728 = vrot.lane.b32.xlu0 %v2982, 96
        %v3729 = vpop.permute.xlu0 %3728
        %3730 = vrot.lane.b32.xlu0 %v2983, 96
        %v3731 = vpop.permute.xlu0 %3730
        %3732 = vrot.lane.b32.xlu0 %v2984, 96
        %v3733 = vpop.permute.xlu0 %3732
        %3734 = vrot.lane.b32.xlu0 %v2985, 96
        %v3735 = vpop.permute.xlu0 %3734
        %3736 = vrot.lane.b32.xlu0 %v2986, 96
        %v3737 = vpop.permute.xlu0 %3736
        %3738 = vrot.lane.b32.xlu0 %v2987, 96
        %v3739 = vpop.permute.xlu0 %3738
        %3740 = vrot.lane.b32.xlu0 %v2988, 96
        %v3741 = vpop.permute.xlu0 %3740
        %3742 = vrot.lane.b32.xlu0 %v2989, 96
        %v3743 = vpop.permute.xlu0 %3742
        %3744 = vrot.lane.b32.xlu0 %v2990, 96
        %v3745 = vpop.permute.xlu0 %3744
        %3746 = vrot.lane.b32.xlu0 %v2991, 96
        %v3747 = vpop.permute.xlu0 %3746
        %3748 = vrot.lane.b32.xlu0 %v2992, 96
        %v3749 = vpop.permute.xlu0 %3748
        %3750 = vrot.lane.b32.xlu0 %v2993, 96
        %v3751 = vpop.permute.xlu0 %3750
        %3752 = vrot.lane.b32.xlu0 %v2994, 96
        %v3753 = vpop.permute.xlu0 %3752
        %3754 = vrot.lane.b32.xlu0 %v2995, 96
        %v3755 = vpop.permute.xlu0 %3754
        %3756 = vrot.lane.b32.xlu0 %v2996, 96
        %v3757 = vpop.permute.xlu0 %3756
        %3758 = vrot.lane.b32.xlu0 %v2997, 96
        %v3759 = vpop.permute.xlu0 %3758
        %3760 = vrot.lane.b32.xlu0 %v2998, 96
        %v3761 = vpop.permute.xlu0 %3760
        %3762 = vrot.lane.b32.xlu0 %v2999, 96
        %v3763 = vpop.permute.xlu0 %3762
        %3764 = vrot.lane.b32.xlu0 %v3000, 96
        %v3765 = vpop.permute.xlu0 %3764
        %3766 = vrot.lane.b32.xlu0 %v3001, 96
        %v3767 = vpop.permute.xlu0 %3766
        %3768 = vrot.lane.b32.xlu0 %v3002, 96
        %v3769 = vpop.permute.xlu0 %3768
        %3770 = vrot.lane.b32.xlu0 %v3003, 96
        %v3771 = vpop.permute.xlu0 %3770
        %v3804 = vsel %vm280, %v2747, %v3069
        %v3805 = vsel %vm280, %v2748, %v3071
        %v3806 = vsel %vm280, %v2749, %v3073
        %v3807 = vsel %vm280, %v2750, %v3075
        %v3808 = vsel %vm280, %v2751, %v3077
        %v3809 = vsel %vm280, %v2752, %v3079
        %v3810 = vsel %vm280, %v2753, %v3081
        %v3811 = vsel %vm280, %v2754, %v3083
        %v3812 = vsel %vm280, %v2755, %v3085
        %v3813 = vsel %vm280, %v2756, %v3087
        %v3814 = vsel %vm280, %v2757, %v3089
        %v3815 = vsel %vm280, %v2758, %v3091
        %v3816 = vsel %vm280, %v2759, %v3093
        %v3817 = vsel %vm280, %v2760, %v3095
        %v3818 = vsel %vm280, %v2761, %v3097
        %v3819 = vsel %vm280, %v2762, %v3099
        %v3820 = vsel %vm280, %v2763, %v3101
        %v3821 = vsel %vm280, %v2764, %v3103
        %v3822 = vsel %vm280, %v2765, %v3105
        %v3823 = vsel %vm280, %v2766, %v3107
        %v3824 = vsel %vm280, %v2767, %v3109
        %v3825 = vsel %vm280, %v2768, %v3111
        %v3826 = vsel %vm280, %v2769, %v3113
        %v3827 = vsel %vm280, %v2770, %v3115
        %v3828 = vsel %vm280, %v2771, %v3117
        %v3829 = vsel %vm280, %v2772, %v3119
        %v3830 = vsel %vm280, %v2773, %v3121
        %v3831 = vsel %vm280, %v2774, %v3123
        %v3832 = vsel %vm280, %v2775, %v3125
        %v3833 = vsel %vm280, %v2776, %v3127
        %v3834 = vsel %vm280, %v2777, %v3129
        %v3835 = vsel %vm280, %v2778, %v3131
        %v3836 = vsel %vm2230, %v3804, %v3197
        %v3837 = vsel %vm2230, %v3805, %v3199
        %v3838 = vsel %vm2230, %v3806, %v3201
        %v3839 = vsel %vm2230, %v3807, %v3203
        %v3840 = vsel %vm2230, %v3808, %v3205
        %v3841 = vsel %vm2230, %v3809, %v3207
        %v3842 = vsel %vm2230, %v3810, %v3209
        %v3843 = vsel %vm2230, %v3811, %v3211
        %v3844 = vsel %vm2230, %v3812, %v3213
        %v3845 = vsel %vm2230, %v3813, %v3215
        %v3846 = vsel %vm2230, %v3814, %v3217
        %v3847 = vsel %vm2230, %v3815, %v3219
        %v3848 = vsel %vm2230, %v3816, %v3221
        %v3849 = vsel %vm2230, %v3817, %v3223
        %v3850 = vsel %vm2230, %v3818, %v3225
        %v3851 = vsel %vm2230, %v3819, %v3227
        %v3852 = vsel %vm2230, %v3820, %v3229
        %v3853 = vsel %vm2230, %v3821, %v3231
        %v3854 = vsel %vm2230, %v3822, %v3233
        %v3855 = vsel %vm2230, %v3823, %v3235
        %v3856 = vsel %vm2230, %v3824, %v3237
        %v3857 = vsel %vm2230, %v3825, %v3239
        %v3858 = vsel %vm2230, %v3826, %v3241
        %v3859 = vsel %vm2230, %v3827, %v3243
        %v3860 = vsel %vm2230, %v3828, %v3245
        %v3861 = vsel %vm2230, %v3829, %v3247
        %v3862 = vsel %vm2230, %v3830, %v3249
        %v3863 = vsel %vm2230, %v3831, %v3251
        %v3864 = vsel %vm2230, %v3832, %v3253
        %v3865 = vsel %vm2230, %v3833, %v3255
        %v3866 = vsel %vm2230, %v3834, %v3257
        %v3867 = vsel %vm2230, %v3835, %v3259
        %v3868 = vsel %vm2296, %v3836, %v3325
        %v3869 = vsel %vm2296, %v3837, %v3327
        %v3870 = vsel %vm2296, %v3838, %v3329
        %v3871 = vsel %vm2296, %v3839, %v3331
        %v3872 = vsel %vm2296, %v3840, %v3333
        %v3873 = vsel %vm2296, %v3841, %v3335
        %v3874 = vsel %vm2296, %v3842, %v3337
        %v3875 = vsel %vm2296, %v3843, %v3339
        %v3876 = vsel %vm2296, %v3844, %v3341
        %v3877 = vsel %vm2296, %v3845, %v3343
        %v3878 = vsel %vm2296, %v3846, %v3345
        %v3879 = vsel %vm2296, %v3847, %v3347
        %v3880 = vsel %vm2296, %v3848, %v3349
        %v3881 = vsel %vm2296, %v3849, %v3351
        %v3882 = vsel %vm2296, %v3850, %v3353
        %v3883 = vsel %vm2296, %v3851, %v3355
        %v3884 = vsel %vm2296, %v3852, %v3357
        %v3885 = vsel %vm2296, %v3853, %v3359
        %v3886 = vsel %vm2296, %v3854, %v3361
        %v3887 = vsel %vm2296, %v3855, %v3363
        %v3888 = vsel %vm2296, %v3856, %v3365
        %v3889 = vsel %vm2296, %v3857, %v3367
        %v3890 = vsel %vm2296, %v3858, %v3369
        %v3891 = vsel %vm2296, %v3859, %v3371
        %v3892 = vsel %vm2296, %v3860, %v3373
        %v3893 = vsel %vm2296, %v3861, %v3375
        %v3894 = vsel %vm2296, %v3862, %v3377
        %v3895 = vsel %vm2296, %v3863, %v3379
        %v3896 = vsel %vm2296, %v3864, %v3381
        %v3897 = vsel %vm2296, %v3865, %v3383
        %v3898 = vsel %vm2296, %v3866, %v3385
        %v3899 = vsel %vm2296, %v3867, %v3387
        %v3900 = vsel %vm280, %v2875, %v3453
        %v3901 = vsel %vm280, %v2876, %v3455
        %v3902 = vsel %vm280, %v2877, %v3457
        %v3903 = vsel %vm280, %v2878, %v3459
        %v3904 = vsel %vm280, %v2879, %v3461
        %v3905 = vsel %vm280, %v2880, %v3463
        %v3906 = vsel %vm280, %v2881, %v3465
        %v3907 = vsel %vm280, %v2882, %v3467
        %v3908 = vsel %vm280, %v2883, %v3469
        %v3909 = vsel %vm280, %v2884, %v3471
        %v3910 = vsel %vm280, %v2885, %v3473
        %v3911 = vsel %vm280, %v2886, %v3475
        %v3912 = vsel %vm280, %v2887, %v3477
        %v3913 = vsel %vm280, %v2888, %v3479
        %v3914 = vsel %vm280, %v2889, %v3481
        %v3915 = vsel %vm280, %v2890, %v3483
        %v3916 = vsel %vm280, %v2891, %v3485
        %v3917 = vsel %vm280, %v2892, %v3487
        %v3918 = vsel %vm280, %v2893, %v3489
        %v3919 = vsel %vm280, %v2894, %v3491
        %v3920 = vsel %vm280, %v2895, %v3493
        %v3921 = vsel %vm280, %v2896, %v3495
        %v3922 = vsel %vm280, %v2897, %v3497
        %v3923 = vsel %vm280, %v2898, %v3499
        %v3924 = vsel %vm280, %v2899, %v3501
        %v3925 = vsel %vm280, %v2900, %v3503
        %v3926 = vsel %vm280, %v2901, %v3505
        %v3927 = vsel %vm280, %v2902, %v3507
        %v3928 = vsel %vm280, %v2903, %v3509
        %v3929 = vsel %vm280, %v2904, %v3511
        %v3930 = vsel %vm280, %v2905, %v3513
        %v3931 = vsel %vm280, %v2906, %v3515
        %v3932 = vsel %vm2230, %v3900, %v3581
        %v3933 = vsel %vm2230, %v3901, %v3583
        %v3934 = vsel %vm2230, %v3902, %v3585
        %v3935 = vsel %vm2230, %v3903, %v3587
        %v3936 = vsel %vm2230, %v3904, %v3589
        %v3937 = vsel %vm2230, %v3905, %v3591
        %v3938 = vsel %vm2230, %v3906, %v3593
        %v3939 = vsel %vm2230, %v3907, %v3595
        %v3940 = vsel %vm2230, %v3908, %v3597
        %v3941 = vsel %vm2230, %v3909, %v3599
        %v3942 = vsel %vm2230, %v3910, %v3601
        %v3943 = vsel %vm2230, %v3911, %v3603
        %v3944 = vsel %vm2230, %v3912, %v3605
        %v3945 = vsel %vm2230, %v3913, %v3607
        %v3946 = vsel %vm2230, %v3914, %v3609
        %v3947 = vsel %vm2230, %v3915, %v3611
        %v3948 = vsel %vm2230, %v3916, %v3613
        %v3949 = vsel %vm2230, %v3917, %v3615
        %v3950 = vsel %vm2230, %v3918, %v3617
        %v3951 = vsel %vm2230, %v3919, %v3619
        %v3952 = vsel %vm2230, %v3920, %v3621
        %v3953 = vsel %vm2230, %v3921, %v3623
        %v3954 = vsel %vm2230, %v3922, %v3625
        %v3955 = vsel %vm2230, %v3923, %v3627
        %v3956 = vsel %vm2230, %v3924, %v3629
        %v3957 = vsel %vm2230, %v3925, %v3631
        %v3958 = vsel %vm2230, %v3926, %v3633
        %v3959 = vsel %vm2230, %v3927, %v3635
        %v3960 = vsel %vm2230, %v3928, %v3637
        %v3961 = vsel %vm2230, %v3929, %v3639
        %v3962 = vsel %vm2230, %v3930, %v3641
        %v3963 = vsel %vm2230, %v3931, %v3643
        %v3964 = vsel %vm2296, %v3932, %v3709
        %v3965 = vsel %vm2296, %v3933, %v3711
        %v3966 = vsel %vm2296, %v3934, %v3713
        %v3967 = vsel %vm2296, %v3935, %v3715
        %v3968 = vsel %vm2296, %v3936, %v3717
        %v3969 = vsel %vm2296, %v3937, %v3719
        %v3970 = vsel %vm2296, %v3938, %v3721
        %v3971 = vsel %vm2296, %v3939, %v3723
        %v3972 = vsel %vm2296, %v3940, %v3725
        %v3973 = vsel %vm2296, %v3941, %v3727
        %v3974 = vsel %vm2296, %v3942, %v3729
        %v3975 = vsel %vm2296, %v3943, %v3731
        %v3976 = vsel %vm2296, %v3944, %v3733
        %v3977 = vsel %vm2296, %v3945, %v3735
        %v3978 = vsel %vm2296, %v3946, %v3737
        %v3979 = vsel %vm2296, %v3947, %v3739
        %v3980 = vsel %vm2296, %v3948, %v3741
        %v3981 = vsel %vm2296, %v3949, %v3743
        %v3982 = vsel %vm2296, %v3950, %v3745
        %v3983 = vsel %vm2296, %v3951, %v3747
        %v3984 = vsel %vm2296, %v3952, %v3749
        %v3985 = vsel %vm2296, %v3953, %v3751
        %v3986 = vsel %vm2296, %v3954, %v3753
        %v3987 = vsel %vm2296, %v3955, %v3755
        %v3988 = vsel %vm2296, %v3956, %v3757
        %v3989 = vsel %vm2296, %v3957, %v3759
        %v3990 = vsel %vm2296, %v3958, %v3761
        %v3991 = vsel %vm2296, %v3959, %v3763
        %v3992 = vsel %vm2296, %v3960, %v3765
        %v3993 = vsel %vm2296, %v3961, %v3767
        %v3994 = vsel %vm2296, %v3962, %v3769
        %v3995 = vsel %vm2296, %v3963, %v3771
        %v3996 = vpack.c.bf16 %v3869, %v3868
        %v3997 = vpack.c.bf16 %v3965, %v3964
        %v3998 = vpack.c.bf16 %v3005, %v3004
        %v3999 = vpack.c.bf16 %v3871, %v3870
        %v4000 = vpack.c.bf16 %v3967, %v3966
        %v4001 = vpack.c.bf16 %v3007, %v3006
        %v4002 = vpack.c.bf16 %v3873, %v3872
        %v4003 = vpack.c.bf16 %v3969, %v3968
        %v4004 = vpack.c.bf16 %v3009, %v3008
        %v4005 = vpack.c.bf16 %v3875, %v3874
        %v4006 = vpack.c.bf16 %v3971, %v3970
        %v4007 = vpack.c.bf16 %v3011, %v3010
        %v4008 = vpack.c.bf16 %v3877, %v3876
        %v4009 = vpack.c.bf16 %v3973, %v3972
        %v4010 = vpack.c.bf16 %v3013, %v3012
        %v4011 = vpack.c.bf16 %v3879, %v3878
        %v4012 = vpack.c.bf16 %v3975, %v3974
        %v4013 = vpack.c.bf16 %v3015, %v3014
        %v4014 = vpack.c.bf16 %v3881, %v3880
        %v4015 = vpack.c.bf16 %v3977, %v3976
        %v4016 = vpack.c.bf16 %v3017, %v3016
        %v4017 = vpack.c.bf16 %v3883, %v3882
        %v4018 = vpack.c.bf16 %v3979, %v3978
        %v4019 = vpack.c.bf16 %v3019, %v3018
        %v4020 = vpack.c.bf16 %v3885, %v3884
        %v4021 = vpack.c.bf16 %v3981, %v3980
        %v4022 = vpack.c.bf16 %v3021, %v3020
        %v4023 = vpack.c.bf16 %v3887, %v3886
        %v4024 = vpack.c.bf16 %v3983, %v3982
        %v4025 = vpack.c.bf16 %v3023, %v3022
        %v4026 = vpack.c.bf16 %v3889, %v3888
        %v4027 = vpack.c.bf16 %v3985, %v3984
        %v4028 = vpack.c.bf16 %v3025, %v3024
        %v4029 = vpack.c.bf16 %v3891, %v3890
        %v4030 = vpack.c.bf16 %v3987, %v3986
        %v4031 = vpack.c.bf16 %v3027, %v3026
        %v4032 = vpack.c.bf16 %v3893, %v3892
        %v4033 = vpack.c.bf16 %v3989, %v3988
        %v4034 = vpack.c.bf16 %v3029, %v3028
        %v4035 = vpack.c.bf16 %v3895, %v3894
        %v4036 = vpack.c.bf16 %v3991, %v3990
        %v4037 = vpack.c.bf16 %v3031, %v3030
        %v4038 = vpack.c.bf16 %v3897, %v3896
        %v4039 = vpack.c.bf16 %v3993, %v3992
        %v4040 = vpack.c.bf16 %v3033, %v3032
        %v4041 = vpack.c.bf16 %v3899, %v3898
        %v4042 = vpack.c.bf16 %v3995, %v3994
        %v4043 = vpack.c.bf16 %v3035, %v3034
        %v4044 = vld [vmem:[%s3] sm:$0xf]
        %v4045 = vld [vmem:[%s3 + $0x4] sm:$0xf]
        %v4046 = vld [vmem:[%s3 + $0x8] sm:$0xf]
        %v4047 = vld [vmem:[%s3 + $0xc] sm:$0xf]
        %v4048 = vld [vmem:[%s3 + $0x10] sm:$0xf]
        %v4049 = vld [vmem:[%s3 + $0x14] sm:$0xf]
        %v4050 = vld [vmem:[%s3 + $0x18] sm:$0xf]
        %v4051 = vld [vmem:[%s3 + $0x1c] sm:$0xf]
        %v4052 = vld [vmem:[%s3 + $0x20] sm:$0xf]
        %v4053 = vld [vmem:[%s3 + $0x24] sm:$0xf]
        %v4054 = vld [vmem:[%s3 + $0x28] sm:$0xf]
        %v4055 = vld [vmem:[%s3 + $0x2c] sm:$0xf]
        %v4056 = vld [vmem:[%s3 + $0x30] sm:$0xf]
        %v4057 = vld [vmem:[%s3 + $0x34] sm:$0xf]
        %v4058 = vld [vmem:[%s3 + $0x38] sm:$0xf]
        %v4059 = vld [vmem:[%s3 + $0x3c] sm:$0xf]
        %v4060 = vld [vmem:[%s3 + $0x40] sm:$0xf]
        %v4061 = vld [vmem:[%s3 + $0x44] sm:$0xf]
        %v4062 = vld [vmem:[%s3 + $0x48] sm:$0xf]
        %v4063 = vld [vmem:[%s3 + $0x4c] sm:$0xf]
        %v4064 = vld [vmem:[%s3 + $0x50] sm:$0xf]
        %v4065 = vld [vmem:[%s3 + $0x54] sm:$0xf]
        %v4066 = vld [vmem:[%s3 + $0x58] sm:$0xf]
        %v4067 = vld [vmem:[%s3 + $0x5c] sm:$0xf]
        %v4068 = vld [vmem:[%s3 + $0x60] sm:$0xf]
        %v4069 = vld [vmem:[%s3 + $0x64] sm:$0xf]
        %v4070 = vld [vmem:[%s3 + $0x68] sm:$0xf]
        %v4071 = vld [vmem:[%s3 + $0x6c] sm:$0xf]
        %v4072 = vld [vmem:[%s3 + $0x70] sm:$0xf]
        %v4073 = vld [vmem:[%s3 + $0x74] sm:$0xf]
        %v4074 = vld [vmem:[%s3 + $0x78] sm:$0xf]
        %v4075 = vld [vmem:[%s3 + $0x7c] sm:$0xf]
        %v4076 = vld [vmem:[%s3 + $0x80] sm:$0xf]
        %v4077 = vld [vmem:[%s3 + $0x84] sm:$0xf]
        %v4078 = vld [vmem:[%s3 + $0x88] sm:$0xf]
        %v4079 = vld [vmem:[%s3 + $0x8c] sm:$0xf]
        %v4080 = vld [vmem:[%s4] sm:$0x1]
        %v4082 = vlaneseq
        %v4083 = vshrl.u32 %v4082, 7
        %v4084 = vsub.s32 0, %v4083
        %v4085 = vrot.slane %v4080, %v4084
        %v4123 = vunpack.c.l.b16 %v4044
        %v4124 = vunpack.c.l.b16 %v4045
        %v4125 = vunpack.c.l.b16 %v4046
        %v4126 = vunpack.c.l.b16 %v4047
        %v4127 = vunpack.c.l.b16 %v4048
        %v4128 = vunpack.c.l.b16 %v4049
        %v4129 = vunpack.c.l.b16 %v4050
        %v4130 = vunpack.c.l.b16 %v4051
        %v4131 = vunpack.c.l.b16 %v4052
        %v4132 = vunpack.c.l.b16 %v4053
        %v4133 = vunpack.c.l.b16 %v4054
        %v4134 = vunpack.c.l.b16 %v4055
        %v4135 = vunpack.c.l.b16 %v4056
        %v4136 = vunpack.c.l.b16 %v4057
        %v4137 = vunpack.c.l.b16 %v4058
        %v4138 = vunpack.c.l.b16 %v4059
        %v4139 = vunpack.c.l.b16 %v4060
        %v4140 = vunpack.c.l.b16 %v4061
        %v4141 = vunpack.c.l.b16 %v4062
        %v4142 = vunpack.c.l.b16 %v4063
        %v4143 = vunpack.c.l.b16 %v4064
        %v4144 = vunpack.c.l.b16 %v4065
        %v4145 = vunpack.c.l.b16 %v4066
        %v4146 = vunpack.c.l.b16 %v4067
        %v4147 = vunpack.c.l.b16 %v4068
        %v4148 = vunpack.c.l.b16 %v4069
        %v4149 = vunpack.c.l.b16 %v4070
        %v4150 = vunpack.c.l.b16 %v4071
        %v4151 = vunpack.c.l.b16 %v4072
        %v4152 = vunpack.c.l.b16 %v4073
        %v4153 = vunpack.c.l.b16 %v4074
        %v4154 = vunpack.c.l.b16 %v4075
        %v4155 = vunpack.c.l.b16 %v4076
        %v4156 = vunpack.c.l.b16 %v4077
        %v4157 = vunpack.c.l.b16 %v4078
        %v4158 = vunpack.c.l.b16 %v4079
        %v4159 = vpack.c.b16 %v4124, %v4123
        %v4160 = vpack.c.b16 %v4126, %v4125
        %v4161 = vpack.c.b16 %v4128, %v4127
        %v4162 = vpack.c.b16 %v4130, %v4129
        %v4163 = vpack.c.b16 %v4132, %v4131
        %v4164 = vpack.c.b16 %v4134, %v4133
        %v4165 = vpack.c.b16 %v4136, %v4135
        %v4166 = vpack.c.b16 %v4138, %v4137
        %v4167 = vpack.c.b16 %v4140, %v4139
        %v4168 = vpack.c.b16 %v4142, %v4141
        %v4169 = vpack.c.b16 %v4144, %v4143
        %v4170 = vpack.c.b16 %v4146, %v4145
        %v4171 = vpack.c.b16 %v4148, %v4147
        %v4172 = vpack.c.b16 %v4150, %v4149
        %v4173 = vpack.c.b16 %v4152, %v4151
        %v4174 = vpack.c.b16 %v4154, %v4153
        %v4175 = vpack.c.b16 %v4156, %v4155
        %v4176 = vpack.c.b16 %v4158, %v4157
        %v4196 = vsel %vm280, %v3998, 0
        %v4199 = vsel %vm280, %v4001, 0
        %v4202 = vsel %vm280, %v4004, 0
        %v4205 = vsel %vm280, %v4007, 0
        %v4208 = vsel %vm280, %v4010, 0
        %v4211 = vsel %vm280, %v4013, 0
        %v4214 = vsel %vm280, %v4016, 0
        %v4217 = vsel %vm280, %v4019, 0
        %v4220 = vsel %vm280, %v4022, 0
        %v4223 = vsel %vm280, %v4025, 0
        %v4226 = vsel %vm280, %v4028, 0
        %v4229 = vsel %vm280, %v4031, 0
        %v4232 = vsel %vm280, %v4034, 0
        %v4235 = vsel %vm280, %v4037, 0
        %v4238 = vsel %vm280, %v4040, 0
        %v4241 = vsel %vm280, %v4043, 0
        %4243 = vmatprep.subr.bf16.mxu0 0
        %4244 = vmatpush1.bf16.msra.mxu0 %v4159
        %4245 = vmatprep.subr.bf16.mxu0 0
        %4246 = vmatpush1.bf16.msra.mxu0 %v4160
        %4247 = vmatprep.subr.bf16.mxu0 0
        %4248 = vmatpush1.bf16.msra.mxu0 %v4161
        %4249 = vmatprep.subr.bf16.mxu0 0
        %4250 = vmatpush1.bf16.msra.mxu0 %v4162
        %4251 = vmatprep.subr.bf16.mxu0 0
        %4252 = vmatpush1.bf16.msra.mxu0 %v4163
        %4253 = vmatprep.subr.bf16.mxu0 0
        %4254 = vmatpush1.bf16.msra.mxu0 %v4164
        %4255 = vmatprep.subr.bf16.mxu0 0
        %4256 = vmatpush1.bf16.msra.mxu0 %v4165
        %4257 = vmatprep.subr.bf16.mxu0 0
        %4258 = vmatpush1.bf16.msra.mxu0 %v4166
        %4259 = vmatprep.subr.bf16.mxu0 0
        %4260 = vmatpush1.bf16.msra.mxu0 %v4167
        %4261 = vmatprep.subr.bf16.mxu0 0
        %4262 = vmatpush1.bf16.msra.mxu0 %v4168
        %4263 = vmatprep.subr.bf16.mxu0 0
        %4264 = vmatpush1.bf16.msra.mxu0 %v4169
        %4265 = vmatprep.subr.bf16.mxu0 0
        %4266 = vmatpush1.bf16.msra.mxu0 %v4170
        %4267 = vmatprep.subr.bf16.mxu0 0
        %4268 = vmatpush1.bf16.msra.mxu0 %v4171
        %4269 = vmatprep.subr.bf16.mxu0 0
        %4270 = vmatpush1.bf16.msra.mxu0 %v4172
        %4271 = vmatprep.subr.bf16.mxu0 0
        %4272 = vmatpush1.bf16.msra.mxu0 %v4173
        %4273 = vmatprep.subr.bf16.mxu0 0
        %4274 = vmatpush1.bf16.msra.mxu0 %v4174
        %4275 = vmatprep.mubr.bf16.mxu0 %v3997
        %4276 = vmatmul.mubr.bf16.gmra.mrb[0].mxu0 %v3996
        %v4277 = vpop.f32.mrb[0].mxu0
        %v4278 = vadd.f32 %v4085, %v4277
        %v4279 = vpop.f32.mrb[0].mxu0
        %v4280 = vpop.f32.mrb[0].mxu0
        %v4281 = vadd.f32 %v4085, %v4280
        %v4282 = vpop.f32.mrb[0].mxu0
        %4283 = vmatprep.mubr.bf16.mxu0 %v4000
        %4284 = vmatmul.mubr.bf16.gmra.mrb[0].mxu0 %v3999
        %v4285 = vpop.f32.mrb[0].mxu0
        %v4286 = vadd.f32 %v4085, %v4285
        %v4287 = vpop.f32.mrb[0].mxu0
        %v4288 = vpop.f32.mrb[0].mxu0
        %v4289 = vadd.f32 %v4085, %v4288
        %v4290 = vpop.f32.mrb[0].mxu0
        %4291 = vmatprep.mubr.bf16.mxu0 %v4003
        %4292 = vmatmul.mubr.bf16.gmra.mrb[0].mxu0 %v4002
        %v4293 = vpop.f32.mrb[0].mxu0
        %v4294 = vadd.f32 %v4085, %v4293
        %v4295 = vpop.f32.mrb[0].mxu0
        %v4296 = vpop.f32.mrb[0].mxu0
        %v4297 = vadd.f32 %v4085, %v4296
        %v4298 = vpop.f32.mrb[0].mxu0
        %4299 = vmatprep.mubr.bf16.mxu0 %v4006
        %4300 = vmatmul.mubr.bf16.gmra.mrb[0].mxu0 %v4005
        %v4301 = vpop.f32.mrb[0].mxu0
        %v4302 = vadd.f32 %v4085, %v4301
        %v4303 = vpop.f32.mrb[0].mxu0
        %v4304 = vpop.f32.mrb[0].mxu0
        %v4305 = vadd.f32 %v4085, %v4304
        %v4306 = vpop.f32.mrb[0].mxu0
        %4307 = vmatprep.mubr.bf16.mxu0 %v4009
        %4308 = vmatmul.mubr.bf16.gmra.mrb[0].mxu0 %v4008
        %v4309 = vpop.f32.mrb[0].mxu0
        %v4310 = vadd.f32 %v4085, %v4309
        %v4311 = vpop.f32.mrb[0].mxu0
        %v4312 = vpop.f32.mrb[0].mxu0
        %v4313 = vadd.f32 %v4085, %v4312
        %v4314 = vpop.f32.mrb[0].mxu0
        %4315 = vmatprep.mubr.bf16.mxu0 %v4012
        %4316 = vmatmul.mubr.bf16.gmra.mrb[0].mxu0 %v4011
        %v4317 = vpop.f32.mrb[0].mxu0
        %v4318 = vadd.f32 %v4085, %v4317
        %v4319 = vpop.f32.mrb[0].mxu0
        %v4320 = vpop.f32.mrb[0].mxu0
        %v4321 = vadd.f32 %v4085, %v4320
        %v4322 = vpop.f32.mrb[0].mxu0
        %4323 = vmatprep.mubr.bf16.mxu0 %v4015
        %4324 = vmatmul.mubr.bf16.gmra.mrb[0].mxu0 %v4014
        %v4325 = vpop.f32.mrb[0].mxu0
        %v4326 = vadd.f32 %v4085, %v4325
        %v4327 = vpop.f32.mrb[0].mxu0
        %v4328 = vpop.f32.mrb[0].mxu0
        %v4329 = vadd.f32 %v4085, %v4328
        %v4330 = vpop.f32.mrb[0].mxu0
        %4331 = vmatprep.mubr.bf16.mxu0 %v4018
        %4332 = vmatmul.mubr.bf16.gmra.mrb[0].mxu0 %v4017
        %v4333 = vpop.f32.mrb[0].mxu0
        %v4334 = vadd.f32 %v4085, %v4333
        %v4335 = vpop.f32.mrb[0].mxu0
        %v4336 = vpop.f32.mrb[0].mxu0
        %v4337 = vadd.f32 %v4085, %v4336
        %v4338 = vpop.f32.mrb[0].mxu0
        %4339 = vmatprep.mubr.bf16.mxu0 %v4021
        %4340 = vmatmul.mubr.bf16.gmra.mrb[0].mxu0 %v4020
        %v4341 = vpop.f32.mrb[0].mxu0
        %v4342 = vadd.f32 %v4085, %v4341
        %v4343 = vpop.f32.mrb[0].mxu0
        %v4344 = vpop.f32.mrb[0].mxu0
        %v4345 = vadd.f32 %v4085, %v4344
        %v4346 = vpop.f32.mrb[0].mxu0
        %4347 = vmatprep.mubr.bf16.mxu0 %v4024
        %4348 = vmatmul.mubr.bf16.gmra.mrb[0].mxu0 %v4023
        %v4349 = vpop.f32.mrb[0].mxu0
        %v4350 = vadd.f32 %v4085, %v4349
        %v4351 = vpop.f32.mrb[0].mxu0
        %v4352 = vpop.f32.mrb[0].mxu0
        %v4353 = vadd.f32 %v4085, %v4352
        %v4354 = vpop.f32.mrb[0].mxu0
        %4355 = vmatprep.mubr.bf16.mxu0 %v4027
        %4356 = vmatmul.mubr.bf16.gmra.mrb[0].mxu0 %v4026
        %v4357 = vpop.f32.mrb[0].mxu0
        %v4358 = vadd.f32 %v4085, %v4357
        %v4359 = vpop.f32.mrb[0].mxu0
        %v4360 = vpop.f32.mrb[0].mxu0
        %v4361 = vadd.f32 %v4085, %v4360
        %v4362 = vpop.f32.mrb[0].mxu0
        %4363 = vmatprep.mubr.bf16.mxu0 %v4030
        %4364 = vmatmul.mubr.bf16.gmra.mrb[0].mxu0 %v4029
        %v4365 = vpop.f32.mrb[0].mxu0
        %v4366 = vadd.f32 %v4085, %v4365
        %v4367 = vpop.f32.mrb[0].mxu0
        %v4368 = vpop.f32.mrb[0].mxu0
        %v4369 = vadd.f32 %v4085, %v4368
        %v4370 = vpop.f32.mrb[0].mxu0
        %4371 = vmatprep.mubr.bf16.mxu0 %v4033
        %4372 = vmatmul.mubr.bf16.gmra.mrb[0].mxu0 %v4032
        %v4373 = vpop.f32.mrb[0].mxu0
        %v4374 = vadd.f32 %v4085, %v4373
        %v4375 = vpop.f32.mrb[0].mxu0
        %v4376 = vpop.f32.mrb[0].mxu0
        %v4377 = vadd.f32 %v4085, %v4376
        %v4378 = vpop.f32.mrb[0].mxu0
        %4379 = vmatprep.mubr.bf16.mxu0 %v4036
        %4380 = vmatmul.mubr.bf16.gmra.mrb[0].mxu0 %v4035
        %v4381 = vpop.f32.mrb[0].mxu0
        %v4382 = vadd.f32 %v4085, %v4381
        %v4383 = vpop.f32.mrb[0].mxu0
        %v4384 = vpop.f32.mrb[0].mxu0
        %v4385 = vadd.f32 %v4085, %v4384
        %v4386 = vpop.f32.mrb[0].mxu0
        %4387 = vmatprep.mubr.bf16.mxu0 %v4039
        %4388 = vmatmul.mubr.bf16.gmra.mrb[0].mxu0 %v4038
        %v4389 = vpop.f32.mrb[0].mxu0
        %v4390 = vadd.f32 %v4085, %v4389
        %v4391 = vpop.f32.mrb[0].mxu0
        %v4392 = vpop.f32.mrb[0].mxu0
        %v4393 = vadd.f32 %v4085, %v4392
        %v4394 = vpop.f32.mrb[0].mxu0
        %4395 = vmatprep.mubr.bf16.mxu0 %v4042
        %4396 = vmatmul.mubr.bf16.gmra.mrb[0].mxu0 %v4041
        %v4397 = vpop.f32.mrb[0].mxu0
        %v4398 = vadd.f32 %v4085, %v4397
        %v4399 = vpop.f32.mrb[0].mxu0
        %v4400 = vpop.f32.mrb[0].mxu0
        %v4401 = vadd.f32 %v4085, %v4400
        %v4402 = vpop.f32.mrb[0].mxu0
        %4403 = vdwg.mxu0
        %4404 = vmatprep.subr.bf16.mxu0 0
        %4405 = vmatpush1.bf16.msra.mxu0 %v4175
        %4406 = vmatprep.subr.bf16.mxu0 0
        %4407 = vmatpush1.bf16.msra.mxu0 %v4176
        %4408 = vmatprep.subr.bf16.mxu0 0
        %4409 = vmatpush1.bf16.msra.mxu0 0
        %4410 = vmatprep.subr.bf16.mxu0 0
        %4411 = vmatpush1.bf16.msra.mxu0 0
        %4412 = vmatprep.subr.bf16.mxu0 0
        %4413 = vmatpush1.bf16.msra.mxu0 0
        %4414 = vmatprep.subr.bf16.mxu0 0
        %4415 = vmatpush1.bf16.msra.mxu0 0
        %4416 = vmatprep.subr.bf16.mxu0 0
        %4417 = vmatpush1.bf16.msra.mxu0 0
        %4418 = vmatprep.subr.bf16.mxu0 0
        %4419 = vmatpush1.bf16.msra.mxu0 0
        %4420 = vmatprep.subr.bf16.mxu0 0
        %4421 = vmatpush1.bf16.msra.mxu0 0
        %4422 = vmatprep.subr.bf16.mxu0 0
        %4423 = vmatpush1.bf16.msra.mxu0 0
        %4424 = vmatprep.subr.bf16.mxu0 0
        %4425 = vmatpush1.bf16.msra.mxu0 0
        %4426 = vmatprep.subr.bf16.mxu0 0
        %4427 = vmatpush1.bf16.msra.mxu0 0
        %4428 = vmatprep.subr.bf16.mxu0 0
        %4429 = vmatpush1.bf16.msra.mxu0 0
        %4430 = vmatprep.subr.bf16.mxu0 0
        %4431 = vmatpush1.bf16.msra.mxu0 0
        %4432 = vmatprep.subr.bf16.mxu0 0
        %4433 = vmatpush1.bf16.msra.mxu0 0
        %4434 = vmatprep.subr.bf16.mxu0 0
        %4435 = vmatpush1.bf16.msra.mxu0 0
        %4436 = vmatprep.mubr.bf16.mxu0 0
        %4437 = vmatmul.mubr.bf16.gmra.mrb[0].mxu0 %v4196
        %v4438 = vpop.f32.mrb[0].mxu0
        %v4439 = vadd.f32 %v4278, %v4438
        %v4440 = vpop.f32.mrb[0].mxu0
        %v4441 = vpop.f32.mrb[0].mxu0
        %v4442 = vadd.f32 %v4281, %v4441
        %v4443 = vpop.f32.mrb[0].mxu0
        %4444 = vmatprep.mubr.bf16.mxu0 0
        %4445 = vmatmul.mubr.bf16.gmra.mrb[0].mxu0 %v4199
        %v4446 = vpop.f32.mrb[0].mxu0
        %v4447 = vadd.f32 %v4286, %v4446
        %v4448 = vpop.f32.mrb[0].mxu0
        %v4449 = vpop.f32.mrb[0].mxu0
        %v4450 = vadd.f32 %v4289, %v4449
        %v4451 = vpop.f32.mrb[0].mxu0
        %4452 = vmatprep.mubr.bf16.mxu0 0
        %4453 = vmatmul.mubr.bf16.gmra.mrb[0].mxu0 %v4202
        %v4454 = vpop.f32.mrb[0].mxu0
        %v4455 = vadd.f32 %v4294, %v4454
        %v4456 = vpop.f32.mrb[0].mxu0
        %v4457 = vpop.f32.mrb[0].mxu0
        %v4458 = vadd.f32 %v4297, %v4457
        %v4459 = vpop.f32.mrb[0].mxu0
        %4460 = vmatprep.mubr.bf16.mxu0 0
        %4461 = vmatmul.mubr.bf16.gmra.mrb[0].mxu0 %v4205
        %v4462 = vpop.f32.mrb[0].mxu0
        %v4463 = vadd.f32 %v4302, %v4462
        %v4464 = vpop.f32.mrb[0].mxu0
        %v4465 = vpop.f32.mrb[0].mxu0
        %v4466 = vadd.f32 %v4305, %v4465
        %v4467 = vpop.f32.mrb[0].mxu0
        %4468 = vmatprep.mubr.bf16.mxu0 0
        %4469 = vmatmul.mubr.bf16.gmra.mrb[0].mxu0 %v4208
        %v4470 = vpop.f32.mrb[0].mxu0
        %v4471 = vadd.f32 %v4310, %v4470
        %v4472 = vpop.f32.mrb[0].mxu0
        %v4473 = vpop.f32.mrb[0].mxu0
        %v4474 = vadd.f32 %v4313, %v4473
        %v4475 = vpop.f32.mrb[0].mxu0
        %4476 = vmatprep.mubr.bf16.mxu0 0
        %4477 = vmatmul.mubr.bf16.gmra.mrb[0].mxu0 %v4211
        %v4478 = vpop.f32.mrb[0].mxu0
        %v4479 = vadd.f32 %v4318, %v4478
        %v4480 = vpop.f32.mrb[0].mxu0
        %v4481 = vpop.f32.mrb[0].mxu0
        %v4482 = vadd.f32 %v4321, %v4481
        %v4483 = vpop.f32.mrb[0].mxu0
        %4484 = vmatprep.mubr.bf16.mxu0 0
        %4485 = vmatmul.mubr.bf16.gmra.mrb[0].mxu0 %v4214
        %v4486 = vpop.f32.mrb[0].mxu0
        %v4487 = vadd.f32 %v4326, %v4486
        %v4488 = vpop.f32.mrb[0].mxu0
        %v4489 = vpop.f32.mrb[0].mxu0
        %v4490 = vadd.f32 %v4329, %v4489
        %v4491 = vpop.f32.mrb[0].mxu0
        %4492 = vmatprep.mubr.bf16.mxu0 0
        %4493 = vmatmul.mubr.bf16.gmra.mrb[0].mxu0 %v4217
        %v4494 = vpop.f32.mrb[0].mxu0
        %v4495 = vadd.f32 %v4334, %v4494
        %v4496 = vpop.f32.mrb[0].mxu0
        %v4497 = vpop.f32.mrb[0].mxu0
        %v4498 = vadd.f32 %v4337, %v4497
        %v4499 = vpop.f32.mrb[0].mxu0
        %4500 = vmatprep.mubr.bf16.mxu0 0
        %4501 = vmatmul.mubr.bf16.gmra.mrb[0].mxu0 %v4220
        %v4502 = vpop.f32.mrb[0].mxu0
        %v4503 = vadd.f32 %v4342, %v4502
        %v4504 = vpop.f32.mrb[0].mxu0
        %v4505 = vpop.f32.mrb[0].mxu0
        %v4506 = vadd.f32 %v4345, %v4505
        %v4507 = vpop.f32.mrb[0].mxu0
        %4508 = vmatprep.mubr.bf16.mxu0 0
        %4509 = vmatmul.mubr.bf16.gmra.mrb[0].mxu0 %v4223
        %v4510 = vpop.f32.mrb[0].mxu0
        %v4511 = vadd.f32 %v4350, %v4510
        %v4512 = vpop.f32.mrb[0].mxu0
        %v4513 = vpop.f32.mrb[0].mxu0
        %v4514 = vadd.f32 %v4353, %v4513
        %v4515 = vpop.f32.mrb[0].mxu0
        %4516 = vmatprep.mubr.bf16.mxu0 0
        %4517 = vmatmul.mubr.bf16.gmra.mrb[0].mxu0 %v4226
        %v4518 = vpop.f32.mrb[0].mxu0
        %v4519 = vadd.f32 %v4358, %v4518
        %v4520 = vpop.f32.mrb[0].mxu0
        %v4521 = vpop.f32.mrb[0].mxu0
        %v4522 = vadd.f32 %v4361, %v4521
        %v4523 = vpop.f32.mrb[0].mxu0
        %4524 = vmatprep.mubr.bf16.mxu0 0
        %4525 = vmatmul.mubr.bf16.gmra.mrb[0].mxu0 %v4229
        %v4526 = vpop.f32.mrb[0].mxu0
        %v4527 = vadd.f32 %v4366, %v4526
        %v4528 = vpop.f32.mrb[0].mxu0
        %v4529 = vpop.f32.mrb[0].mxu0
        %v4530 = vadd.f32 %v4369, %v4529
        %v4531 = vpop.f32.mrb[0].mxu0
        %4532 = vmatprep.mubr.bf16.mxu0 0
        %4533 = vmatmul.mubr.bf16.gmra.mrb[0].mxu0 %v4232
        %v4534 = vpop.f32.mrb[0].mxu0
        %v4535 = vadd.f32 %v4374, %v4534
        %v4536 = vpop.f32.mrb[0].mxu0
        %v4537 = vpop.f32.mrb[0].mxu0
        %v4538 = vadd.f32 %v4377, %v4537
        %v4539 = vpop.f32.mrb[0].mxu0
        %4540 = vmatprep.mubr.bf16.mxu0 0
        %4541 = vmatmul.mubr.bf16.gmra.mrb[0].mxu0 %v4235
        %v4542 = vpop.f32.mrb[0].mxu0
        %v4543 = vadd.f32 %v4382, %v4542
        %v4544 = vpop.f32.mrb[0].mxu0
        %v4545 = vpop.f32.mrb[0].mxu0
        %v4546 = vadd.f32 %v4385, %v4545
        %v4547 = vpop.f32.mrb[0].mxu0
        %4548 = vmatprep.mubr.bf16.mxu0 0
        %4549 = vmatmul.mubr.bf16.gmra.mrb[0].mxu0 %v4238
        %v4550 = vpop.f32.mrb[0].mxu0
        %v4551 = vadd.f32 %v4390, %v4550
        %v4552 = vpop.f32.mrb[0].mxu0
        %v4553 = vpop.f32.mrb[0].mxu0
        %v4554 = vadd.f32 %v4393, %v4553
        %v4555 = vpop.f32.mrb[0].mxu0
        %4556 = vmatprep.mubr.bf16.mxu0 0
        %4557 = vmatmul.mubr.bf16.gmra.mrb[0].mxu0 %v4241
        %v4558 = vpop.f32.mrb[0].mxu0
        %v4559 = vadd.f32 %v4398, %v4558
        %v4560 = vpop.f32.mrb[0].mxu0
        %v4561 = vpop.f32.mrb[0].mxu0
        %v4562 = vadd.f32 %v4401, %v4561
        %v4563 = vpop.f32.mrb[0].mxu0
        %4564 = vdwg.mxu0
        %4565 = vst [vmem:[%s217] sm:$0xff] %v4439
        %4566 = vst [vmem:[%s217 + $0x8] sm:$0xff] %v4442
        %4567 = vst [vmem:[%s217 + $0x10] sm:$0xff] %v4447
        %4568 = vst [vmem:[%s217 + $0x18] sm:$0xff] %v4450
        %4569 = vst [vmem:[%s217 + $0x20] sm:$0xff] %v4455
        %4570 = vst [vmem:[%s217 + $0x28] sm:$0xff] %v4458
        %4571 = vst [vmem:[%s217 + $0x30] sm:$0xff] %v4463
        %4572 = vst [vmem:[%s217 + $0x38] sm:$0xff] %v4466
        %4573 = vst [vmem:[%s217 + $0x40] sm:$0xff] %v4471
        %4574 = vst [vmem:[%s217 + $0x48] sm:$0xff] %v4474
        %4575 = vst [vmem:[%s217 + $0x50] sm:$0xff] %v4479
        %4576 = vst [vmem:[%s217 + $0x58] sm:$0xff] %v4482
        %4577 = vst [vmem:[%s217 + $0x60] sm:$0xff] %v4487
        %4578 = vst [vmem:[%s217 + $0x68] sm:$0xff] %v4490
        %4579 = vst [vmem:[%s217 + $0x70] sm:$0xff] %v4495
        %4580 = vst [vmem:[%s217 + $0x78] sm:$0xff] %v4498
        %4581 = vst [vmem:[%s217 + $0x80] sm:$0xff] %v4503
        %4582 = vst [vmem:[%s217 + $0x88] sm:$0xff] %v4506
        %4583 = vst [vmem:[%s217 + $0x90] sm:$0xff] %v4511
        %4584 = vst [vmem:[%s217 + $0x98] sm:$0xff] %v4514
        %4585 = vst [vmem:[%s217 + $0xa0] sm:$0xff] %v4519
        %4586 = vst [vmem:[%s217 + $0xa8] sm:$0xff] %v4522
        %4587 = vst [vmem:[%s217 + $0xb0] sm:$0xff] %v4527
        %4588 = vst [vmem:[%s217 + $0xb8] sm:$0xff] %v4530
        %4589 = vst [vmem:[%s217 + $0xc0] sm:$0xff] %v4535
        %4590 = vst [vmem:[%s217 + $0xc8] sm:$0xff] %v4538
        %4591 = vst [vmem:[%s217 + $0xd0] sm:$0xff] %v4543
        %4592 = vst [vmem:[%s217 + $0xd8] sm:$0xff] %v4546
        %4593 = vst [vmem:[%s217 + $0xe0] sm:$0xff] %v4551
        %4594 = vst [vmem:[%s217 + $0xe8] sm:$0xff] %v4554
        %4595 = vst [vmem:[%s217 + $0xf0] sm:$0xff] %v4559
        %4596 = vst [vmem:[%s217 + $0xf8] sm:$0xff] %v4562
        %s4597 = sand.u32 %s137, 1
        %s4598 = scalar_lea.sflag [#allocation5], %s4597
        %s4599 = sand.u32 %s137, 1
        %s4600 = smul.addr %s4599, 256
        %s4601 = scalar_lea.vmem [#allocation4], %s4600
        // Predicated region
        $region41: #{tpu_custom_call.1} parent=39 // pred_check
          %p4602 = pneg %p147
        $region42: #{tpu_custom_call.1} parent=39 // pred_check_branch
          %4604 = sbr.rel (%p4602) target = $region44
        $region43: #{tpu_custom_call.1} parent=39 // pred_region
          %s4606 = ssub.s32 4096, 4096
          %4607 = vsyncadd %s4598, %s4606
          %s4608 = smul.addr %s19, 32
          %s4609 = smul.addr %s4608, 128
          %s4610 = scalar_lea.hbm %s5, %s4609
          %s4611 = sshll.u32 %s4601, 4
          %s4612 = int_to_ptr.vmem [resolvable:$true] %s4611
          %4617 = dma.vmem_to_hbm [thread:$0]  %s4612, 4096, %s4610, %s4598, 128, 128, 8
        $region44: #{tpu_custom_call.1} parent=39 // pred_fallthru
          _
      $region40: #{tpu_custom_call.1} parent=5 // pred_fallthru
        _
      %p4618 = scmp.le.s32.totalorder 2, %s14
      // Predicated region
      $region45: #{tpu_custom_call.1} parent=5 // pred_check
        %p4619 = pneg %p4618
      $region46: #{tpu_custom_call.1} parent=5 // pred_check_branch
        %4621 = sbr.rel (%p4619) target = $region48
      $region47: #{tpu_custom_call.1} parent=5 // pred_region
        %s4622 = ssub.s32 %s14, 2
        // Predicated region
        $region49: #{tpu_custom_call.1} parent=47 // pred_check
          %p4623 = pneg %p153
        $region50: #{tpu_custom_call.1} parent=47 // pred_check_branch
          %4625 = sbr.rel (%p4623) target = $region52
        $region51: #{tpu_custom_call.1} parent=47 // pred_region
          %s4626 = sand.u32 %s138, 1
          %s4627 = scalar_lea.sflag [#allocation5], %s4626
          %s4628 = sand.u32 %s138, 1
          %s4629 = smul.addr %s4628, 256
          %s4630 = scalar_lea.vmem [#allocation4], %s4629
          %4631 = dma.done %s4627, 4096
        $region52: #{tpu_custom_call.1} parent=47 // pred_fallthru
          _
      $region48: #{tpu_custom_call.1} parent=5 // pred_fallthru
        _
    $region6: #{tpu_custom_call.1} parent=1 // loop_footer
      %s18 = sadd.s32 1, %s14
    $region7: #{tpu_custom_call.1} parent=1 // loop_footer_branch
      %13 = sbr.rel target = $region3
    $region8: #{tpu_custom_call.1} parent=1 // loop_exit
      _
    %4632 = vsyncpa [#allocation5], 1
    %s4633 = scalar_lea.sflag [#allocation5], 1
    %4634 = vsyncpa %s4633, 1

</llo_original>
